<compile_context>
chip_gen: v7x
topology: tpu7x:2x2x1
jax: 0.10.0
libtpu: 0.0.40
codegen_flags: <defaults>
</compile_context>

<pallas_src>
import functools

import jax
import jax.numpy as jnp
from jax.experimental import pallas as pl
from jax.experimental.pallas import tpu as pltpu

K = 3                       # Conv3d kernel size (padding=1 -> "same")
BN_EPS = 1e-5
VMEM_LIMIT = 32 * 1024 * 1024


# ------------------- fused Conv3d (+BN/ReLU prologue) + BN stats -------------------
def _conv_bn_stats_kernel(x_ref, scale_ref, shift_ref, mask_ref, w_ref,
                          y_ref, stats_ref, act_ref, patch_ref,
                          *, cin, P, pad_center, offsets, apply_act):
    # x_ref:     (1, cin, P)      corner-flat activations (channels-first)
    # scale/shift: (cin, 1)       BN affine of the *previous* block (if apply_act)
    # mask_ref:  (1, P)           1.0 at valid voxel positions, 0.0 elsewhere
    # w_ref:     (cout, 27*cin)   weights, contraction ordered (kd, kh, kw, cin)
    # y_ref:     (1, cout, P)     raw conv output (garbage at invalid positions)
    # stats_ref: (1, cout, 2)     per-batch (sum, sumsq) over valid voxels
    # act_ref:   (cin, P + 2*pad_center)  VMEM scratch: zero-extended activation
    # patch_ref: (27*cin, P)              VMEM scratch: im2col patch matrix
    x = x_ref[0]                                           # (cin, P)
    mask = mask_ref[...]                                   # (1, P)

    if apply_act:
        # BN + ReLU of the previous block, fused into this conv's prologue;
        # the mask re-zeroes the halo/invalid positions.
        act = jnp.maximum(x * scale_ref[...] + shift_ref[...], 0.0) * mask
    else:
        act = x                                            # already zero outside valid

    # Zero-extended activation: left pad of `pad_center` lanes lets every tap
    # be realized as a static lane-window slice with a non-negative offset.
    act_ref[...] = jnp.zeros_like(act_ref)
    act_ref[:, pad_center:pad_center + P] = act

    # im2col: one (27*cin, P) patch, then a single MXU GEMM (review: replaces
    # 27 tiny K=cin dots).
    for t, off in enumerate(offsets):
        patch_ref[t * cin:(t + 1) * cin, :] = act_ref[:, off:off + P]

    acc = jnp.dot(w_ref[...], patch_ref[...],
                  preferred_element_type=jnp.float32)      # (cout, P)
    y_ref[...] = acc[None].astype(y_ref.dtype)

    # BN statistics over valid voxels only (fused: no extra HBM pass over y).
    masked = acc * mask
    s = jnp.sum(masked, axis=1, keepdims=True)             # (cout, 1)
    ss = jnp.sum(masked * acc, axis=1, keepdims=True)      # (cout, 1)
    stats_ref[...] = jnp.concatenate([s, ss], axis=1)[None]


def conv_bn_stats_pallas(x_flat, scale, shift, mask, w_g, *, spatial, apply_act):
    N, cin, P = x_flat.shape
    cout = w_g.shape[0]
    D, H, W = spatial
    Hp, Wp = H + 2, W + 2
    pad_center = Hp * Wp + Wp + 1
    offsets = tuple(kd * Hp * Wp + kh * Wp + kw
                    for kd in range(K) for kh in range(K) for kw in range(K))
    p_ext = P + 2 * pad_center

    kernel = functools.partial(_conv_bn_stats_kernel, cin=cin, P=P,
                               pad_center=pad_center, offsets=offsets,
                               apply_act=apply_act)
    return pl.pallas_call(
        kernel,
        out_shape=(jax.ShapeDtypeStruct((N, cout, P), jnp.float32),
                   jax.ShapeDtypeStruct((N, cout, 2), jnp.float32)),
        grid_spec=pltpu.PrefetchScalarGridSpec(
            num_scalar_prefetch=0,
            grid=(N,),
            in_specs=[
                pl.BlockSpec((1, cin, P), lambda n: (n, 0, 0)),
                pl.BlockSpec((cin, 1), lambda n: (0, 0)),
                pl.BlockSpec((cin, 1), lambda n: (0, 0)),
                pl.BlockSpec((1, P), lambda n: (0, 0)),
                pl.BlockSpec((cout, K * K * K * cin), lambda n: (0, 0)),
            ],
            out_specs=[
                pl.BlockSpec((1, cout, P), lambda n: (n, 0, 0)),
                pl.BlockSpec((1, cout, 2), lambda n: (n, 0, 0)),
            ],
            scratch_shapes=[
                pltpu.VMEM((cin, p_ext), jnp.float32),
                pltpu.VMEM((K * K * K * cin, P), jnp.float32),
            ],
        ),
        compiler_params=pltpu.CompilerParams(
            dimension_semantics=("parallel",),
            vmem_limit_bytes=VMEM_LIMIT),
    )(x_flat, scale, shift, mask, w_g)


# ------------------------------ final BN + ReLU ------------------------------------
def _bn_relu_kernel(y_ref, scale_ref, shift_ref, o_ref):
    y = y_ref[0]                                            # (C, P), lane-dense
    o_ref[...] = jnp.maximum(y * scale_ref[...] + shift_ref[...], 0.0)[None]


def bn_relu_pallas(y_flat, scale, shift):
    N, C, P = y_flat.shape
    return pl.pallas_call(
        _bn_relu_kernel,
        out_shape=jax.ShapeDtypeStruct((N, C, P), jnp.float32),
        grid_spec=pltpu.PrefetchScalarGridSpec(
            num_scalar_prefetch=0,
            grid=(N,),
            in_specs=[
                pl.BlockSpec((1, C, P), lambda n: (n, 0, 0)),
                pl.BlockSpec((C, 1), lambda n: (0, 0)),
                pl.BlockSpec((C, 1), lambda n: (0, 0)),
            ],
            out_specs=pl.BlockSpec((1, C, P), lambda n: (n, 0, 0)),
        ),
        compiler_params=pltpu.CompilerParams(
            dimension_semantics=("parallel",),
            vmem_limit_bytes=VMEM_LIMIT),
    )(y_flat, scale, shift)


# --------------------------------- DoubleConv3D ------------------------------------
@jax.jit
def double_conv3d_forward(x_ncdhw, params):
    """x: (N, Cin, D, H, W) -> (N, Cout, D, H, W)."""
    N, Cin, D, H, W = x_ncdhw.shape
    Dp, Hp, Wp = D + 2, H + 2, W + 2
    P = Dp * Hp * Wp
    spatial = (D, H, W)
    Cout = params["w1"].shape[0]

    # Corner-flat layout: voxel (d,h,w) -> lane index d*Hp*Wp + h*Wp + w; the
    # trailing (two-wide) zero slabs per spatial axis double as conv padding.
    # Done once on the (small) raw input; activations are never re-padded.
    x_flat = jnp.pad(x_ncdhw, ((0, 0), (0, 0), (0, 2), (0, 2), (0, 2)))
    x_flat = x_flat.reshape(N, Cin, P).astype(jnp.float32)

    dm = (jnp.arange(Dp) < D)[:, None, None]
    hm = (jnp.arange(Hp) < H)[None, :, None]
    wm = (jnp.arange(Wp) < W)[None, None, :]
    mask = (dm & hm & wm).reshape(1, P).astype(jnp.float32)

    count = float(N * D * H * W)

    def bn_affine(stats, gamma, beta):
        st = jnp.sum(stats, axis=0)                         # (C, 2)
        mean = st[:, 0] / count
        # E[x^2]-E[x]^2 is cancellation-prone at production scale; clamp >= 0.
        var = jnp.maximum(st[:, 1] / count - mean * mean, 0.0)
        inv = jax.lax.rsqrt(var + BN_EPS)
        scale = gamma * inv
        shift = beta - mean * scale
        return scale.reshape(-1, 1), shift.reshape(-1, 1)

    def gemm_weights(w_pt):        # (Cout, Cin, 3, 3, 3) -> (Cout, 27*Cin)
        co, ci = w_pt.shape[0], w_pt.shape[1]
        return jnp.transpose(w_pt, (0, 2, 3, 4, 1)).reshape(co, K * K * K * ci)

    # Block 1: conv1 + BN1 stats.  (Conv bias is dropped: it cancels exactly
    # through the training-mode BatchNorm mean subtraction that follows.)
    ones = jnp.ones((Cin, 1), jnp.float32)
    zeros = jnp.zeros((Cin, 1), jnp.float32)
    y1, st1 = conv_bn_stats_pallas(x_flat, ones, zeros, mask,
                                   gemm_weights(params["w1"]),
                                   spatial=spatial, apply_act=False)
    scale1, shift1 = bn_affine(st1, params["gamma1"], params["beta1"])

    # Block 2: BN1 + ReLU1 fused into conv2's prologue, plus conv2 + BN2 stats.
    y2, st2 = conv_bn_stats_pallas(y1, scale1, shift1, mask,
                                   gemm_weights(params["w2"]),
                                   spatial=spatial, apply_act=True)
    scale2, shift2 = bn_affine(st2, params["gamma2"], params["beta2"])

    out_flat = bn_relu_pallas(y2, scale2, shift2)
    out = out_flat.reshape(N, Cout, Dp, Hp, Wp)[:, :, :D, :H, :W]
    return out


# ----------------------------------- reference -------------------------------------
def reference_forward(x_ncdhw, params):
    x = jnp.transpose(x_ncdhw, (0, 2, 3, 4, 1))             # NCDHW -> NDHWC
    for blk in ("1", "2"):
        w = jnp.transpose(params[f"w{blk}"], (2, 3, 4, 1, 0))  # -> DHWIO
        b = params[f"b{blk}"]
        gamma, beta = params[f"gamma{blk}"], params[f"beta{blk}"]
        y = jax.lax.conv_general_dilated(
            x, w, window_strides=(1, 1, 1), padding=((1, 1),) * 3,
            dimension_numbers=("NDHWC", "DHWIO", "NDHWC")) + b
        mean = jnp.mean(y, axis=(0, 1, 2, 3))
        var = jnp.var(y, axis=(0, 1, 2, 3))                 # biased (training BN)
        x = jnp.maximum((y - mean) * jax.lax.rsqrt(var + BN_EPS) * gamma + beta,
                        0.0)
    return jnp.transpose(x, (0, 4, 1, 2, 3))                # NDHWC -> NCDHW


if __name__ == "__main__":
    N, Cin, Cout, D, H, W = 2, 4, 8, 8, 8, 8

    key = jax.random.PRNGKey(0)
    kx, kw1, kb1, kw2, kb2 = jax.random.split(key, 5)

    # PyTorch-layout Conv3d weights (Cout, Cin, 3, 3, 3); BN gamma/beta are the
    # nn.BatchNorm3d defaults (training-mode forward, batch statistics).
    params = {
        "w1": jax.random.normal(kw1, (Cout, Cin, K, K, K), jnp.float32) * 0.1,
        "b1": jax.random.normal(kb1, (Cout,), jnp.float32) * 0.1,
        "gamma1": jnp.ones((Cout,), jnp.float32),
        "beta1": jnp.zeros((Cout,), jnp.float32),
        "w2": jax.random.normal(kw2, (Cout, Cout, K, K, K), jnp.float32) * 0.1,
        "b2": jax.random.normal(kb2, (Cout,), jnp.float32) * 0.1,
        "gamma2": jnp.ones((Cout,), jnp.float32),
        "beta2": jnp.zeros((Cout,), jnp.float32),
    }

    x = jax.random.normal(kx, (N, Cin, D, H, W), jnp.float32)

    out = jax.block_until_ready(double_conv3d_forward(x, params))
    ref = jax.block_until_ready(reference_forward(x, params))

    max_err = float(jnp.max(jnp.abs(out - ref)))
    if out.shape != (N, Cout, D, H, W) or max_err > 1e-3:
        raise AssertionError(f"mismatch: shape={out.shape} max_err={max_err}")

    print("KERNEL_OK")
</pallas_src>

<mosaic_0001>
module attributes {stable_mosaic.version = 11 : i64} {
  func.func @_conv_bn_stats_kernel(%arg0: i32, %arg1: memref<1x4x1000xf32, #tpu.memory_space<vmem>>, %arg2: memref<4x1xf32, #tpu.memory_space<vmem>>, %arg3: memref<4x1xf32, #tpu.memory_space<vmem>>, %arg4: memref<1x1000xf32, #tpu.memory_space<vmem>>, %arg5: memref<8x108xf32, #tpu.memory_space<vmem>>, %arg6: memref<1x8x1000xf32, #tpu.memory_space<vmem>>, %arg7: memref<1x8x2xf32, #tpu.memory_space<vmem>>, %arg8: memref<4x1222xf32, #tpu.memory_space<vmem>>, %arg9: memref<108x1000xf32, #tpu.memory_space<vmem>>) attributes {dimension_semantics = [#tpu.dimension_semantics<parallel>], iteration_bounds = array<i64: 2>, scalar_prefetch = 0 : i64, scratch_operands = 2 : i64, tpu.core_type = #tpu.core_type<tc>, window_params = [{transform_indices = @transform_0, window_bounds = array<i64: 1, 4, 1000>}, {pipeline_mode = #tpu.pipeline_mode<synchronous>, transform_indices = @transform_1, window_bounds = array<i64: 4, 1>}, {pipeline_mode = #tpu.pipeline_mode<synchronous>, transform_indices = @transform_2, window_bounds = array<i64: 4, 1>}, {pipeline_mode = #tpu.pipeline_mode<synchronous>, transform_indices = @transform_3, window_bounds = array<i64: 1, 1000>}, {pipeline_mode = #tpu.pipeline_mode<synchronous>, transform_indices = @transform_4, window_bounds = array<i64: 8, 108>}, {transform_indices = @transform_5, window_bounds = array<i64: 1, 8, 1000>}, {transform_indices = @transform_6, window_bounds = array<i64: 1, 8, 2>}]} {
    %c0 = arith.constant 0 : index
    %c0_0 = arith.constant 0 : index
    %c0_1 = arith.constant 0 : index
    %0 = vector.load %arg1[%c0, %c0_0, %c0_1] : memref<1x4x1000xf32, #tpu.memory_space<vmem>>, vector<1x4x1000xf32>
    %1 = vector.shape_cast %0 : vector<1x4x1000xf32> to vector<4x1000xf32>
    %c0_2 = arith.constant 0 : index
    %c0_3 = arith.constant 0 : index
    %2 = vector.load %arg4[%c0_2, %c0_3] : memref<1x1000xf32, #tpu.memory_space<vmem>>, vector<1x1000xf32>
    %cst = arith.constant 0.000000e+00 : f32
    %3 = vector.broadcast %cst : f32 to vector<4x1222xf32>
    %c0_4 = arith.constant 0 : index
    %c0_5 = arith.constant 0 : index
    %4 = vector.load %arg8[%c0_4, %c0_5] : memref<4x1222xf32, #tpu.memory_space<vmem>>, vector<4x1222xf32>
    tpu.vector_store %arg8[%c0_4, %c0_5], %3 {strides = array<i32>} : memref<4x1222xf32, #tpu.memory_space<vmem>>, vector<4x1222xf32>,
    %c0_6 = arith.constant 0 : index
    %c111 = arith.constant 111 : index
    %5 = vector.load %arg8[%c0_6, %c111] : memref<4x1222xf32, #tpu.memory_space<vmem>>, vector<4x1000xf32>
    tpu.vector_store %arg8[%c0_6, %c111], %1 {strides = array<i32>} : memref<4x1222xf32, #tpu.memory_space<vmem>>, vector<4x1000xf32>,
    %c0_7 = arith.constant 0 : index
    %c0_8 = arith.constant 0 : index
    %6 = vector.load %arg8[%c0_7, %c0_8] : memref<4x1222xf32, #tpu.memory_space<vmem>>, vector<4x1000xf32>
    %c0_9 = arith.constant 0 : index
    %c0_10 = arith.constant 0 : index
    %7 = vector.load %arg9[%c0_9, %c0_10] : memref<108x1000xf32, #tpu.memory_space<vmem>>, vector<4x1000xf32>
    tpu.vector_store %arg9[%c0_9, %c0_10], %6 {strides = array<i32>} : memref<108x1000xf32, #tpu.memory_space<vmem>>, vector<4x1000xf32>,
    %c0_11 = arith.constant 0 : index
    %c1 = arith.constant 1 : index
    %8 = vector.load %arg8[%c0_11, %c1] : memref<4x1222xf32, #tpu.memory_space<vmem>>, vector<4x1000xf32>
    %c4 = arith.constant 4 : index
    %c0_12 = arith.constant 0 : index
    %9 = vector.load %arg9[%c4, %c0_12] : memref<108x1000xf32, #tpu.memory_space<vmem>>, vector<4x1000xf32>
    tpu.vector_store %arg9[%c4, %c0_12], %8 {strides = array<i32>} : memref<108x1000xf32, #tpu.memory_space<vmem>>, vector<4x1000xf32>,
    %c0_13 = arith.constant 0 : index
    %c2 = arith.constant 2 : index
    %10 = vector.load %arg8[%c0_13, %c2] : memref<4x1222xf32, #tpu.memory_space<vmem>>, vector<4x1000xf32>
    %c8 = arith.constant 8 : index
    %c0_14 = arith.constant 0 : index
    %11 = vector.load %arg9[%c8, %c0_14] : memref<108x1000xf32, #tpu.memory_space<vmem>>, vector<4x1000xf32>
    tpu.vector_store %arg9[%c8, %c0_14], %10 {strides = array<i32>} : memref<108x1000xf32, #tpu.memory_space<vmem>>, vector<4x1000xf32>,
    %c0_15 = arith.constant 0 : index
    %c10 = arith.constant 10 : index
    %12 = vector.load %arg8[%c0_15, %c10] : memref<4x1222xf32, #tpu.memory_space<vmem>>, vector<4x1000xf32>
    %c12 = arith.constant 12 : index
    %c0_16 = arith.constant 0 : index
    %13 = vector.load %arg9[%c12, %c0_16] : memref<108x1000xf32, #tpu.memory_space<vmem>>, vector<4x1000xf32>
    tpu.vector_store %arg9[%c12, %c0_16], %12 {strides = array<i32>} : memref<108x1000xf32, #tpu.memory_space<vmem>>, vector<4x1000xf32>,
    %c0_17 = arith.constant 0 : index
    %c11 = arith.constant 11 : index
    %14 = vector.load %arg8[%c0_17, %c11] : memref<4x1222xf32, #tpu.memory_space<vmem>>, vector<4x1000xf32>
    %c16 = arith.constant 16 : index
    %c0_18 = arith.constant 0 : index
    %15 = vector.load %arg9[%c16, %c0_18] : memref<108x1000xf32, #tpu.memory_space<vmem>>, vector<4x1000xf32>
    tpu.vector_store %arg9[%c16, %c0_18], %14 {strides = array<i32>} : memref<108x1000xf32, #tpu.memory_space<vmem>>, vector<4x1000xf32>,
    %c0_19 = arith.constant 0 : index
    %c12_20 = arith.constant 12 : index
    %16 = vector.load %arg8[%c0_19, %c12_20] : memref<4x1222xf32, #tpu.memory_space<vmem>>, vector<4x1000xf32>
    %c20 = arith.constant 20 : index
    %c0_21 = arith.constant 0 : index
    %17 = vector.load %arg9[%c20, %c0_21] : memref<108x1000xf32, #tpu.memory_space<vmem>>, vector<4x1000xf32>
    tpu.vector_store %arg9[%c20, %c0_21], %16 {strides = array<i32>} : memref<108x1000xf32, #tpu.memory_space<vmem>>, vector<4x1000xf32>,
    %c0_22 = arith.constant 0 : index
    %c20_23 = arith.constant 20 : index
    %18 = vector.load %arg8[%c0_22, %c20_23] : memref<4x1222xf32, #tpu.memory_space<vmem>>, vector<4x1000xf32>
    %c24 = arith.constant 24 : index
    %c0_24 = arith.constant 0 : index
    %19 = vector.load %arg9[%c24, %c0_24] : memref<108x1000xf32, #tpu.memory_space<vmem>>, vector<4x1000xf32>
    tpu.vector_store %arg9[%c24, %c0_24], %18 {strides = array<i32>} : memref<108x1000xf32, #tpu.memory_space<vmem>>, vector<4x1000xf32>,
    %c0_25 = arith.constant 0 : index
    %c21 = arith.constant 21 : index
    %20 = vector.load %arg8[%c0_25, %c21] : memref<4x1222xf32, #tpu.memory_space<vmem>>, vector<4x1000xf32>
    %c28 = arith.constant 28 : index
    %c0_26 = arith.constant 0 : index
    %21 = vector.load %arg9[%c28, %c0_26] : memref<108x1000xf32, #tpu.memory_space<vmem>>, vector<4x1000xf32>
    tpu.vector_store %arg9[%c28, %c0_26], %20 {strides = array<i32>} : memref<108x1000xf32, #tpu.memory_space<vmem>>, vector<4x1000xf32>,
    %c0_27 = arith.constant 0 : index
    %c22 = arith.constant 22 : index
    %22 = vector.load %arg8[%c0_27, %c22] : memref<4x1222xf32, #tpu.memory_space<vmem>>, vector<4x1000xf32>
    %c32 = arith.constant 32 : index
    %c0_28 = arith.constant 0 : index
    %23 = vector.load %arg9[%c32, %c0_28] : memref<108x1000xf32, #tpu.memory_space<vmem>>, vector<4x1000xf32>
    tpu.vector_store %arg9[%c32, %c0_28], %22 {strides = array<i32>} : memref<108x1000xf32, #tpu.memory_space<vmem>>, vector<4x1000xf32>,
    %c0_29 = arith.constant 0 : index
    %c100 = arith.constant 100 : index
    %24 = vector.load %arg8[%c0_29, %c100] : memref<4x1222xf32, #tpu.memory_space<vmem>>, vector<4x1000xf32>
    %c36 = arith.constant 36 : index
    %c0_30 = arith.constant 0 : index
    %25 = vector.load %arg9[%c36, %c0_30] : memref<108x1000xf32, #tpu.memory_space<vmem>>, vector<4x1000xf32>
    tpu.vector_store %arg9[%c36, %c0_30], %24 {strides = array<i32>} : memref<108x1000xf32, #tpu.memory_space<vmem>>, vector<4x1000xf32>,
    %c0_31 = arith.constant 0 : index
    %c101 = arith.constant 101 : index
    %26 = vector.load %arg8[%c0_31, %c101] : memref<4x1222xf32, #tpu.memory_space<vmem>>, vector<4x1000xf32>
    %c40 = arith.constant 40 : index
    %c0_32 = arith.constant 0 : index
    %27 = vector.load %arg9[%c40, %c0_32] : memref<108x1000xf32, #tpu.memory_space<vmem>>, vector<4x1000xf32>
    tpu.vector_store %arg9[%c40, %c0_32], %26 {strides = array<i32>} : memref<108x1000xf32, #tpu.memory_space<vmem>>, vector<4x1000xf32>,
    %c0_33 = arith.constant 0 : index
    %c102 = arith.constant 102 : index
    %28 = vector.load %arg8[%c0_33, %c102] : memref<4x1222xf32, #tpu.memory_space<vmem>>, vector<4x1000xf32>
    %c44 = arith.constant 44 : index
    %c0_34 = arith.constant 0 : index
    %29 = vector.load %arg9[%c44, %c0_34] : memref<108x1000xf32, #tpu.memory_space<vmem>>, vector<4x1000xf32>
    tpu.vector_store %arg9[%c44, %c0_34], %28 {strides = array<i32>} : memref<108x1000xf32, #tpu.memory_space<vmem>>, vector<4x1000xf32>,
    %c0_35 = arith.constant 0 : index
    %c110 = arith.constant 110 : index
    %30 = vector.load %arg8[%c0_35, %c110] : memref<4x1222xf32, #tpu.memory_space<vmem>>, vector<4x1000xf32>
    %c48 = arith.constant 48 : index
    %c0_36 = arith.constant 0 : index
    %31 = vector.load %arg9[%c48, %c0_36] : memref<108x1000xf32, #tpu.memory_space<vmem>>, vector<4x1000xf32>
    tpu.vector_store %arg9[%c48, %c0_36], %30 {strides = array<i32>} : memref<108x1000xf32, #tpu.memory_space<vmem>>, vector<4x1000xf32>,
    %c0_37 = arith.constant 0 : index
    %c111_38 = arith.constant 111 : index
    %32 = vector.load %arg8[%c0_37, %c111_38] : memref<4x1222xf32, #tpu.memory_space<vmem>>, vector<4x1000xf32>
    %c52 = arith.constant 52 : index
    %c0_39 = arith.constant 0 : index
    %33 = vector.load %arg9[%c52, %c0_39] : memref<108x1000xf32, #tpu.memory_space<vmem>>, vector<4x1000xf32>
    tpu.vector_store %arg9[%c52, %c0_39], %32 {strides = array<i32>} : memref<108x1000xf32, #tpu.memory_space<vmem>>, vector<4x1000xf32>,
    %c0_40 = arith.constant 0 : index
    %c112 = arith.constant 112 : index
    %34 = vector.load %arg8[%c0_40, %c112] : memref<4x1222xf32, #tpu.memory_space<vmem>>, vector<4x1000xf32>
    %c56 = arith.constant 56 : index
    %c0_41 = arith.constant 0 : index
    %35 = vector.load %arg9[%c56, %c0_41] : memref<108x1000xf32, #tpu.memory_space<vmem>>, vector<4x1000xf32>
    tpu.vector_store %arg9[%c56, %c0_41], %34 {strides = array<i32>} : memref<108x1000xf32, #tpu.memory_space<vmem>>, vector<4x1000xf32>,
    %c0_42 = arith.constant 0 : index
    %c120 = arith.constant 120 : index
    %36 = vector.load %arg8[%c0_42, %c120] : memref<4x1222xf32, #tpu.memory_space<vmem>>, vector<4x1000xf32>
    %c60 = arith.constant 60 : index
    %c0_43 = arith.constant 0 : index
    %37 = vector.load %arg9[%c60, %c0_43] : memref<108x1000xf32, #tpu.memory_space<vmem>>, vector<4x1000xf32>
    tpu.vector_store %arg9[%c60, %c0_43], %36 {strides = array<i32>} : memref<108x1000xf32, #tpu.memory_space<vmem>>, vector<4x1000xf32>,
    %c0_44 = arith.constant 0 : index
    %c121 = arith.constant 121 : index
    %38 = vector.load %arg8[%c0_44, %c121] : memref<4x1222xf32, #tpu.memory_space<vmem>>, vector<4x1000xf32>
    %c64 = arith.constant 64 : index
    %c0_45 = arith.constant 0 : index
    %39 = vector.load %arg9[%c64, %c0_45] : memref<108x1000xf32, #tpu.memory_space<vmem>>, vector<4x1000xf32>
    tpu.vector_store %arg9[%c64, %c0_45], %38 {strides = array<i32>} : memref<108x1000xf32, #tpu.memory_space<vmem>>, vector<4x1000xf32>,
    %c0_46 = arith.constant 0 : index
    %c122 = arith.constant 122 : index
    %40 = vector.load %arg8[%c0_46, %c122] : memref<4x1222xf32, #tpu.memory_space<vmem>>, vector<4x1000xf32>
    %c68 = arith.constant 68 : index
    %c0_47 = arith.constant 0 : index
    %41 = vector.load %arg9[%c68, %c0_47] : memref<108x1000xf32, #tpu.memory_space<vmem>>, vector<4x1000xf32>
    tpu.vector_store %arg9[%c68, %c0_47], %40 {strides = array<i32>} : memref<108x1000xf32, #tpu.memory_space<vmem>>, vector<4x1000xf32>,
    %c0_48 = arith.constant 0 : index
    %c200 = arith.constant 200 : index
    %42 = vector.load %arg8[%c0_48, %c200] : memref<4x1222xf32, #tpu.memory_space<vmem>>, vector<4x1000xf32>
    %c72 = arith.constant 72 : index
    %c0_49 = arith.constant 0 : index
    %43 = vector.load %arg9[%c72, %c0_49] : memref<108x1000xf32, #tpu.memory_space<vmem>>, vector<4x1000xf32>
    tpu.vector_store %arg9[%c72, %c0_49], %42 {strides = array<i32>} : memref<108x1000xf32, #tpu.memory_space<vmem>>, vector<4x1000xf32>,
    %c0_50 = arith.constant 0 : index
    %c201 = arith.constant 201 : index
    %44 = vector.load %arg8[%c0_50, %c201] : memref<4x1222xf32, #tpu.memory_space<vmem>>, vector<4x1000xf32>
    %c76 = arith.constant 76 : index
    %c0_51 = arith.constant 0 : index
    %45 = vector.load %arg9[%c76, %c0_51] : memref<108x1000xf32, #tpu.memory_space<vmem>>, vector<4x1000xf32>
    tpu.vector_store %arg9[%c76, %c0_51], %44 {strides = array<i32>} : memref<108x1000xf32, #tpu.memory_space<vmem>>, vector<4x1000xf32>,
    %c0_52 = arith.constant 0 : index
    %c202 = arith.constant 202 : index
    %46 = vector.load %arg8[%c0_52, %c202] : memref<4x1222xf32, #tpu.memory_space<vmem>>, vector<4x1000xf32>
    %c80 = arith.constant 80 : index
    %c0_53 = arith.constant 0 : index
    %47 = vector.load %arg9[%c80, %c0_53] : memref<108x1000xf32, #tpu.memory_space<vmem>>, vector<4x1000xf32>
    tpu.vector_store %arg9[%c80, %c0_53], %46 {strides = array<i32>} : memref<108x1000xf32, #tpu.memory_space<vmem>>, vector<4x1000xf32>,
    %c0_54 = arith.constant 0 : index
    %c210 = arith.constant 210 : index
    %48 = vector.load %arg8[%c0_54, %c210] : memref<4x1222xf32, #tpu.memory_space<vmem>>, vector<4x1000xf32>
    %c84 = arith.constant 84 : index
    %c0_55 = arith.constant 0 : index
    %49 = vector.load %arg9[%c84, %c0_55] : memref<108x1000xf32, #tpu.memory_space<vmem>>, vector<4x1000xf32>
    tpu.vector_store %arg9[%c84, %c0_55], %48 {strides = array<i32>} : memref<108x1000xf32, #tpu.memory_space<vmem>>, vector<4x1000xf32>,
    %c0_56 = arith.constant 0 : index
    %c211 = arith.constant 211 : index
    %50 = vector.load %arg8[%c0_56, %c211] : memref<4x1222xf32, #tpu.memory_space<vmem>>, vector<4x1000xf32>
    %c88 = arith.constant 88 : index
    %c0_57 = arith.constant 0 : index
    %51 = vector.load %arg9[%c88, %c0_57] : memref<108x1000xf32, #tpu.memory_space<vmem>>, vector<4x1000xf32>
    tpu.vector_store %arg9[%c88, %c0_57], %50 {strides = array<i32>} : memref<108x1000xf32, #tpu.memory_space<vmem>>, vector<4x1000xf32>,
    %c0_58 = arith.constant 0 : index
    %c212 = arith.constant 212 : index
    %52 = vector.load %arg8[%c0_58, %c212] : memref<4x1222xf32, #tpu.memory_space<vmem>>, vector<4x1000xf32>
    %c92 = arith.constant 92 : index
    %c0_59 = arith.constant 0 : index
    %53 = vector.load %arg9[%c92, %c0_59] : memref<108x1000xf32, #tpu.memory_space<vmem>>, vector<4x1000xf32>
    tpu.vector_store %arg9[%c92, %c0_59], %52 {strides = array<i32>} : memref<108x1000xf32, #tpu.memory_space<vmem>>, vector<4x1000xf32>,
    %c0_60 = arith.constant 0 : index
    %c220 = arith.constant 220 : index
    %54 = vector.load %arg8[%c0_60, %c220] : memref<4x1222xf32, #tpu.memory_space<vmem>>, vector<4x1000xf32>
    %c96 = arith.constant 96 : index
    %c0_61 = arith.constant 0 : index
    %55 = vector.load %arg9[%c96, %c0_61] : memref<108x1000xf32, #tpu.memory_space<vmem>>, vector<4x1000xf32>
    tpu.vector_store %arg9[%c96, %c0_61], %54 {strides = array<i32>} : memref<108x1000xf32, #tpu.memory_space<vmem>>, vector<4x1000xf32>,
    %c0_62 = arith.constant 0 : index
    %c221 = arith.constant 221 : index
    %56 = vector.load %arg8[%c0_62, %c221] : memref<4x1222xf32, #tpu.memory_space<vmem>>, vector<4x1000xf32>
    %c100_63 = arith.constant 100 : index
    %c0_64 = arith.constant 0 : index
    %57 = vector.load %arg9[%c100_63, %c0_64] : memref<108x1000xf32, #tpu.memory_space<vmem>>, vector<4x1000xf32>
    tpu.vector_store %arg9[%c100_63, %c0_64], %56 {strides = array<i32>} : memref<108x1000xf32, #tpu.memory_space<vmem>>, vector<4x1000xf32>,
    %c0_65 = arith.constant 0 : index
    %c222 = arith.constant 222 : index
    %58 = vector.load %arg8[%c0_65, %c222] : memref<4x1222xf32, #tpu.memory_space<vmem>>, vector<4x1000xf32>
    %c104 = arith.constant 104 : index
    %c0_66 = arith.constant 0 : index
    %59 = vector.load %arg9[%c104, %c0_66] : memref<108x1000xf32, #tpu.memory_space<vmem>>, vector<4x1000xf32>
    tpu.vector_store %arg9[%c104, %c0_66], %58 {strides = array<i32>} : memref<108x1000xf32, #tpu.memory_space<vmem>>, vector<4x1000xf32>,
    %c0_67 = arith.constant 0 : index
    %c0_68 = arith.constant 0 : index
    %60 = vector.load %arg5[%c0_67, %c0_68] : memref<8x108xf32, #tpu.memory_space<vmem>>, vector<8x108xf32>
    %c0_69 = arith.constant 0 : index
    %c0_70 = arith.constant 0 : index
    %61 = vector.load %arg9[%c0_69, %c0_70] : memref<108x1000xf32, #tpu.memory_space<vmem>>, vector<108x1000xf32>
    %cst_71 = arith.constant dense<0.000000e+00> : vector<8x1000xf32>
    %62 = tpu.matmul %60, %61, %cst_71 {dimension_numbers = #tpu.dot_dimension_numbers<[1], [0], [0], [1], [0, 0, 1, 1], [], []>} : vector<8x108xf32>, vector<108x1000xf32>, vector<8x1000xf32> -> vector<8x1000xf32>
    %63 = vector.shape_cast %62 : vector<8x1000xf32> to vector<1x8x1000xf32>
    %c0_72 = arith.constant 0 : index
    %c0_73 = arith.constant 0 : index
    %c0_74 = arith.constant 0 : index
    %64 = vector.load %arg6[%c0_72, %c0_73, %c0_74] : memref<1x8x1000xf32, #tpu.memory_space<vmem>>, vector<1x8x1000xf32>
    tpu.vector_store %arg6[%c0_72, %c0_73, %c0_74], %63 {strides = array<i32>} : memref<1x8x1000xf32, #tpu.memory_space<vmem>>, vector<1x8x1000xf32>,
    %65 = vector.broadcast %2 : vector<1x1000xf32> to vector<8x1000xf32>
    %66 = arith.mulf %62, %65 : vector<8x1000xf32>
    %cst_75 = arith.constant dense<0.000000e+00> : vector<8xf32>
    %67 = vector.multi_reduction <add>, %66, %cst_75 [1] : vector<8x1000xf32> to vector<8xf32>
    %68 = vector.shape_cast %67 : vector<8xf32> to vector<8x1xf32>
    %69 = arith.mulf %66, %62 : vector<8x1000xf32>
    %cst_76 = arith.constant dense<0.000000e+00> : vector<8xf32>
    %70 = vector.multi_reduction <add>, %69, %cst_76 [1] : vector<8x1000xf32> to vector<8xf32>
    %71 = vector.shape_cast %70 : vector<8xf32> to vector<8x1xf32>
    %72 = tpu.concatenate %68, %71 in 1 : vector<8x1xf32>, vector<8x1xf32> -> vector<8x2xf32>
    %73 = vector.shape_cast %72 : vector<8x2xf32> to vector<1x8x2xf32>
    %c0_77 = arith.constant 0 : index
    %c0_78 = arith.constant 0 : index
    %c0_79 = arith.constant 0 : index
    %74 = vector.load %arg7[%c0_77, %c0_78, %c0_79] : memref<1x8x2xf32, #tpu.memory_space<vmem>>, vector<1x8x2xf32>
    tpu.vector_store %arg7[%c0_77, %c0_78, %c0_79], %73 {strides = array<i32>} : memref<1x8x2xf32, #tpu.memory_space<vmem>>, vector<1x8x2xf32>,
    return
  }
  func.func @transform_0(%arg0: i32) -> (i32, i32, i32) {
    %c0_i32 = arith.constant 0 : i32
    %c0_i32_0 = arith.constant 0 : i32
    %c0_i32_1 = arith.constant 0 : i32
    return %arg0, %c0_i32, %c0_i32_0 : i32, i32, i32
  }
  func.func @transform_1(%arg0: i32) -> (i32, i32) {
    %c0_i32 = arith.constant 0 : i32
    %c0_i32_0 = arith.constant 0 : i32
    %c0_i32_1 = arith.constant 0 : i32
    return %c0_i32, %c0_i32_0 : i32, i32
  }
  func.func @transform_2(%arg0: i32) -> (i32, i32) {
    %c0_i32 = arith.constant 0 : i32
    %c0_i32_0 = arith.constant 0 : i32
    %c0_i32_1 = arith.constant 0 : i32
    return %c0_i32, %c0_i32_0 : i32, i32
  }
  func.func @transform_3(%arg0: i32) -> (i32, i32) {
    %c0_i32 = arith.constant 0 : i32
    %c0_i32_0 = arith.constant 0 : i32
    %c0_i32_1 = arith.constant 0 : i32
    return %c0_i32, %c0_i32_0 : i32, i32
  }
  func.func @transform_4(%arg0: i32) -> (i32, i32) {
    %c0_i32 = arith.constant 0 : i32
    %c0_i32_0 = arith.constant 0 : i32
    %c0_i32_1 = arith.constant 0 : i32
    return %c0_i32, %c0_i32_0 : i32, i32
  }
  func.func @transform_5(%arg0: i32) -> (i32, i32, i32) {
    %c0_i32 = arith.constant 0 : i32
    %c0_i32_0 = arith.constant 0 : i32
    %c0_i32_1 = arith.constant 0 : i32
    return %arg0, %c0_i32, %c0_i32_0 : i32, i32, i32
  }
  func.func @transform_6(%arg0: i32) -> (i32, i32, i32) {
    %c0_i32 = arith.constant 0 : i32
    %c0_i32_0 = arith.constant 0 : i32
    %c0_i32_1 = arith.constant 0 : i32
    return %arg0, %c0_i32, %c0_i32_0 : i32, i32, i32
  }
}

module attributes {stable_mosaic.version = 11 : i64} {
  func.func @_bn_relu_kernel(%arg0: i32, %arg1: memref<1x8x1000xf32, #tpu.memory_space<vmem>>, %arg2: memref<8x1xf32, #tpu.memory_space<vmem>>, %arg3: memref<8x1xf32, #tpu.memory_space<vmem>>, %arg4: memref<1x8x1000xf32, #tpu.memory_space<vmem>>) attributes {dimension_semantics = [#tpu.dimension_semantics<parallel>], iteration_bounds = array<i64: 2>, scalar_prefetch = 0 : i64, scratch_operands = 0 : i64, tpu.core_type = #tpu.core_type<tc>, window_params = [{transform_indices = @transform_0, window_bounds = array<i64: 1, 8, 1000>}, {pipeline_mode = #tpu.pipeline_mode<synchronous>, transform_indices = @transform_1, window_bounds = array<i64: 8, 1>}, {pipeline_mode = #tpu.pipeline_mode<synchronous>, transform_indices = @transform_2, window_bounds = array<i64: 8, 1>}, {transform_indices = @transform_3, window_bounds = array<i64: 1, 8, 1000>}]} {
    %c0 = arith.constant 0 : index
    %c0_0 = arith.constant 0 : index
    %c0_1 = arith.constant 0 : index
    %0 = vector.load %arg1[%c0, %c0_0, %c0_1] : memref<1x8x1000xf32, #tpu.memory_space<vmem>>, vector<1x8x1000xf32>
    %1 = vector.shape_cast %0 : vector<1x8x1000xf32> to vector<8x1000xf32>
    %c0_2 = arith.constant 0 : index
    %c0_3 = arith.constant 0 : index
    %2 = vector.load %arg2[%c0_2, %c0_3] : memref<8x1xf32, #tpu.memory_space<vmem>>, vector<8x1xf32>
    %3 = vector.broadcast %2 : vector<8x1xf32> to vector<8x1000xf32>
    %4 = arith.mulf %1, %3 : vector<8x1000xf32>
    %c0_4 = arith.constant 0 : index
    %c0_5 = arith.constant 0 : index
    %5 = vector.load %arg3[%c0_4, %c0_5] : memref<8x1xf32, #tpu.memory_space<vmem>>, vector<8x1xf32>
    %6 = vector.broadcast %5 : vector<8x1xf32> to vector<8x1000xf32>
    %7 = arith.addf %4, %6 : vector<8x1000xf32>
    %cst = arith.constant 0.000000e+00 : f32
    %8 = vector.broadcast %cst : f32 to vector<8x1000xf32>
    %9 = arith.maximumf %7, %8 : vector<8x1000xf32>
    %10 = vector.shape_cast %9 : vector<8x1000xf32> to vector<1x8x1000xf32>
    %c0_6 = arith.constant 0 : index
    %c0_7 = arith.constant 0 : index
    %c0_8 = arith.constant 0 : index
    %11 = vector.load %arg4[%c0_6, %c0_7, %c0_8] : memref<1x8x1000xf32, #tpu.memory_space<vmem>>, vector<1x8x1000xf32>
    tpu.vector_store %arg4[%c0_6, %c0_7, %c0_8], %10 {strides = array<i32>} : memref<1x8x1000xf32, #tpu.memory_space<vmem>>, vector<1x8x1000xf32>,
    return
  }
  func.func @transform_0(%arg0: i32) -> (i32, i32, i32) {
    %c0_i32 = arith.constant 0 : i32
    %c0_i32_0 = arith.constant 0 : i32
    %c0_i32_1 = arith.constant 0 : i32
    return %arg0, %c0_i32, %c0_i32_0 : i32, i32, i32
  }
  func.func @transform_1(%arg0: i32) -> (i32, i32) {
    %c0_i32 = arith.constant 0 : i32
    %c0_i32_0 = arith.constant 0 : i32
    %c0_i32_1 = arith.constant 0 : i32
    return %c0_i32, %c0_i32_0 : i32, i32
  }
  func.func @transform_2(%arg0: i32) -> (i32, i32) {
    %c0_i32 = arith.constant 0 : i32
    %c0_i32_0 = arith.constant 0 : i32
    %c0_i32_1 = arith.constant 0 : i32
    return %c0_i32, %c0_i32_0 : i32, i32
  }
  func.func @transform_3(%arg0: i32) -> (i32, i32, i32) {
    %c0_i32 = arith.constant 0 : i32
    %c0_i32_0 = arith.constant 0 : i32
    %c0_i32_1 = arith.constant 0 : i32
    return %arg0, %c0_i32, %c0_i32_0 : i32, i32, i32
  }
}

module attributes {stable_mosaic.version = 11 : i64} {
  func.func @_conv_bn_stats_kernel(%arg0: i32, %arg1: memref<1x8x1000xf32, #tpu.memory_space<vmem>>, %arg2: memref<8x1xf32, #tpu.memory_space<vmem>>, %arg3: memref<8x1xf32, #tpu.memory_space<vmem>>, %arg4: memref<1x1000xf32, #tpu.memory_space<vmem>>, %arg5: memref<8x216xf32, #tpu.memory_space<vmem>>, %arg6: memref<1x8x1000xf32, #tpu.memory_space<vmem>>, %arg7: memref<1x8x2xf32, #tpu.memory_space<vmem>>, %arg8: memref<8x1222xf32, #tpu.memory_space<vmem>>, %arg9: memref<216x1000xf32, #tpu.memory_space<vmem>>) attributes {dimension_semantics = [#tpu.dimension_semantics<parallel>], iteration_bounds = array<i64: 2>, scalar_prefetch = 0 : i64, scratch_operands = 2 : i64, tpu.core_type = #tpu.core_type<tc>, window_params = [{transform_indices = @transform_0, window_bounds = array<i64: 1, 8, 1000>}, {pipeline_mode = #tpu.pipeline_mode<synchronous>, transform_indices = @transform_1, window_bounds = array<i64: 8, 1>}, {pipeline_mode = #tpu.pipeline_mode<synchronous>, transform_indices = @transform_2, window_bounds = array<i64: 8, 1>}, {pipeline_mode = #tpu.pipeline_mode<synchronous>, transform_indices = @transform_3, window_bounds = array<i64: 1, 1000>}, {pipeline_mode = #tpu.pipeline_mode<synchronous>, transform_indices = @transform_4, window_bounds = array<i64: 8, 216>}, {transform_indices = @transform_5, window_bounds = array<i64: 1, 8, 1000>}, {transform_indices = @transform_6, window_bounds = array<i64: 1, 8, 2>}]} {
    %c0 = arith.constant 0 : index
    %c0_0 = arith.constant 0 : index
    %c0_1 = arith.constant 0 : index
    %0 = vector.load %arg1[%c0, %c0_0, %c0_1] : memref<1x8x1000xf32, #tpu.memory_space<vmem>>, vector<1x8x1000xf32>
    %1 = vector.shape_cast %0 : vector<1x8x1000xf32> to vector<8x1000xf32>
    %c0_2 = arith.constant 0 : index
    %c0_3 = arith.constant 0 : index
    %2 = vector.load %arg4[%c0_2, %c0_3] : memref<1x1000xf32, #tpu.memory_space<vmem>>, vector<1x1000xf32>
    %c0_4 = arith.constant 0 : index
    %c0_5 = arith.constant 0 : index
    %3 = vector.load %arg2[%c0_4, %c0_5] : memref<8x1xf32, #tpu.memory_space<vmem>>, vector<8x1xf32>
    %4 = vector.broadcast %3 : vector<8x1xf32> to vector<8x1000xf32>
    %5 = arith.mulf %1, %4 : vector<8x1000xf32>
    %c0_6 = arith.constant 0 : index
    %c0_7 = arith.constant 0 : index
    %6 = vector.load %arg3[%c0_6, %c0_7] : memref<8x1xf32, #tpu.memory_space<vmem>>, vector<8x1xf32>
    %7 = vector.broadcast %6 : vector<8x1xf32> to vector<8x1000xf32>
    %8 = arith.addf %5, %7 : vector<8x1000xf32>
    %cst = arith.constant 0.000000e+00 : f32
    %9 = vector.broadcast %cst : f32 to vector<8x1000xf32>
    %10 = arith.maximumf %8, %9 : vector<8x1000xf32>
    %11 = vector.broadcast %2 : vector<1x1000xf32> to vector<8x1000xf32>
    %12 = arith.mulf %10, %11 : vector<8x1000xf32>
    %cst_8 = arith.constant 0.000000e+00 : f32
    %13 = vector.broadcast %cst_8 : f32 to vector<8x1222xf32>
    %c0_9 = arith.constant 0 : index
    %c0_10 = arith.constant 0 : index
    %14 = vector.load %arg8[%c0_9, %c0_10] : memref<8x1222xf32, #tpu.memory_space<vmem>>, vector<8x1222xf32>
    tpu.vector_store %arg8[%c0_9, %c0_10], %13 {strides = array<i32>} : memref<8x1222xf32, #tpu.memory_space<vmem>>, vector<8x1222xf32>,
    %c0_11 = arith.constant 0 : index
    %c111 = arith.constant 111 : index
    %15 = vector.load %arg8[%c0_11, %c111] : memref<8x1222xf32, #tpu.memory_space<vmem>>, vector<8x1000xf32>
    tpu.vector_store %arg8[%c0_11, %c111], %12 {strides = array<i32>} : memref<8x1222xf32, #tpu.memory_space<vmem>>, vector<8x1000xf32>,
    %c0_12 = arith.constant 0 : index
    %c0_13 = arith.constant 0 : index
    %16 = vector.load %arg8[%c0_12, %c0_13] : memref<8x1222xf32, #tpu.memory_space<vmem>>, vector<8x1000xf32>
    %c0_14 = arith.constant 0 : index
    %c0_15 = arith.constant 0 : index
    %17 = vector.load %arg9[%c0_14, %c0_15] : memref<216x1000xf32, #tpu.memory_space<vmem>>, vector<8x1000xf32>
    tpu.vector_store %arg9[%c0_14, %c0_15], %16 {strides = array<i32>} : memref<216x1000xf32, #tpu.memory_space<vmem>>, vector<8x1000xf32>,
    %c0_16 = arith.constant 0 : index
    %c1 = arith.constant 1 : index
    %18 = vector.load %arg8[%c0_16, %c1] : memref<8x1222xf32, #tpu.memory_space<vmem>>, vector<8x1000xf32>
    %c8 = arith.constant 8 : index
    %c0_17 = arith.constant 0 : index
    %19 = vector.load %arg9[%c8, %c0_17] : memref<216x1000xf32, #tpu.memory_space<vmem>>, vector<8x1000xf32>
    tpu.vector_store %arg9[%c8, %c0_17], %18 {strides = array<i32>} : memref<216x1000xf32, #tpu.memory_space<vmem>>, vector<8x1000xf32>,
    %c0_18 = arith.constant 0 : index
    %c2 = arith.constant 2 : index
    %20 = vector.load %arg8[%c0_18, %c2] : memref<8x1222xf32, #tpu.memory_space<vmem>>, vector<8x1000xf32>
    %c16 = arith.constant 16 : index
    %c0_19 = arith.constant 0 : index
    %21 = vector.load %arg9[%c16, %c0_19] : memref<216x1000xf32, #tpu.memory_space<vmem>>, vector<8x1000xf32>
    tpu.vector_store %arg9[%c16, %c0_19], %20 {strides = array<i32>} : memref<216x1000xf32, #tpu.memory_space<vmem>>, vector<8x1000xf32>,
    %c0_20 = arith.constant 0 : index
    %c10 = arith.constant 10 : index
    %22 = vector.load %arg8[%c0_20, %c10] : memref<8x1222xf32, #tpu.memory_space<vmem>>, vector<8x1000xf32>
    %c24 = arith.constant 24 : index
    %c0_21 = arith.constant 0 : index
    %23 = vector.load %arg9[%c24, %c0_21] : memref<216x1000xf32, #tpu.memory_space<vmem>>, vector<8x1000xf32>
    tpu.vector_store %arg9[%c24, %c0_21], %22 {strides = array<i32>} : memref<216x1000xf32, #tpu.memory_space<vmem>>, vector<8x1000xf32>,
    %c0_22 = arith.constant 0 : index
    %c11 = arith.constant 11 : index
    %24 = vector.load %arg8[%c0_22, %c11] : memref<8x1222xf32, #tpu.memory_space<vmem>>, vector<8x1000xf32>
    %c32 = arith.constant 32 : index
    %c0_23 = arith.constant 0 : index
    %25 = vector.load %arg9[%c32, %c0_23] : memref<216x1000xf32, #tpu.memory_space<vmem>>, vector<8x1000xf32>
    tpu.vector_store %arg9[%c32, %c0_23], %24 {strides = array<i32>} : memref<216x1000xf32, #tpu.memory_space<vmem>>, vector<8x1000xf32>,
    %c0_24 = arith.constant 0 : index
    %c12 = arith.constant 12 : index
    %26 = vector.load %arg8[%c0_24, %c12] : memref<8x1222xf32, #tpu.memory_space<vmem>>, vector<8x1000xf32>
    %c40 = arith.constant 40 : index
    %c0_25 = arith.constant 0 : index
    %27 = vector.load %arg9[%c40, %c0_25] : memref<216x1000xf32, #tpu.memory_space<vmem>>, vector<8x1000xf32>
    tpu.vector_store %arg9[%c40, %c0_25], %26 {strides = array<i32>} : memref<216x1000xf32, #tpu.memory_space<vmem>>, vector<8x1000xf32>,
    %c0_26 = arith.constant 0 : index
    %c20 = arith.constant 20 : index
    %28 = vector.load %arg8[%c0_26, %c20] : memref<8x1222xf32, #tpu.memory_space<vmem>>, vector<8x1000xf32>
    %c48 = arith.constant 48 : index
    %c0_27 = arith.constant 0 : index
    %29 = vector.load %arg9[%c48, %c0_27] : memref<216x1000xf32, #tpu.memory_space<vmem>>, vector<8x1000xf32>
    tpu.vector_store %arg9[%c48, %c0_27], %28 {strides = array<i32>} : memref<216x1000xf32, #tpu.memory_space<vmem>>, vector<8x1000xf32>,
    %c0_28 = arith.constant 0 : index
    %c21 = arith.constant 21 : index
    %30 = vector.load %arg8[%c0_28, %c21] : memref<8x1222xf32, #tpu.memory_space<vmem>>, vector<8x1000xf32>
    %c56 = arith.constant 56 : index
    %c0_29 = arith.constant 0 : index
    %31 = vector.load %arg9[%c56, %c0_29] : memref<216x1000xf32, #tpu.memory_space<vmem>>, vector<8x1000xf32>
    tpu.vector_store %arg9[%c56, %c0_29], %30 {strides = array<i32>} : memref<216x1000xf32, #tpu.memory_space<vmem>>, vector<8x1000xf32>,
    %c0_30 = arith.constant 0 : index
    %c22 = arith.constant 22 : index
    %32 = vector.load %arg8[%c0_30, %c22] : memref<8x1222xf32, #tpu.memory_space<vmem>>, vector<8x1000xf32>
    %c64 = arith.constant 64 : index
    %c0_31 = arith.constant 0 : index
    %33 = vector.load %arg9[%c64, %c0_31] : memref<216x1000xf32, #tpu.memory_space<vmem>>, vector<8x1000xf32>
    tpu.vector_store %arg9[%c64, %c0_31], %32 {strides = array<i32>} : memref<216x1000xf32, #tpu.memory_space<vmem>>, vector<8x1000xf32>,
    %c0_32 = arith.constant 0 : index
    %c100 = arith.constant 100 : index
    %34 = vector.load %arg8[%c0_32, %c100] : memref<8x1222xf32, #tpu.memory_space<vmem>>, vector<8x1000xf32>
    %c72 = arith.constant 72 : index
    %c0_33 = arith.constant 0 : index
    %35 = vector.load %arg9[%c72, %c0_33] : memref<216x1000xf32, #tpu.memory_space<vmem>>, vector<8x1000xf32>
    tpu.vector_store %arg9[%c72, %c0_33], %34 {strides = array<i32>} : memref<216x1000xf32, #tpu.memory_space<vmem>>, vector<8x1000xf32>,
    %c0_34 = arith.constant 0 : index
    %c101 = arith.constant 101 : index
    %36 = vector.load %arg8[%c0_34, %c101] : memref<8x1222xf32, #tpu.memory_space<vmem>>, vector<8x1000xf32>
    %c80 = arith.constant 80 : index
    %c0_35 = arith.constant 0 : index
    %37 = vector.load %arg9[%c80, %c0_35] : memref<216x1000xf32, #tpu.memory_space<vmem>>, vector<8x1000xf32>
    tpu.vector_store %arg9[%c80, %c0_35], %36 {strides = array<i32>} : memref<216x1000xf32, #tpu.memory_space<vmem>>, vector<8x1000xf32>,
    %c0_36 = arith.constant 0 : index
    %c102 = arith.constant 102 : index
    %38 = vector.load %arg8[%c0_36, %c102] : memref<8x1222xf32, #tpu.memory_space<vmem>>, vector<8x1000xf32>
    %c88 = arith.constant 88 : index
    %c0_37 = arith.constant 0 : index
    %39 = vector.load %arg9[%c88, %c0_37] : memref<216x1000xf32, #tpu.memory_space<vmem>>, vector<8x1000xf32>
    tpu.vector_store %arg9[%c88, %c0_37], %38 {strides = array<i32>} : memref<216x1000xf32, #tpu.memory_space<vmem>>, vector<8x1000xf32>,
    %c0_38 = arith.constant 0 : index
    %c110 = arith.constant 110 : index
    %40 = vector.load %arg8[%c0_38, %c110] : memref<8x1222xf32, #tpu.memory_space<vmem>>, vector<8x1000xf32>
    %c96 = arith.constant 96 : index
    %c0_39 = arith.constant 0 : index
    %41 = vector.load %arg9[%c96, %c0_39] : memref<216x1000xf32, #tpu.memory_space<vmem>>, vector<8x1000xf32>
    tpu.vector_store %arg9[%c96, %c0_39], %40 {strides = array<i32>} : memref<216x1000xf32, #tpu.memory_space<vmem>>, vector<8x1000xf32>,
    %c0_40 = arith.constant 0 : index
    %c111_41 = arith.constant 111 : index
    %42 = vector.load %arg8[%c0_40, %c111_41] : memref<8x1222xf32, #tpu.memory_space<vmem>>, vector<8x1000xf32>
    %c104 = arith.constant 104 : index
    %c0_42 = arith.constant 0 : index
    %43 = vector.load %arg9[%c104, %c0_42] : memref<216x1000xf32, #tpu.memory_space<vmem>>, vector<8x1000xf32>
    tpu.vector_store %arg9[%c104, %c0_42], %42 {strides = array<i32>} : memref<216x1000xf32, #tpu.memory_space<vmem>>, vector<8x1000xf32>,
    %c0_43 = arith.constant 0 : index
    %c112 = arith.constant 112 : index
    %44 = vector.load %arg8[%c0_43, %c112] : memref<8x1222xf32, #tpu.memory_space<vmem>>, vector<8x1000xf32>
    %c112_44 = arith.constant 112 : index
    %c0_45 = arith.constant 0 : index
    %45 = vector.load %arg9[%c112_44, %c0_45] : memref<216x1000xf32, #tpu.memory_space<vmem>>, vector<8x1000xf32>
    tpu.vector_store %arg9[%c112_44, %c0_45], %44 {strides = array<i32>} : memref<216x1000xf32, #tpu.memory_space<vmem>>, vector<8x1000xf32>,
    %c0_46 = arith.constant 0 : index
    %c120 = arith.constant 120 : index
    %46 = vector.load %arg8[%c0_46, %c120] : memref<8x1222xf32, #tpu.memory_space<vmem>>, vector<8x1000xf32>
    %c120_47 = arith.constant 120 : index
    %c0_48 = arith.constant 0 : index
    %47 = vector.load %arg9[%c120_47, %c0_48] : memref<216x1000xf32, #tpu.memory_space<vmem>>, vector<8x1000xf32>
    tpu.vector_store %arg9[%c120_47, %c0_48], %46 {strides = array<i32>} : memref<216x1000xf32, #tpu.memory_space<vmem>>, vector<8x1000xf32>,
    %c0_49 = arith.constant 0 : index
    %c121 = arith.constant 121 : index
    %48 = vector.load %arg8[%c0_49, %c121] : memref<8x1222xf32, #tpu.memory_space<vmem>>, vector<8x1000xf32>
    %c128 = arith.constant 128 : index
    %c0_50 = arith.constant 0 : index
    %49 = vector.load %arg9[%c128, %c0_50] : memref<216x1000xf32, #tpu.memory_space<vmem>>, vector<8x1000xf32>
    tpu.vector_store %arg9[%c128, %c0_50], %48 {strides = array<i32>} : memref<216x1000xf32, #tpu.memory_space<vmem>>, vector<8x1000xf32>,
    %c0_51 = arith.constant 0 : index
    %c122 = arith.constant 122 : index
    %50 = vector.load %arg8[%c0_51, %c122] : memref<8x1222xf32, #tpu.memory_space<vmem>>, vector<8x1000xf32>
    %c136 = arith.constant 136 : index
    %c0_52 = arith.constant 0 : index
    %51 = vector.load %arg9[%c136, %c0_52] : memref<216x1000xf32, #tpu.memory_space<vmem>>, vector<8x1000xf32>
    tpu.vector_store %arg9[%c136, %c0_52], %50 {strides = array<i32>} : memref<216x1000xf32, #tpu.memory_space<vmem>>, vector<8x1000xf32>,
    %c0_53 = arith.constant 0 : index
    %c200 = arith.constant 200 : index
    %52 = vector.load %arg8[%c0_53, %c200] : memref<8x1222xf32, #tpu.memory_space<vmem>>, vector<8x1000xf32>
    %c144 = arith.constant 144 : index
    %c0_54 = arith.constant 0 : index
    %53 = vector.load %arg9[%c144, %c0_54] : memref<216x1000xf32, #tpu.memory_space<vmem>>, vector<8x1000xf32>
    tpu.vector_store %arg9[%c144, %c0_54], %52 {strides = array<i32>} : memref<216x1000xf32, #tpu.memory_space<vmem>>, vector<8x1000xf32>,
    %c0_55 = arith.constant 0 : index
    %c201 = arith.constant 201 : index
    %54 = vector.load %arg8[%c0_55, %c201] : memref<8x1222xf32, #tpu.memory_space<vmem>>, vector<8x1000xf32>
    %c152 = arith.constant 152 : index
    %c0_56 = arith.constant 0 : index
    %55 = vector.load %arg9[%c152, %c0_56] : memref<216x1000xf32, #tpu.memory_space<vmem>>, vector<8x1000xf32>
    tpu.vector_store %arg9[%c152, %c0_56], %54 {strides = array<i32>} : memref<216x1000xf32, #tpu.memory_space<vmem>>, vector<8x1000xf32>,
    %c0_57 = arith.constant 0 : index
    %c202 = arith.constant 202 : index
    %56 = vector.load %arg8[%c0_57, %c202] : memref<8x1222xf32, #tpu.memory_space<vmem>>, vector<8x1000xf32>
    %c160 = arith.constant 160 : index
    %c0_58 = arith.constant 0 : index
    %57 = vector.load %arg9[%c160, %c0_58] : memref<216x1000xf32, #tpu.memory_space<vmem>>, vector<8x1000xf32>
    tpu.vector_store %arg9[%c160, %c0_58], %56 {strides = array<i32>} : memref<216x1000xf32, #tpu.memory_space<vmem>>, vector<8x1000xf32>,
    %c0_59 = arith.constant 0 : index
    %c210 = arith.constant 210 : index
    %58 = vector.load %arg8[%c0_59, %c210] : memref<8x1222xf32, #tpu.memory_space<vmem>>, vector<8x1000xf32>
    %c168 = arith.constant 168 : index
    %c0_60 = arith.constant 0 : index
    %59 = vector.load %arg9[%c168, %c0_60] : memref<216x1000xf32, #tpu.memory_space<vmem>>, vector<8x1000xf32>
    tpu.vector_store %arg9[%c168, %c0_60], %58 {strides = array<i32>} : memref<216x1000xf32, #tpu.memory_space<vmem>>, vector<8x1000xf32>,
    %c0_61 = arith.constant 0 : index
    %c211 = arith.constant 211 : index
    %60 = vector.load %arg8[%c0_61, %c211] : memref<8x1222xf32, #tpu.memory_space<vmem>>, vector<8x1000xf32>
    %c176 = arith.constant 176 : index
    %c0_62 = arith.constant 0 : index
    %61 = vector.load %arg9[%c176, %c0_62] : memref<216x1000xf32, #tpu.memory_space<vmem>>, vector<8x1000xf32>
    tpu.vector_store %arg9[%c176, %c0_62], %60 {strides = array<i32>} : memref<216x1000xf32, #tpu.memory_space<vmem>>, vector<8x1000xf32>,
    %c0_63 = arith.constant 0 : index
    %c212 = arith.constant 212 : index
    %62 = vector.load %arg8[%c0_63, %c212] : memref<8x1222xf32, #tpu.memory_space<vmem>>, vector<8x1000xf32>
    %c184 = arith.constant 184 : index
    %c0_64 = arith.constant 0 : index
    %63 = vector.load %arg9[%c184, %c0_64] : memref<216x1000xf32, #tpu.memory_space<vmem>>, vector<8x1000xf32>
    tpu.vector_store %arg9[%c184, %c0_64], %62 {strides = array<i32>} : memref<216x1000xf32, #tpu.memory_space<vmem>>, vector<8x1000xf32>,
    %c0_65 = arith.constant 0 : index
    %c220 = arith.constant 220 : index
    %64 = vector.load %arg8[%c0_65, %c220] : memref<8x1222xf32, #tpu.memory_space<vmem>>, vector<8x1000xf32>
    %c192 = arith.constant 192 : index
    %c0_66 = arith.constant 0 : index
    %65 = vector.load %arg9[%c192, %c0_66] : memref<216x1000xf32, #tpu.memory_space<vmem>>, vector<8x1000xf32>
    tpu.vector_store %arg9[%c192, %c0_66], %64 {strides = array<i32>} : memref<216x1000xf32, #tpu.memory_space<vmem>>, vector<8x1000xf32>,
    %c0_67 = arith.constant 0 : index
    %c221 = arith.constant 221 : index
    %66 = vector.load %arg8[%c0_67, %c221] : memref<8x1222xf32, #tpu.memory_space<vmem>>, vector<8x1000xf32>
    %c200_68 = arith.constant 200 : index
    %c0_69 = arith.constant 0 : index
    %67 = vector.load %arg9[%c200_68, %c0_69] : memref<216x1000xf32, #tpu.memory_space<vmem>>, vector<8x1000xf32>
    tpu.vector_store %arg9[%c200_68, %c0_69], %66 {strides = array<i32>} : memref<216x1000xf32, #tpu.memory_space<vmem>>, vector<8x1000xf32>,
    %c0_70 = arith.constant 0 : index
    %c222 = arith.constant 222 : index
    %68 = vector.load %arg8[%c0_70, %c222] : memref<8x1222xf32, #tpu.memory_space<vmem>>, vector<8x1000xf32>
    %c208 = arith.constant 208 : index
    %c0_71 = arith.constant 0 : index
    %69 = vector.load %arg9[%c208, %c0_71] : memref<216x1000xf32, #tpu.memory_space<vmem>>, vector<8x1000xf32>
    tpu.vector_store %arg9[%c208, %c0_71], %68 {strides = array<i32>} : memref<216x1000xf32, #tpu.memory_space<vmem>>, vector<8x1000xf32>,
    %c0_72 = arith.constant 0 : index
    %c0_73 = arith.constant 0 : index
    %70 = vector.load %arg5[%c0_72, %c0_73] : memref<8x216xf32, #tpu.memory_space<vmem>>, vector<8x216xf32>
    %c0_74 = arith.constant 0 : index
    %c0_75 = arith.constant 0 : index
    %71 = vector.load %arg9[%c0_74, %c0_75] : memref<216x1000xf32, #tpu.memory_space<vmem>>, vector<216x1000xf32>
    %cst_76 = arith.constant dense<0.000000e+00> : vector<8x1000xf32>
    %72 = tpu.matmul %70, %71, %cst_76 {dimension_numbers = #tpu.dot_dimension_numbers<[1], [0], [0], [1], [0, 0, 1, 1], [], []>} : vector<8x216xf32>, vector<216x1000xf32>, vector<8x1000xf32> -> vector<8x1000xf32>
    %73 = vector.shape_cast %72 : vector<8x1000xf32> to vector<1x8x1000xf32>
    %c0_77 = arith.constant 0 : index
    %c0_78 = arith.constant 0 : index
    %c0_79 = arith.constant 0 : index
    %74 = vector.load %arg6[%c0_77, %c0_78, %c0_79] : memref<1x8x1000xf32, #tpu.memory_space<vmem>>, vector<1x8x1000xf32>
    tpu.vector_store %arg6[%c0_77, %c0_78, %c0_79], %73 {strides = array<i32>} : memref<1x8x1000xf32, #tpu.memory_space<vmem>>, vector<1x8x1000xf32>,
    %75 = vector.broadcast %2 : vector<1x1000xf32> to vector<8x1000xf32>
    %76 = arith.mulf %72, %75 : vector<8x1000xf32>
    %cst_80 = arith.constant dense<0.000000e+00> : vector<8xf32>
    %77 = vector.multi_reduction <add>, %76, %cst_80 [1] : vector<8x1000xf32> to vector<8xf32>
    %78 = vector.shape_cast %77 : vector<8xf32> to vector<8x1xf32>
    %79 = arith.mulf %76, %72 : vector<8x1000xf32>
    %cst_81 = arith.constant dense<0.000000e+00> : vector<8xf32>
    %80 = vector.multi_reduction <add>, %79, %cst_81 [1] : vector<8x1000xf32> to vector<8xf32>
    %81 = vector.shape_cast %80 : vector<8xf32> to vector<8x1xf32>
    %82 = tpu.concatenate %78, %81 in 1 : vector<8x1xf32>, vector<8x1xf32> -> vector<8x2xf32>
    %83 = vector.shape_cast %82 : vector<8x2xf32> to vector<1x8x2xf32>
    %c0_82 = arith.constant 0 : index
    %c0_83 = arith.constant 0 : index
    %c0_84 = arith.constant 0 : index
    %84 = vector.load %arg7[%c0_82, %c0_83, %c0_84] : memref<1x8x2xf32, #tpu.memory_space<vmem>>, vector<1x8x2xf32>
    tpu.vector_store %arg7[%c0_82, %c0_83, %c0_84], %83 {strides = array<i32>} : memref<1x8x2xf32, #tpu.memory_space<vmem>>, vector<1x8x2xf32>,
    return
  }
  func.func @transform_0(%arg0: i32) -> (i32, i32, i32) {
    %c0_i32 = arith.constant 0 : i32
    %c0_i32_0 = arith.constant 0 : i32
    %c0_i32_1 = arith.constant 0 : i32
    return %arg0, %c0_i32, %c0_i32_0 : i32, i32, i32
  }
  func.func @transform_1(%arg0: i32) -> (i32, i32) {
    %c0_i32 = arith.constant 0 : i32
    %c0_i32_0 = arith.constant 0 : i32
    %c0_i32_1 = arith.constant 0 : i32
    return %c0_i32, %c0_i32_0 : i32, i32
  }
  func.func @transform_2(%arg0: i32) -> (i32, i32) {
    %c0_i32 = arith.constant 0 : i32
    %c0_i32_0 = arith.constant 0 : i32
    %c0_i32_1 = arith.constant 0 : i32
    return %c0_i32, %c0_i32_0 : i32, i32
  }
  func.func @transform_3(%arg0: i32) -> (i32, i32) {
    %c0_i32 = arith.constant 0 : i32
    %c0_i32_0 = arith.constant 0 : i32
    %c0_i32_1 = arith.constant 0 : i32
    return %c0_i32, %c0_i32_0 : i32, i32
  }
  func.func @transform_4(%arg0: i32) -> (i32, i32) {
    %c0_i32 = arith.constant 0 : i32
    %c0_i32_0 = arith.constant 0 : i32
    %c0_i32_1 = arith.constant 0 : i32
    return %c0_i32, %c0_i32_0 : i32, i32
  }
  func.func @transform_5(%arg0: i32) -> (i32, i32, i32) {
    %c0_i32 = arith.constant 0 : i32
    %c0_i32_0 = arith.constant 0 : i32
    %c0_i32_1 = arith.constant 0 : i32
    return %arg0, %c0_i32, %c0_i32_0 : i32, i32, i32
  }
  func.func @transform_6(%arg0: i32) -> (i32, i32, i32) {
    %c0_i32 = arith.constant 0 : i32
    %c0_i32_0 = arith.constant 0 : i32
    %c0_i32_1 = arith.constant 0 : i32
    return %arg0, %c0_i32, %c0_i32_0 : i32, i32, i32
  }
}

</mosaic_0001>

<llo_original>
// kernel: double_conv3d_forward.5
$region0: #{double_conv3d_forward.5}
  #allocation0 [shape = 'u32[]', space=smem, size = 0x4, offset = 0x4, fixed_abs, tag = 'smem constant byte address 0x4 - core index']
  #allocation1 [shape = 'u32[144,128]{1,0:T(1,128)}', space=vmem, size = 0x12000, scoped, tag = 'internal scratch']
  %s0 = inlined_call_operand.vmem [shape: f32[2,8,1000], index: 0, kind: input, shape index: {}]
  %s1 = inlined_call_operand.vmem [shape: f32[8,1], index: 1, kind: input, shape index: {}]
  %s2 = inlined_call_operand.vmem [shape: f32[8,1], index: 2, kind: input, shape index: {}]
  %s3 = inlined_call_operand.vmem [shape: f32[2,8,1000], index: 3, kind: output, shape index: {}]
  %s4 = sld [smem:[#allocation0]]
  $region45: #{double_conv3d_forward.5} parent=0
    _
  %s6 = ssub.s32 1, %s4
  %s7 = scalar_select 0, %s6, %s4
  loop: start=0, step=1, limit=4
  $region2: #{double_conv3d_forward.5} parent=0 // loop_pre_header
    _
  $region3: #{double_conv3d_forward.5} parent=0 // loop_header
    %s9 = sphi 0, %s13
    %p10 = scmp.ge.s32.totalorder %s9, 4
    %s19 = sphi 0, %s21
    %s22 = sphi 0, %s19
    %s23 = sphi 0, %s22
    %s39 = sphi 0, %s23
    %s43 = sphi 0, %s43
    %s45 = sphi 0, %s43
    %s46 = sphi 0, %s45
    %s60 = sphi 0, %s46
    %s64 = sphi 0, %s64
    %s66 = sphi 0, %s64
    %s67 = sphi 0, %s66
    %s81 = sphi 0, %s67
    %s87 = sphi 0, %s89
    %s90 = sphi 0, %s87
    %s91 = sphi 0, %s90
    %s107 = sphi 0, %s91
  $region4: #{double_conv3d_forward.5} parent=0 // loop_header_branch
    %12 = sbr.rel (%p10) target = $region8
  $region5: #{double_conv3d_forward.5} parent=0 // loop_body
    %s14 = ssub.s32 %s9, 1
    %s15 = ssub.s32 %s9, 2
    %s16 = sadd.s32 %s9, 1
    %s17 = ssub.s32 %s9, %s16
    %p18 = scmp.eq.s32.totalorder %s17, 0
    %s20 = sadd.s32 %s19, 1
    %s21 = scalar_select %p18, %s19, %s20
    %p24 = pneg %p18
    %p25 = scmp.eq.s32.totalorder %s9, 1
    %p26 = por %p24, %p25
    %p27 = scmp.ne.s32.totalorder %s19, %s22
    %p28 = scmp.eq.s32.totalorder %s9, 0
    %p29 = por %p27, %p28
    %p30 = scmp.ne.s32.totalorder %s19, %s22
    %p31 = scmp.eq.s32.totalorder %s14, 1
    %p32 = por %p30, %p31
    %p33 = scmp.ne.s32.totalorder %s22, %s23
    %p34 = scmp.eq.s32.totalorder %s14, 0
    %p35 = por %p33, %p34
    %p36 = scmp.ne.s32.totalorder %s22, %s23
    %p37 = scmp.eq.s32.totalorder %s15, 1
    %p38 = por %p36, %p37
    %p40 = scmp.ne.s32.totalorder %s23, %s39
    %p41 = scmp.eq.s32.totalorder %s15, 0
    %p42 = por %p40, %p41
    %s44 = sadd.s32 %s43, 1
    %p47 = scmp.eq.s32.totalorder %s9, 1
    %p48 = scmp.ne.s32.totalorder %s43, %s45
    %p49 = scmp.eq.s32.totalorder %s9, 0
    %p50 = por %p48, %p49
    %p51 = scmp.ne.s32.totalorder %s43, %s45
    %p52 = scmp.eq.s32.totalorder %s14, 1
    %p53 = por %p51, %p52
    %p54 = scmp.ne.s32.totalorder %s45, %s46
    %p55 = scmp.eq.s32.totalorder %s14, 0
    %p56 = por %p54, %p55
    %p57 = scmp.ne.s32.totalorder %s45, %s46
    %p58 = scmp.eq.s32.totalorder %s15, 1
    %p59 = por %p57, %p58
    %p61 = scmp.ne.s32.totalorder %s46, %s60
    %p62 = scmp.eq.s32.totalorder %s15, 0
    %p63 = por %p61, %p62
    %s65 = sadd.s32 %s64, 1
    %p68 = scmp.eq.s32.totalorder %s9, 1
    %p69 = scmp.ne.s32.totalorder %s64, %s66
    %p70 = scmp.eq.s32.totalorder %s9, 0
    %p71 = por %p69, %p70
    %p72 = scmp.ne.s32.totalorder %s64, %s66
    %p73 = scmp.eq.s32.totalorder %s14, 1
    %p74 = por %p72, %p73
    %p75 = scmp.ne.s32.totalorder %s66, %s67
    %p76 = scmp.eq.s32.totalorder %s14, 0
    %p77 = por %p75, %p76
    %p78 = scmp.ne.s32.totalorder %s66, %s67
    %p79 = scmp.eq.s32.totalorder %s15, 1
    %p80 = por %p78, %p79
    %p82 = scmp.ne.s32.totalorder %s67, %s81
    %p83 = scmp.eq.s32.totalorder %s15, 0
    %p84 = por %p82, %p83
    %s85 = ssub.s32 %s9, %s16
    %p86 = scmp.eq.s32.totalorder %s85, 0
    %s88 = sadd.s32 %s87, 1
    %s89 = scalar_select %p86, %s87, %s88
    %p92 = pneg %p86
    %p93 = scmp.eq.s32.totalorder %s9, 1
    %p94 = por %p92, %p93
    %p95 = scmp.ne.s32.totalorder %s87, %s90
    %p96 = scmp.eq.s32.totalorder %s9, 0
    %p97 = por %p95, %p96
    %p98 = scmp.ne.s32.totalorder %s87, %s90
    %p99 = scmp.eq.s32.totalorder %s14, 1
    %p100 = por %p98, %p99
    %p101 = scmp.ne.s32.totalorder %s90, %s91
    %p102 = scmp.eq.s32.totalorder %s14, 0
    %p103 = por %p101, %p102
    %p104 = scmp.ne.s32.totalorder %s90, %s91
    %p105 = scmp.eq.s32.totalorder %s15, 1
    %p106 = por %p104, %p105
    %p108 = scmp.ne.s32.totalorder %s91, %s107
    %p109 = scmp.eq.s32.totalorder %s15, 0
    %p110 = por %p108, %p109
    %p111 = scmp.le.s32.totalorder 1, %s9
    %p112 = scmp.lt.s32.totalorder %s9, 3
    %p113 = pnand %p111, %p112
    %p114 = pneg %p113
    // Predicated region
    $region9: #{double_conv3d_forward.5} parent=5 // pred_check
      _
    $region10: #{double_conv3d_forward.5} parent=5 // pred_check_branch
      %116 = sbr.rel (%p113) target = $region12
    $region11: #{double_conv3d_forward.5} parent=5 // pred_region
      %s117 = ssub.s32 %s9, 1
      // Predicated region
      $region13: #{double_conv3d_forward.5} parent=11 // pred_check
        %p118 = pneg %p56
      $region14: #{double_conv3d_forward.5} parent=11 // pred_check_branch
        %120 = sbr.rel (%p118) target = $region16
      $region15: #{double_conv3d_forward.5} parent=11 // pred_region
        _
      $region16: #{double_conv3d_forward.5} parent=11 // pred_fallthru
        _
      // Predicated region
      $region17: #{double_conv3d_forward.5} parent=11 // pred_check
        %p121 = pneg %p77
      $region18: #{double_conv3d_forward.5} parent=11 // pred_check_branch
        %123 = sbr.rel (%p121) target = $region20
      $region19: #{double_conv3d_forward.5} parent=11 // pred_region
        _
      $region20: #{double_conv3d_forward.5} parent=11 // pred_fallthru
        _
    $region12: #{double_conv3d_forward.5} parent=5 // pred_fallthru
      _
    %p124 = scmp.lt.s32.totalorder %s9, 2
    // Predicated region
    $region21: #{double_conv3d_forward.5} parent=5 // pred_check
      %p125 = pneg %p124
    $region22: #{double_conv3d_forward.5} parent=5 // pred_check_branch
      %127 = sbr.rel (%p125) target = $region24
    $region23: #{double_conv3d_forward.5} parent=5 // pred_region
      // Predicated region
      $region25: #{double_conv3d_forward.5} parent=23 // pred_check
        %p128 = pneg %p29
      $region26: #{double_conv3d_forward.5} parent=23 // pred_check_branch
        %130 = sbr.rel (%p128) target = $region28
      $region27: #{double_conv3d_forward.5} parent=23 // pred_region
        %p131 = scmp.lt.s32.totalorder %s9, 1
        %s132 = scalar_select %p131, %s9, 1
        %s133 = smul.addr %s132, 8
        %s134 = smul.addr %s133, 8
        %s135 = scalar_lea.vmem %s0, %s134
      $region28: #{double_conv3d_forward.5} parent=23 // pred_fallthru
        _
    $region24: #{double_conv3d_forward.5} parent=5 // pred_fallthru
      _
    %p136 = scmp.le.s32.totalorder 1, %s9
    %p137 = scmp.lt.s32.totalorder %s9, 3
    %p138 = pnand %p136, %p137
    %p139 = pneg %p138
    // Predicated region
    $region29: #{double_conv3d_forward.5} parent=5 // pred_check
      _
    $region30: #{double_conv3d_forward.5} parent=5 // pred_check_branch
      %141 = sbr.rel (%p138) target = $region32
    $region31: #{double_conv3d_forward.5} parent=5 // pred_region
      %s142 = ssub.s32 %s9, 1
      %p143 = scmp.lt.s32.totalorder %s14, 1
      %s144 = scalar_select %p143, %s14, 1
      %s145 = smul.addr %s144, 8
      %s146 = smul.addr %s145, 8
      %s147 = scalar_lea.vmem %s0, %s146
      %p148 = pneg %p35
      %p149 = pneg %p32
      %p150 = pneg %p56
      %p151 = pneg %p53
      %p152 = pneg %p77
      %p153 = pneg %p74
      %p154 = pneg %p103
      %p155 = pneg %p100
      %p156 = scmp.lt.s32.totalorder %s14, 1
      %s157 = scalar_select %p156, %s14, 1
      %s158 = smul.addr %s157, 8
      %s159 = smul.addr %s158, 8
      %s160 = scalar_lea.vmem %s3, %s159
      %p161 = scmp.lt.s32.totalorder %s14, 1
      %s162 = scalar_select %p161, %s14, 1
      %s163 = smul.addr %s162, 8
      %s164 = smul.addr %s163, 8
      %s165 = scalar_lea.vmem %s0, %s164
      %p166 = scmp.lt.s32.totalorder %s14, 1
      %s167 = scalar_select %p166, %s14, 1
      %s168 = smul.addr %s167, 8
      %s169 = smul.addr %s168, 8
      %s170 = scalar_lea.vmem %s3, %s169
      %v171 = vld [vmem:[%s165] sm:$0xff]
      %v172 = vld [vmem:[%s165 + $0x8] sm:$0xff]
      %v173 = vld [vmem:[%s165 + $0x10] sm:$0xff]
      %v174 = vld [vmem:[%s165 + $0x18] sm:$0xff]
      %v175 = vld [vmem:[%s165 + $0x20] sm:$0xff]
      %v176 = vld [vmem:[%s165 + $0x28] sm:$0xff]
      %v177 = vld [vmem:[%s165 + $0x30] sm:$0xff]
      %v178 = vld [vmem:[%s165 + $0x38] sm:$0xff]
      %v179 = vld [vmem:[%s1] sm:$0xff]
      %181 = vset.pattern.permute.xlu0 0
      %182 = vperm.xlu0 %181, %v179
      %v183 = vpop.permute.xlu0 %182
      %v185 = vmul.f32 %v171, %v183
      %v186 = vmul.f32 %v172, %v183
      %v187 = vmul.f32 %v173, %v183
      %v188 = vmul.f32 %v174, %v183
      %v189 = vmul.f32 %v175, %v183
      %v190 = vmul.f32 %v176, %v183
      %v191 = vmul.f32 %v177, %v183
      %v192 = vmul.f32 %v178, %v183
      %v193 = vld [vmem:[%s2] sm:$0xff]
      %195 = vset.pattern.permute.xlu0 0
      %196 = vperm.xlu0 %195, %v193
      %v197 = vpop.permute.xlu0 %196
      %v199 = vadd.f32 %v185, %v197
      %v200 = vadd.f32 %v186, %v197
      %v201 = vadd.f32 %v187, %v197
      %v202 = vadd.f32 %v188, %v197
      %v203 = vadd.f32 %v189, %v197
      %v204 = vadd.f32 %v190, %v197
      %v205 = vadd.f32 %v191, %v197
      %v206 = vadd.f32 %v192, %v197
      %v207 = vmax.f32 %v199, 0.0
      %v208 = vmax.f32 %v200, 0.0
      %v209 = vmax.f32 %v201, 0.0
      %v210 = vmax.f32 %v202, 0.0
      %v211 = vmax.f32 %v203, 0.0
      %v212 = vmax.f32 %v204, 0.0
      %v213 = vmax.f32 %v205, 0.0
      %v214 = vmax.f32 %v206, 0.0
      %215 = vst [vmem:[%s170] sm:$0xff] %v207
      %216 = vst [vmem:[%s170 + $0x8] sm:$0xff] %v208
      %217 = vst [vmem:[%s170 + $0x10] sm:$0xff] %v209
      %218 = vst [vmem:[%s170 + $0x18] sm:$0xff] %v210
      %219 = vst [vmem:[%s170 + $0x20] sm:$0xff] %v211
      %220 = vst [vmem:[%s170 + $0x28] sm:$0xff] %v212
      %221 = vst [vmem:[%s170 + $0x30] sm:$0xff] %v213
      %vm222 = vcmask 850944
      %223 = vst.msk [vmem:[%s170 + $0x38] sm:$0xff] %vm222, %v214
      %p224 = scmp.lt.s32.totalorder %s14, 1
      %s225 = scalar_select %p224, %s14, 1
      %s226 = smul.addr %s225, 8
      %s227 = smul.addr %s226, 8
      %s228 = scalar_lea.vmem %s3, %s227
      // Predicated region
      $region33: #{double_conv3d_forward.5} parent=31 // pred_check
        %p229 = pneg %p100
      $region34: #{double_conv3d_forward.5} parent=31 // pred_check_branch
        %231 = sbr.rel (%p229) target = $region36
      $region35: #{double_conv3d_forward.5} parent=31 // pred_region
        _
      $region36: #{double_conv3d_forward.5} parent=31 // pred_fallthru
        _
    $region32: #{double_conv3d_forward.5} parent=5 // pred_fallthru
      _
    %p232 = scmp.le.s32.totalorder 2, %s9
    // Predicated region
    $region37: #{double_conv3d_forward.5} parent=5 // pred_check
      %p233 = pneg %p232
    $region38: #{double_conv3d_forward.5} parent=5 // pred_check_branch
      %235 = sbr.rel (%p233) target = $region40
    $region39: #{double_conv3d_forward.5} parent=5 // pred_region
      %s236 = ssub.s32 %s9, 2
      // Predicated region
      $region41: #{double_conv3d_forward.5} parent=39 // pred_check
        %p237 = pneg %p106
      $region42: #{double_conv3d_forward.5} parent=39 // pred_check_branch
        %239 = sbr.rel (%p237) target = $region44
      $region43: #{double_conv3d_forward.5} parent=39 // pred_region
        %p240 = scmp.lt.s32.totalorder %s15, 1
        %s241 = scalar_select %p240, %s15, 1
        %s242 = smul.addr %s241, 8
        %s243 = smul.addr %s242, 8
        %s244 = scalar_lea.vmem %s3, %s243
      $region44: #{double_conv3d_forward.5} parent=39 // pred_fallthru
        _
    $region40: #{double_conv3d_forward.5} parent=5 // pred_fallthru
      _
  $region6: #{double_conv3d_forward.5} parent=0 // loop_footer
    %s13 = sadd.s32 1, %s9
  $region7: #{double_conv3d_forward.5} parent=0 // loop_footer_branch
    %8 = sbr.rel target = $region3
  $region8: #{double_conv3d_forward.5} parent=0 // loop_exit
    _

// kernel: double_conv3d_forward.3
$region0: #{double_conv3d_forward.3}
  #allocation0 [shape = 'u32[]', space=smem, size = 0x4, offset = 0x4, fixed_abs, tag = 'smem constant byte address 0x4 - core index']
  #allocation1 [shape = 'u32[144,128]{1,0:T(1,128)}', space=vmem, size = 0x12000, scoped, tag = 'internal scratch']
  #allocation2 [shape = 'f32[4,1222]{1,0:T(4,128)}', space=vmem, size = 0x5000, scoped, tag = 'scratch operand']
  #allocation3 [shape = 'f32[108,1000]{1,0:T(8,128)}', space=vmem, size = 0x70000, scoped, tag = 'scratch operand']
  %s0 = inlined_call_operand.vmem [shape: f32[2,4,1000], index: 0, kind: input, shape index: {}]
  %s1 = inlined_call_operand.vmem [shape: f32[4,1], index: 1, kind: input, shape index: {}]
  %s2 = inlined_call_operand.vmem [shape: f32[4,1], index: 2, kind: input, shape index: {}]
  %s3 = inlined_call_operand.vmem [shape: f32[1,1000], index: 3, kind: input, shape index: {}]
  %s4 = inlined_call_operand.vmem [shape: f32[8,108], index: 4, kind: input, shape index: {}]
  %s5 = inlined_call_operand.vmem [shape: f32[2,8,1000], index: 5, kind: output, shape index: {0}]
  %s6 = inlined_call_operand.vmem [shape: f32[2,8,2], index: 6, kind: output, shape index: {1}]
  %7 = xla_tuple %s5, %s6
  %s8 = sld [smem:[#allocation0]]
  $region61: #{double_conv3d_forward.3} parent=0
    _
  %s10 = ssub.s32 1, %s8
  %s11 = scalar_select 0, %s10, %s8
  loop: start=0, step=1, limit=4
  $region2: #{double_conv3d_forward.3} parent=0 // loop_pre_header
    _
  $region3: #{double_conv3d_forward.3} parent=0 // loop_header
    %s13 = sphi 0, %s17
    %p14 = scmp.ge.s32.totalorder %s13, 4
    %s23 = sphi 0, %s25
    %s26 = sphi 0, %s23
    %s27 = sphi 0, %s26
    %s43 = sphi 0, %s27
    %s47 = sphi 0, %s47
    %s49 = sphi 0, %s47
    %s50 = sphi 0, %s49
    %s64 = sphi 0, %s50
    %s68 = sphi 0, %s68
    %s70 = sphi 0, %s68
    %s71 = sphi 0, %s70
    %s85 = sphi 0, %s71
    %s89 = sphi 0, %s89
    %s91 = sphi 0, %s89
    %s92 = sphi 0, %s91
    %s106 = sphi 0, %s92
    %s110 = sphi 0, %s110
    %s112 = sphi 0, %s110
    %s113 = sphi 0, %s112
    %s127 = sphi 0, %s113
    %s133 = sphi 0, %s135
    %s136 = sphi 0, %s133
    %s137 = sphi 0, %s136
    %s153 = sphi 0, %s137
    %s159 = sphi 0, %s161
    %s162 = sphi 0, %s159
    %s163 = sphi 0, %s162
    %s179 = sphi 0, %s163
  $region4: #{double_conv3d_forward.3} parent=0 // loop_header_branch
    %16 = sbr.rel (%p14) target = $region8
  $region5: #{double_conv3d_forward.3} parent=0 // loop_body
    %s18 = ssub.s32 %s13, 1
    %s19 = ssub.s32 %s13, 2
    %s20 = sadd.s32 %s13, 1
    %s21 = ssub.s32 %s13, %s20
    %p22 = scmp.eq.s32.totalorder %s21, 0
    %s24 = sadd.s32 %s23, 1
    %s25 = scalar_select %p22, %s23, %s24
    %p28 = pneg %p22
    %p29 = scmp.eq.s32.totalorder %s13, 1
    %p30 = por %p28, %p29
    %p31 = scmp.ne.s32.totalorder %s23, %s26
    %p32 = scmp.eq.s32.totalorder %s13, 0
    %p33 = por %p31, %p32
    %p34 = scmp.ne.s32.totalorder %s23, %s26
    %p35 = scmp.eq.s32.totalorder %s18, 1
    %p36 = por %p34, %p35
    %p37 = scmp.ne.s32.totalorder %s26, %s27
    %p38 = scmp.eq.s32.totalorder %s18, 0
    %p39 = por %p37, %p38
    %p40 = scmp.ne.s32.totalorder %s26, %s27
    %p41 = scmp.eq.s32.totalorder %s19, 1
    %p42 = por %p40, %p41
    %p44 = scmp.ne.s32.totalorder %s27, %s43
    %p45 = scmp.eq.s32.totalorder %s19, 0
    %p46 = por %p44, %p45
    %s48 = sadd.s32 %s47, 1
    %p51 = scmp.eq.s32.totalorder %s13, 1
    %p52 = scmp.ne.s32.totalorder %s47, %s49
    %p53 = scmp.eq.s32.totalorder %s13, 0
    %p54 = por %p52, %p53
    %p55 = scmp.ne.s32.totalorder %s47, %s49
    %p56 = scmp.eq.s32.totalorder %s18, 1
    %p57 = por %p55, %p56
    %p58 = scmp.ne.s32.totalorder %s49, %s50
    %p59 = scmp.eq.s32.totalorder %s18, 0
    %p60 = por %p58, %p59
    %p61 = scmp.ne.s32.totalorder %s49, %s50
    %p62 = scmp.eq.s32.totalorder %s19, 1
    %p63 = por %p61, %p62
    %p65 = scmp.ne.s32.totalorder %s50, %s64
    %p66 = scmp.eq.s32.totalorder %s19, 0
    %p67 = por %p65, %p66
    %s69 = sadd.s32 %s68, 1
    %p72 = scmp.eq.s32.totalorder %s13, 1
    %p73 = scmp.ne.s32.totalorder %s68, %s70
    %p74 = scmp.eq.s32.totalorder %s13, 0
    %p75 = por %p73, %p74
    %p76 = scmp.ne.s32.totalorder %s68, %s70
    %p77 = scmp.eq.s32.totalorder %s18, 1
    %p78 = por %p76, %p77
    %p79 = scmp.ne.s32.totalorder %s70, %s71
    %p80 = scmp.eq.s32.totalorder %s18, 0
    %p81 = por %p79, %p80
    %p82 = scmp.ne.s32.totalorder %s70, %s71
    %p83 = scmp.eq.s32.totalorder %s19, 1
    %p84 = por %p82, %p83
    %p86 = scmp.ne.s32.totalorder %s71, %s85
    %p87 = scmp.eq.s32.totalorder %s19, 0
    %p88 = por %p86, %p87
    %s90 = sadd.s32 %s89, 1
    %p93 = scmp.eq.s32.totalorder %s13, 1
    %p94 = scmp.ne.s32.totalorder %s89, %s91
    %p95 = scmp.eq.s32.totalorder %s13, 0
    %p96 = por %p94, %p95
    %p97 = scmp.ne.s32.totalorder %s89, %s91
    %p98 = scmp.eq.s32.totalorder %s18, 1
    %p99 = por %p97, %p98
    %p100 = scmp.ne.s32.totalorder %s91, %s92
    %p101 = scmp.eq.s32.totalorder %s18, 0
    %p102 = por %p100, %p101
    %p103 = scmp.ne.s32.totalorder %s91, %s92
    %p104 = scmp.eq.s32.totalorder %s19, 1
    %p105 = por %p103, %p104
    %p107 = scmp.ne.s32.totalorder %s92, %s106
    %p108 = scmp.eq.s32.totalorder %s19, 0
    %p109 = por %p107, %p108
    %s111 = sadd.s32 %s110, 1
    %p114 = scmp.eq.s32.totalorder %s13, 1
    %p115 = scmp.ne.s32.totalorder %s110, %s112
    %p116 = scmp.eq.s32.totalorder %s13, 0
    %p117 = por %p115, %p116
    %p118 = scmp.ne.s32.totalorder %s110, %s112
    %p119 = scmp.eq.s32.totalorder %s18, 1
    %p120 = por %p118, %p119
    %p121 = scmp.ne.s32.totalorder %s112, %s113
    %p122 = scmp.eq.s32.totalorder %s18, 0
    %p123 = por %p121, %p122
    %p124 = scmp.ne.s32.totalorder %s112, %s113
    %p125 = scmp.eq.s32.totalorder %s19, 1
    %p126 = por %p124, %p125
    %p128 = scmp.ne.s32.totalorder %s113, %s127
    %p129 = scmp.eq.s32.totalorder %s19, 0
    %p130 = por %p128, %p129
    %s131 = ssub.s32 %s13, %s20
    %p132 = scmp.eq.s32.totalorder %s131, 0
    %s134 = sadd.s32 %s133, 1
    %s135 = scalar_select %p132, %s133, %s134
    %p138 = pneg %p132
    %p139 = scmp.eq.s32.totalorder %s13, 1
    %p140 = por %p138, %p139
    %p141 = scmp.ne.s32.totalorder %s133, %s136
    %p142 = scmp.eq.s32.totalorder %s13, 0
    %p143 = por %p141, %p142
    %p144 = scmp.ne.s32.totalorder %s133, %s136
    %p145 = scmp.eq.s32.totalorder %s18, 1
    %p146 = por %p144, %p145
    %p147 = scmp.ne.s32.totalorder %s136, %s137
    %p148 = scmp.eq.s32.totalorder %s18, 0
    %p149 = por %p147, %p148
    %p150 = scmp.ne.s32.totalorder %s136, %s137
    %p151 = scmp.eq.s32.totalorder %s19, 1
    %p152 = por %p150, %p151
    %p154 = scmp.ne.s32.totalorder %s137, %s153
    %p155 = scmp.eq.s32.totalorder %s19, 0
    %p156 = por %p154, %p155
    %s157 = ssub.s32 %s13, %s20
    %p158 = scmp.eq.s32.totalorder %s157, 0
    %s160 = sadd.s32 %s159, 1
    %s161 = scalar_select %p158, %s159, %s160
    %p164 = pneg %p158
    %p165 = scmp.eq.s32.totalorder %s13, 1
    %p166 = por %p164, %p165
    %p167 = scmp.ne.s32.totalorder %s159, %s162
    %p168 = scmp.eq.s32.totalorder %s13, 0
    %p169 = por %p167, %p168
    %p170 = scmp.ne.s32.totalorder %s159, %s162
    %p171 = scmp.eq.s32.totalorder %s18, 1
    %p172 = por %p170, %p171
    %p173 = scmp.ne.s32.totalorder %s162, %s163
    %p174 = scmp.eq.s32.totalorder %s18, 0
    %p175 = por %p173, %p174
    %p176 = scmp.ne.s32.totalorder %s162, %s163
    %p177 = scmp.eq.s32.totalorder %s19, 1
    %p178 = por %p176, %p177
    %p180 = scmp.ne.s32.totalorder %s163, %s179
    %p181 = scmp.eq.s32.totalorder %s19, 0
    %p182 = por %p180, %p181
    %p183 = scmp.le.s32.totalorder 1, %s13
    %p184 = scmp.lt.s32.totalorder %s13, 3
    %p185 = pnand %p183, %p184
    %p186 = pneg %p185
    // Predicated region
    $region9: #{double_conv3d_forward.3} parent=5 // pred_check
      _
    $region10: #{double_conv3d_forward.3} parent=5 // pred_check_branch
      %188 = sbr.rel (%p185) target = $region12
    $region11: #{double_conv3d_forward.3} parent=5 // pred_region
      %s189 = ssub.s32 %s13, 1
      // Predicated region
      $region13: #{double_conv3d_forward.3} parent=11 // pred_check
        %p190 = pneg %p60
      $region14: #{double_conv3d_forward.3} parent=11 // pred_check_branch
        %192 = sbr.rel (%p190) target = $region16
      $region15: #{double_conv3d_forward.3} parent=11 // pred_region
        _
      $region16: #{double_conv3d_forward.3} parent=11 // pred_fallthru
        _
      // Predicated region
      $region17: #{double_conv3d_forward.3} parent=11 // pred_check
        %p193 = pneg %p81
      $region18: #{double_conv3d_forward.3} parent=11 // pred_check_branch
        %195 = sbr.rel (%p193) target = $region20
      $region19: #{double_conv3d_forward.3} parent=11 // pred_region
        _
      $region20: #{double_conv3d_forward.3} parent=11 // pred_fallthru
        _
      // Predicated region
      $region21: #{double_conv3d_forward.3} parent=11 // pred_check
        %p196 = pneg %p102
      $region22: #{double_conv3d_forward.3} parent=11 // pred_check_branch
        %198 = sbr.rel (%p196) target = $region24
      $region23: #{double_conv3d_forward.3} parent=11 // pred_region
        _
      $region24: #{double_conv3d_forward.3} parent=11 // pred_fallthru
        _
      // Predicated region
      $region25: #{double_conv3d_forward.3} parent=11 // pred_check
        %p199 = pneg %p123
      $region26: #{double_conv3d_forward.3} parent=11 // pred_check_branch
        %201 = sbr.rel (%p199) target = $region28
      $region27: #{double_conv3d_forward.3} parent=11 // pred_region
        _
      $region28: #{double_conv3d_forward.3} parent=11 // pred_fallthru
        _
    $region12: #{double_conv3d_forward.3} parent=5 // pred_fallthru
      _
    %p202 = scmp.lt.s32.totalorder %s13, 2
    // Predicated region
    $region29: #{double_conv3d_forward.3} parent=5 // pred_check
      %p203 = pneg %p202
    $region30: #{double_conv3d_forward.3} parent=5 // pred_check_branch
      %205 = sbr.rel (%p203) target = $region32
    $region31: #{double_conv3d_forward.3} parent=5 // pred_region
      // Predicated region
      $region33: #{double_conv3d_forward.3} parent=31 // pred_check
        %p206 = pneg %p33
      $region34: #{double_conv3d_forward.3} parent=31 // pred_check_branch
        %208 = sbr.rel (%p206) target = $region36
      $region35: #{double_conv3d_forward.3} parent=31 // pred_region
        %p209 = scmp.lt.s32.totalorder %s13, 1
        %s210 = scalar_select %p209, %s13, 1
        %s211 = smul.addr %s210, 8
        %s212 = smul.addr %s211, 4
        %s213 = scalar_lea.vmem %s0, %s212
      $region36: #{double_conv3d_forward.3} parent=31 // pred_fallthru
        _
    $region32: #{double_conv3d_forward.3} parent=5 // pred_fallthru
      _
    %p214 = scmp.le.s32.totalorder 1, %s13
    %p215 = scmp.lt.s32.totalorder %s13, 3
    %p216 = pnand %p214, %p215
    %p217 = pneg %p216
    // Predicated region
    $region37: #{double_conv3d_forward.3} parent=5 // pred_check
      _
    $region38: #{double_conv3d_forward.3} parent=5 // pred_check_branch
      %219 = sbr.rel (%p216) target = $region40
    $region39: #{double_conv3d_forward.3} parent=5 // pred_region
      %s220 = ssub.s32 %s13, 1
      %p221 = scmp.lt.s32.totalorder %s18, 1
      %s222 = scalar_select %p221, %s18, 1
      %s223 = smul.addr %s222, 8
      %s224 = smul.addr %s223, 4
      %s225 = scalar_lea.vmem %s0, %s224
      %p226 = pneg %p39
      %p227 = pneg %p36
      %p228 = pneg %p60
      %p229 = pneg %p57
      %p230 = pneg %p81
      %p231 = pneg %p78
      %p232 = pneg %p102
      %p233 = pneg %p99
      %p234 = pneg %p123
      %p235 = pneg %p120
      %p236 = pneg %p149
      %p237 = pneg %p146
      %p238 = scmp.lt.s32.totalorder %s18, 1
      %s239 = scalar_select %p238, %s18, 1
      %s240 = smul.addr %s239, 8
      %s241 = smul.addr %s240, 8
      %s242 = scalar_lea.vmem %s5, %s241
      %p243 = pneg %p175
      %p244 = pneg %p172
      %p245 = scmp.lt.s32.totalorder %s18, 1
      %s246 = scalar_select %p245, %s18, 1
      %s247 = smul.addr %s246, 8
      %s248 = scalar_lea.vmem %s6, %s247
      %p249 = scmp.lt.s32.totalorder %s18, 1
      %s250 = scalar_select %p249, %s18, 1
      %s251 = smul.addr %s250, 8
      %s252 = smul.addr %s251, 4
      %s253 = scalar_lea.vmem %s0, %s252
      %p254 = scmp.lt.s32.totalorder %s18, 1
      %s255 = scalar_select %p254, %s18, 1
      %s256 = smul.addr %s255, 8
      %s257 = smul.addr %s256, 8
      %s258 = scalar_lea.vmem %s5, %s257
      %p259 = scmp.lt.s32.totalorder %s18, 1
      %s260 = scalar_select %p259, %s18, 1
      %s261 = smul.addr %s260, 8
      %s262 = scalar_lea.vmem %s6, %s261
      %v263 = vld [vmem:[%s253] sm:$0xff]
      %v264 = vld [vmem:[%s253 + $0x8] sm:$0xff]
      %v265 = vld [vmem:[%s253 + $0x10] sm:$0xff]
      %v266 = vld [vmem:[%s253 + $0x18] sm:$0xff]
      %v267 = vld [vmem:[%s3] sm:$0xff]
      %268 = vst [vmem:[#allocation2] sm:$0xff] 0.0
      %269 = vst [vmem:[#allocation2 + $0x8] sm:$0xff] 0.0
      %270 = vst [vmem:[#allocation2 + $0x10] sm:$0xff] 0.0
      %271 = vst [vmem:[#allocation2 + $0x18] sm:$0xff] 0.0
      %vm272 = vcmask 1043456
      %vm273 = vcmask 572420
      %vm274 = vmor %vm273, %vm272
      %275 = vst.msk [vmem:[#allocation2 + $0x20] sm:$0xff] %vm274, 0.0
      %280 = vrot.lane.b32.xlu0 %v263, 111
      %v281 = vpop.permute.xlu0 %280
      %282 = vrot.lane.b32.xlu0 %v264, 111
      %v283 = vpop.permute.xlu0 %282
      %284 = vrot.lane.b32.xlu0 %v265, 111
      %v285 = vpop.permute.xlu0 %284
      %286 = vrot.lane.b32.xlu0 %v266, 111
      %v287 = vpop.permute.xlu0 %286
      %v288 = vrot.slane %v281, 4
      %v289 = vrot.slane %v283, 4
      %v290 = vrot.slane %v285, 4
      %v291 = vrot.slane %v287, 4
      %vm292 = vcmask 908288
      %v293 = vsel %vm292, %v288, %v281
      %v294 = vsel %vm272, %v288, %v289
      %v295 = vsel %vm292, %v294, %v283
      %v296 = vsel %vm272, %v289, %v290
      %v297 = vsel %vm292, %v296, %v285
      %v298 = vsel %vm272, %v290, %v291
      %v299 = vsel %vm292, %v298, %v287
      %vm305 = vcmask 1044344
      %vm306 = vcmask 1047556
      %vm307 = vmor %vm306, %vm305
      %308 = vst.msk [vmem:[#allocation2] sm:$0xff] %vm307, %v293
      %309 = vst [vmem:[#allocation2 + $0x8] sm:$0xff] %v295
      %310 = vst [vmem:[#allocation2 + $0x10] sm:$0xff] %v297
      %311 = vst [vmem:[#allocation2 + $0x18] sm:$0xff] %v299
      %vm312 = vcmask 707584
      %313 = vst.msk [vmem:[#allocation2 + $0x20] sm:$0xf] %vm312, %v291
      %v314 = vld [vmem:[#allocation2] sm:$0xff]
      %v315 = vld [vmem:[#allocation2 + $0x8] sm:$0xff]
      %v316 = vld [vmem:[#allocation2 + $0x10] sm:$0xff]
      %v317 = vld [vmem:[#allocation2 + $0x18] sm:$0xff]
      %v322 = vcombine.high %v314, %v314
      %v323 = vcombine.high %v315, %v315
      %v324 = vcombine.high %v316, %v316
      %v325 = vcombine.high %v317, %v317
      %330 = vst [vmem:[#allocation3] sm:$0xf] %v314
      %331 = vst [vmem:[#allocation3 + $0x8] sm:$0xf] %v322
      %332 = vst [vmem:[#allocation3 + $0x10] sm:$0xf] %v315
      %333 = vst [vmem:[#allocation3 + $0x18] sm:$0xf] %v323
      %334 = vst [vmem:[#allocation3 + $0x20] sm:$0xf] %v316
      %335 = vst [vmem:[#allocation3 + $0x28] sm:$0xf] %v324
      %336 = vst [vmem:[#allocation3 + $0x30] sm:$0xf] %v317
      %vm337 = vcmask 846848
      %338 = vst.msk [vmem:[#allocation3 + $0x38] sm:$0xf] %vm337, %v325
      %v339 = vld [vmem:[#allocation2] sm:$0xff]
      %v340 = vld [vmem:[#allocation2 + $0x8] sm:$0xff]
      %v341 = vld [vmem:[#allocation2 + $0x10] sm:$0xff]
      %v342 = vld [vmem:[#allocation2 + $0x18] sm:$0xff]
      %v347 = vcombine.low %v339, %v339
      %v348 = vcombine.low %v340, %v340
      %v349 = vcombine.low %v341, %v341
      %v350 = vcombine.low %v342, %v342
      %351 = vrot.lane.b32.xlu0 %v347, 127
      %v352 = vpop.permute.xlu0 %351
      %353 = vrot.lane.b32.xlu0 %v339, 127
      %v354 = vpop.permute.xlu0 %353
      %355 = vrot.lane.b32.xlu0 %v348, 127
      %v356 = vpop.permute.xlu0 %355
      %357 = vrot.lane.b32.xlu0 %v340, 127
      %v358 = vpop.permute.xlu0 %357
      %359 = vrot.lane.b32.xlu0 %v349, 127
      %v360 = vpop.permute.xlu0 %359
      %361 = vrot.lane.b32.xlu0 %v341, 127
      %v362 = vpop.permute.xlu0 %361
      %363 = vrot.lane.b32.xlu0 %v350, 127
      %v364 = vpop.permute.xlu0 %363
      %365 = vrot.lane.b32.xlu0 %v342, 127
      %v366 = vpop.permute.xlu0 %365
      %vm367 = vcmask 1039360
      %v368 = vsel %vm367, %v352, %v354
      %v369 = vsel %vm367, %v354, %v356
      %v370 = vsel %vm367, %v356, %v358
      %v371 = vsel %vm367, %v358, %v360
      %v372 = vsel %vm367, %v360, %v362
      %v373 = vsel %vm367, %v362, %v364
      %v374 = vsel %vm367, %v364, %v366
      %383 = vst [vmem:[#allocation3] sm:$0xf0] %v368
      %384 = vst [vmem:[#allocation3 + $0x8] sm:$0xf0] %v369
      %385 = vst [vmem:[#allocation3 + $0x10] sm:$0xf0] %v370
      %386 = vst [vmem:[#allocation3 + $0x18] sm:$0xf0] %v371
      %387 = vst [vmem:[#allocation3 + $0x20] sm:$0xf0] %v372
      %388 = vst [vmem:[#allocation3 + $0x28] sm:$0xf0] %v373
      %389 = vst [vmem:[#allocation3 + $0x30] sm:$0xf0] %v374
      %vm390 = vcmask 850948
      %391 = vst.msk [vmem:[#allocation3 + $0x38] sm:$0xf0] %vm390, %v366
      %v392 = vld [vmem:[#allocation2] sm:$0xff]
      %v393 = vld [vmem:[#allocation2 + $0x8] sm:$0xff]
      %v394 = vld [vmem:[#allocation2 + $0x10] sm:$0xff]
      %v395 = vld [vmem:[#allocation2 + $0x18] sm:$0xff]
      %v400 = vcombine.high %v392, %v392
      %v401 = vcombine.high %v393, %v393
      %v402 = vcombine.high %v394, %v394
      %v403 = vcombine.high %v395, %v395
      %404 = vrot.lane.b32.xlu0 %v392, 126
      %v405 = vpop.permute.xlu0 %404
      %406 = vrot.lane.b32.xlu0 %v400, 126
      %v407 = vpop.permute.xlu0 %406
      %408 = vrot.lane.b32.xlu0 %v393, 126
      %v409 = vpop.permute.xlu0 %408
      %410 = vrot.lane.b32.xlu0 %v401, 126
      %v411 = vpop.permute.xlu0 %410
      %412 = vrot.lane.b32.xlu0 %v394, 126
      %v413 = vpop.permute.xlu0 %412
      %414 = vrot.lane.b32.xlu0 %v402, 126
      %v415 = vpop.permute.xlu0 %414
      %416 = vrot.lane.b32.xlu0 %v395, 126
      %v417 = vpop.permute.xlu0 %416
      %418 = vrot.lane.b32.xlu0 %v403, 126
      %v419 = vpop.permute.xlu0 %418
      %vm420 = vcmask 1031168
      %v421 = vsel %vm420, %v405, %v407
      %v422 = vsel %vm420, %v407, %v409
      %v423 = vsel %vm420, %v409, %v411
      %v424 = vsel %vm420, %v411, %v413
      %v425 = vsel %vm420, %v413, %v415
      %v426 = vsel %vm420, %v415, %v417
      %v427 = vsel %vm420, %v417, %v419
      %436 = vst [vmem:[#allocation3 + $0x40] sm:$0xf] %v421
      %437 = vst [vmem:[#allocation3 + $0x48] sm:$0xf] %v422
      %438 = vst [vmem:[#allocation3 + $0x50] sm:$0xf] %v423
      %439 = vst [vmem:[#allocation3 + $0x58] sm:$0xf] %v424
      %440 = vst [vmem:[#allocation3 + $0x60] sm:$0xf] %v425
      %441 = vst [vmem:[#allocation3 + $0x68] sm:$0xf] %v426
      %442 = vst [vmem:[#allocation3 + $0x70] sm:$0xf] %v427
      %443 = vst.msk [vmem:[#allocation3 + $0x78] sm:$0xf] %vm337, %v419
      %v444 = vld [vmem:[#allocation2] sm:$0xff]
      %v445 = vld [vmem:[#allocation2 + $0x8] sm:$0xff]
      %v446 = vld [vmem:[#allocation2 + $0x10] sm:$0xff]
      %v447 = vld [vmem:[#allocation2 + $0x18] sm:$0xff]
      %v452 = vcombine.low %v444, %v444
      %v453 = vcombine.low %v445, %v445
      %v454 = vcombine.low %v446, %v446
      %v455 = vcombine.low %v447, %v447
      %456 = vrot.lane.b32.xlu0 %v452, 118
      %v457 = vpop.permute.xlu0 %456
      %458 = vrot.lane.b32.xlu0 %v444, 118
      %v459 = vpop.permute.xlu0 %458
      %460 = vrot.lane.b32.xlu0 %v453, 118
      %v461 = vpop.permute.xlu0 %460
      %462 = vrot.lane.b32.xlu0 %v445, 118
      %v463 = vpop.permute.xlu0 %462
      %464 = vrot.lane.b32.xlu0 %v454, 118
      %v465 = vpop.permute.xlu0 %464
      %466 = vrot.lane.b32.xlu0 %v446, 118
      %v467 = vpop.permute.xlu0 %466
      %468 = vrot.lane.b32.xlu0 %v455, 118
      %v469 = vpop.permute.xlu0 %468
      %470 = vrot.lane.b32.xlu0 %v447, 118
      %v471 = vpop.permute.xlu0 %470
      %vm472 = vcmask 965632
      %v473 = vsel %vm472, %v457, %v459
      %v474 = vsel %vm472, %v459, %v461
      %v475 = vsel %vm472, %v461, %v463
      %v476 = vsel %vm472, %v463, %v465
      %v477 = vsel %vm472, %v465, %v467
      %v478 = vsel %vm472, %v467, %v469
      %v479 = vsel %vm472, %v469, %v471
      %488 = vst [vmem:[#allocation3 + $0x40] sm:$0xf0] %v473
      %489 = vst [vmem:[#allocation3 + $0x48] sm:$0xf0] %v474
      %490 = vst [vmem:[#allocation3 + $0x50] sm:$0xf0] %v475
      %491 = vst [vmem:[#allocation3 + $0x58] sm:$0xf0] %v476
      %492 = vst [vmem:[#allocation3 + $0x60] sm:$0xf0] %v477
      %493 = vst [vmem:[#allocation3 + $0x68] sm:$0xf0] %v478
      %494 = vst [vmem:[#allocation3 + $0x70] sm:$0xf0] %v479
      %495 = vst.msk [vmem:[#allocation3 + $0x78] sm:$0xf0] %vm390, %v471
      %v496 = vld [vmem:[#allocation2] sm:$0xff]
      %v497 = vld [vmem:[#allocation2 + $0x8] sm:$0xff]
      %v498 = vld [vmem:[#allocation2 + $0x10] sm:$0xff]
      %v499 = vld [vmem:[#allocation2 + $0x18] sm:$0xff]
      %v504 = vcombine.high %v496, %v496
      %v505 = vcombine.high %v497, %v497
      %v506 = vcombine.high %v498, %v498
      %v507 = vcombine.high %v499, %v499
      %508 = vrot.lane.b32.xlu0 %v496, 117
      %v509 = vpop.permute.xlu0 %508
      %510 = vrot.lane.b32.xlu0 %v504, 117
      %v511 = vpop.permute.xlu0 %510
      %512 = vrot.lane.b32.xlu0 %v497, 117
      %v513 = vpop.permute.xlu0 %512
      %514 = vrot.lane.b32.xlu0 %v505, 117
      %v515 = vpop.permute.xlu0 %514
      %516 = vrot.lane.b32.xlu0 %v498, 117
      %v517 = vpop.permute.xlu0 %516
      %518 = vrot.lane.b32.xlu0 %v506, 117
      %v519 = vpop.permute.xlu0 %518
      %520 = vrot.lane.b32.xlu0 %v499, 117
      %v521 = vpop.permute.xlu0 %520
      %522 = vrot.lane.b32.xlu0 %v507, 117
      %v523 = vpop.permute.xlu0 %522
      %vm524 = vcmask 957440
      %v525 = vsel %vm524, %v509, %v511
      %v526 = vsel %vm524, %v511, %v513
      %v527 = vsel %vm524, %v513, %v515
      %v528 = vsel %vm524, %v515, %v517
      %v529 = vsel %vm524, %v517, %v519
      %v530 = vsel %vm524, %v519, %v521
      %v531 = vsel %vm524, %v521, %v523
      %540 = vst [vmem:[#allocation3 + $0x80] sm:$0xf] %v525
      %541 = vst [vmem:[#allocation3 + $0x88] sm:$0xf] %v526
      %542 = vst [vmem:[#allocation3 + $0x90] sm:$0xf] %v527
      %543 = vst [vmem:[#allocation3 + $0x98] sm:$0xf] %v528
      %544 = vst [vmem:[#allocation3 + $0xa0] sm:$0xf] %v529
      %545 = vst [vmem:[#allocation3 + $0xa8] sm:$0xf] %v530
      %546 = vst [vmem:[#allocation3 + $0xb0] sm:$0xf] %v531
      %547 = vst.msk [vmem:[#allocation3 + $0xb8] sm:$0xf] %vm337, %v523
      %v548 = vld [vmem:[#allocation2] sm:$0xff]
      %v549 = vld [vmem:[#allocation2 + $0x8] sm:$0xff]
      %v550 = vld [vmem:[#allocation2 + $0x10] sm:$0xff]
      %v551 = vld [vmem:[#allocation2 + $0x18] sm:$0xff]
      %v556 = vcombine.low %v548, %v548
      %v557 = vcombine.low %v549, %v549
      %v558 = vcombine.low %v550, %v550
      %v559 = vcombine.low %v551, %v551
      %560 = vrot.lane.b32.xlu0 %v556, 116
      %v561 = vpop.permute.xlu0 %560
      %562 = vrot.lane.b32.xlu0 %v548, 116
      %v563 = vpop.permute.xlu0 %562
      %564 = vrot.lane.b32.xlu0 %v557, 116
      %v565 = vpop.permute.xlu0 %564
      %566 = vrot.lane.b32.xlu0 %v549, 116
      %v567 = vpop.permute.xlu0 %566
      %568 = vrot.lane.b32.xlu0 %v558, 116
      %v569 = vpop.permute.xlu0 %568
      %570 = vrot.lane.b32.xlu0 %v550, 116
      %v571 = vpop.permute.xlu0 %570
      %572 = vrot.lane.b32.xlu0 %v559, 116
      %v573 = vpop.permute.xlu0 %572
      %574 = vrot.lane.b32.xlu0 %v551, 116
      %v575 = vpop.permute.xlu0 %574
      %vm576 = vcmask 949248
      %v577 = vsel %vm576, %v561, %v563
      %v578 = vsel %vm576, %v563, %v565
      %v579 = vsel %vm576, %v565, %v567
      %v580 = vsel %vm576, %v567, %v569
      %v581 = vsel %vm576, %v569, %v571
      %v582 = vsel %vm576, %v571, %v573
      %v583 = vsel %vm576, %v573, %v575
      %592 = vst [vmem:[#allocation3 + $0x80] sm:$0xf0] %v577
      %593 = vst [vmem:[#allocation3 + $0x88] sm:$0xf0] %v578
      %594 = vst [vmem:[#allocation3 + $0x90] sm:$0xf0] %v579
      %595 = vst [vmem:[#allocation3 + $0x98] sm:$0xf0] %v580
      %596 = vst [vmem:[#allocation3 + $0xa0] sm:$0xf0] %v581
      %597 = vst [vmem:[#allocation3 + $0xa8] sm:$0xf0] %v582
      %598 = vst [vmem:[#allocation3 + $0xb0] sm:$0xf0] %v583
      %599 = vst.msk [vmem:[#allocation3 + $0xb8] sm:$0xf0] %vm390, %v575
      %v600 = vld [vmem:[#allocation2] sm:$0xff]
      %v601 = vld [vmem:[#allocation2 + $0x8] sm:$0xff]
      %v602 = vld [vmem:[#allocation2 + $0x10] sm:$0xff]
      %v603 = vld [vmem:[#allocation2 + $0x18] sm:$0xff]
      %v608 = vcombine.high %v600, %v600
      %v609 = vcombine.high %v601, %v601
      %v610 = vcombine.high %v602, %v602
      %v611 = vcombine.high %v603, %v603
      %612 = vrot.lane.b32.xlu0 %v600, 108
      %v613 = vpop.permute.xlu0 %612
      %614 = vrot.lane.b32.xlu0 %v608, 108
      %v615 = vpop.permute.xlu0 %614
      %616 = vrot.lane.b32.xlu0 %v601, 108
      %v617 = vpop.permute.xlu0 %616
      %618 = vrot.lane.b32.xlu0 %v609, 108
      %v619 = vpop.permute.xlu0 %618
      %620 = vrot.lane.b32.xlu0 %v602, 108
      %v621 = vpop.permute.xlu0 %620
      %622 = vrot.lane.b32.xlu0 %v610, 108
      %v623 = vpop.permute.xlu0 %622
      %624 = vrot.lane.b32.xlu0 %v603, 108
      %v625 = vpop.permute.xlu0 %624
      %626 = vrot.lane.b32.xlu0 %v611, 108
      %v627 = vpop.permute.xlu0 %626
      %vm628 = vcmask 883712
      %v629 = vsel %vm628, %v613, %v615
      %v630 = vsel %vm628, %v615, %v617
      %v631 = vsel %vm628, %v617, %v619
      %v632 = vsel %vm628, %v619, %v621
      %v633 = vsel %vm628, %v621, %v623
      %v634 = vsel %vm628, %v623, %v625
      %v635 = vsel %vm628, %v625, %v627
      %644 = vst [vmem:[#allocation3 + $0xc0] sm:$0xf] %v629
      %645 = vst [vmem:[#allocation3 + $0xc8] sm:$0xf] %v630
      %646 = vst [vmem:[#allocation3 + $0xd0] sm:$0xf] %v631
      %647 = vst [vmem:[#allocation3 + $0xd8] sm:$0xf] %v632
      %648 = vst [vmem:[#allocation3 + $0xe0] sm:$0xf] %v633
      %649 = vst [vmem:[#allocation3 + $0xe8] sm:$0xf] %v634
      %650 = vst [vmem:[#allocation3 + $0xf0] sm:$0xf] %v635
      %651 = vst.msk [vmem:[#allocation3 + $0xf8] sm:$0xf] %vm337, %v627
      %v652 = vld [vmem:[#allocation2] sm:$0xff]
      %v653 = vld [vmem:[#allocation2 + $0x8] sm:$0xff]
      %v654 = vld [vmem:[#allocation2 + $0x10] sm:$0xff]
      %v655 = vld [vmem:[#allocation2 + $0x18] sm:$0xff]
      %v660 = vcombine.low %v652, %v652
      %v661 = vcombine.low %v653, %v653
      %v662 = vcombine.low %v654, %v654
      %v663 = vcombine.low %v655, %v655
      %664 = vrot.lane.b32.xlu0 %v660, 107
      %v665 = vpop.permute.xlu0 %664
      %666 = vrot.lane.b32.xlu0 %v652, 107
      %v667 = vpop.permute.xlu0 %666
      %668 = vrot.lane.b32.xlu0 %v661, 107
      %v669 = vpop.permute.xlu0 %668
      %670 = vrot.lane.b32.xlu0 %v653, 107
      %v671 = vpop.permute.xlu0 %670
      %672 = vrot.lane.b32.xlu0 %v662, 107
      %v673 = vpop.permute.xlu0 %672
      %674 = vrot.lane.b32.xlu0 %v654, 107
      %v675 = vpop.permute.xlu0 %674
      %676 = vrot.lane.b32.xlu0 %v663, 107
      %v677 = vpop.permute.xlu0 %676
      %678 = vrot.lane.b32.xlu0 %v655, 107
      %v679 = vpop.permute.xlu0 %678
      %vm680 = vcmask 875520
      %v681 = vsel %vm680, %v665, %v667
      %v682 = vsel %vm680, %v667, %v669
      %v683 = vsel %vm680, %v669, %v671
      %v684 = vsel %vm680, %v671, %v673
      %v685 = vsel %vm680, %v673, %v675
      %v686 = vsel %vm680, %v675, %v677
      %v687 = vsel %vm680, %v677, %v679
      %696 = vst [vmem:[#allocation3 + $0xc0] sm:$0xf0] %v681
      %697 = vst [vmem:[#allocation3 + $0xc8] sm:$0xf0] %v682
      %698 = vst [vmem:[#allocation3 + $0xd0] sm:$0xf0] %v683
      %699 = vst [vmem:[#allocation3 + $0xd8] sm:$0xf0] %v684
      %700 = vst [vmem:[#allocation3 + $0xe0] sm:$0xf0] %v685
      %701 = vst [vmem:[#allocation3 + $0xe8] sm:$0xf0] %v686
      %702 = vst [vmem:[#allocation3 + $0xf0] sm:$0xf0] %v687
      %703 = vst.msk [vmem:[#allocation3 + $0xf8] sm:$0xf0] %vm390, %v679
      %v704 = vld [vmem:[#allocation2] sm:$0xff]
      %v705 = vld [vmem:[#allocation2 + $0x8] sm:$0xff]
      %v706 = vld [vmem:[#allocation2 + $0x10] sm:$0xff]
      %v707 = vld [vmem:[#allocation2 + $0x18] sm:$0xff]
      %v712 = vcombine.high %v704, %v704
      %v713 = vcombine.high %v705, %v705
      %v714 = vcombine.high %v706, %v706
      %v715 = vcombine.high %v707, %v707
      %716 = vrot.lane.b32.xlu0 %v704, 106
      %v717 = vpop.permute.xlu0 %716
      %718 = vrot.lane.b32.xlu0 %v712, 106
      %v719 = vpop.permute.xlu0 %718
      %720 = vrot.lane.b32.xlu0 %v705, 106
      %v721 = vpop.permute.xlu0 %720
      %722 = vrot.lane.b32.xlu0 %v713, 106
      %v723 = vpop.permute.xlu0 %722
      %724 = vrot.lane.b32.xlu0 %v706, 106
      %v725 = vpop.permute.xlu0 %724
      %726 = vrot.lane.b32.xlu0 %v714, 106
      %v727 = vpop.permute.xlu0 %726
      %728 = vrot.lane.b32.xlu0 %v707, 106
      %v729 = vpop.permute.xlu0 %728
      %730 = vrot.lane.b32.xlu0 %v715, 106
      %v731 = vpop.permute.xlu0 %730
      %vm732 = vcmask 867328
      %v733 = vsel %vm732, %v717, %v719
      %v734 = vsel %vm732, %v719, %v721
      %v735 = vsel %vm732, %v721, %v723
      %v736 = vsel %vm732, %v723, %v725
      %v737 = vsel %vm732, %v725, %v727
      %v738 = vsel %vm732, %v727, %v729
      %v739 = vsel %vm732, %v729, %v731
      %748 = vst [vmem:[#allocation3 + $0x100] sm:$0xf] %v733
      %749 = vst [vmem:[#allocation3 + $0x108] sm:$0xf] %v734
      %750 = vst [vmem:[#allocation3 + $0x110] sm:$0xf] %v735
      %751 = vst [vmem:[#allocation3 + $0x118] sm:$0xf] %v736
      %752 = vst [vmem:[#allocation3 + $0x120] sm:$0xf] %v737
      %753 = vst [vmem:[#allocation3 + $0x128] sm:$0xf] %v738
      %754 = vst [vmem:[#allocation3 + $0x130] sm:$0xf] %v739
      %755 = vst.msk [vmem:[#allocation3 + $0x138] sm:$0xf] %vm337, %v731
      %v756 = vld [vmem:[#allocation2] sm:$0xff]
      %v757 = vld [vmem:[#allocation2 + $0x8] sm:$0xff]
      %v758 = vld [vmem:[#allocation2 + $0x10] sm:$0xff]
      %v759 = vld [vmem:[#allocation2 + $0x18] sm:$0xff]
      %v760 = vld [vmem:[#allocation2 + $0x20] sm:$0xf]
      %v766 = vcombine.low %v756, %v756
      %v767 = vcombine.low %v757, %v757
      %v768 = vcombine.low %v758, %v758
      %v769 = vcombine.low %v759, %v759
      %v770 = vcombine.low %v760, %v760
      %771 = vrot.lane.b32.xlu0 %v766, 28
      %v772 = vpop.permute.xlu0 %771
      %773 = vrot.lane.b32.xlu0 %v756, 28
      %v774 = vpop.permute.xlu0 %773
      %775 = vrot.lane.b32.xlu0 %v767, 28
      %v776 = vpop.permute.xlu0 %775
      %777 = vrot.lane.b32.xlu0 %v757, 28
      %v778 = vpop.permute.xlu0 %777
      %779 = vrot.lane.b32.xlu0 %v768, 28
      %v780 = vpop.permute.xlu0 %779
      %781 = vrot.lane.b32.xlu0 %v758, 28
      %v782 = vpop.permute.xlu0 %781
      %783 = vrot.lane.b32.xlu0 %v769, 28
      %v784 = vpop.permute.xlu0 %783
      %785 = vrot.lane.b32.xlu0 %v759, 28
      %v786 = vpop.permute.xlu0 %785
      %787 = vrot.lane.b32.xlu0 %v770, 28
      %v788 = vpop.permute.xlu0 %787
      %vm789 = vcmask 228352
      %v790 = vsel %vm789, %v772, %v774
      %v791 = vsel %vm789, %v774, %v776
      %v792 = vsel %vm789, %v776, %v778
      %v793 = vsel %vm789, %v778, %v780
      %v794 = vsel %vm789, %v780, %v782
      %v795 = vsel %vm789, %v782, %v784
      %v796 = vsel %vm789, %v784, %v786
      %v797 = vsel %vm789, %v786, %v788
      %806 = vst [vmem:[#allocation3 + $0x100] sm:$0xf0] %v790
      %807 = vst [vmem:[#allocation3 + $0x108] sm:$0xf0] %v791
      %808 = vst [vmem:[#allocation3 + $0x110] sm:$0xf0] %v792
      %809 = vst [vmem:[#allocation3 + $0x118] sm:$0xf0] %v793
      %810 = vst [vmem:[#allocation3 + $0x120] sm:$0xf0] %v794
      %811 = vst [vmem:[#allocation3 + $0x128] sm:$0xf0] %v795
      %812 = vst [vmem:[#allocation3 + $0x130] sm:$0xf0] %v796
      %813 = vst.msk [vmem:[#allocation3 + $0x138] sm:$0xf0] %vm390, %v797
      %v814 = vld [vmem:[#allocation2] sm:$0xff]
      %v815 = vld [vmem:[#allocation2 + $0x8] sm:$0xff]
      %v816 = vld [vmem:[#allocation2 + $0x10] sm:$0xff]
      %v817 = vld [vmem:[#allocation2 + $0x18] sm:$0xff]
      %v818 = vld [vmem:[#allocation2 + $0x20] sm:$0xf]
      %v824 = vcombine.high %v814, %v814
      %v825 = vcombine.high %v815, %v815
      %v826 = vcombine.high %v816, %v816
      %v827 = vcombine.high %v817, %v817
      %828 = vrot.lane.b32.xlu0 %v814, 27
      %v829 = vpop.permute.xlu0 %828
      %830 = vrot.lane.b32.xlu0 %v824, 27
      %v831 = vpop.permute.xlu0 %830
      %832 = vrot.lane.b32.xlu0 %v815, 27
      %v833 = vpop.permute.xlu0 %832
      %834 = vrot.lane.b32.xlu0 %v825, 27
      %v835 = vpop.permute.xlu0 %834
      %836 = vrot.lane.b32.xlu0 %v816, 27
      %v837 = vpop.permute.xlu0 %836
      %838 = vrot.lane.b32.xlu0 %v826, 27
      %v839 = vpop.permute.xlu0 %838
      %840 = vrot.lane.b32.xlu0 %v817, 27
      %v841 = vpop.permute.xlu0 %840
      %842 = vrot.lane.b32.xlu0 %v827, 27
      %v843 = vpop.permute.xlu0 %842
      %844 = vrot.lane.b32.xlu0 %v818, 27
      %v845 = vpop.permute.xlu0 %844
      %vm846 = vcmask 220160
      %v847 = vsel %vm846, %v829, %v831
      %v848 = vsel %vm846, %v831, %v833
      %v849 = vsel %vm846, %v833, %v835
      %v850 = vsel %vm846, %v835, %v837
      %v851 = vsel %vm846, %v837, %v839
      %v852 = vsel %vm846, %v839, %v841
      %v853 = vsel %vm846, %v841, %v843
      %v854 = vsel %vm846, %v843, %v845
      %863 = vst [vmem:[#allocation3 + $0x140] sm:$0xf] %v847
      %864 = vst [vmem:[#allocation3 + $0x148] sm:$0xf] %v848
      %865 = vst [vmem:[#allocation3 + $0x150] sm:$0xf] %v849
      %866 = vst [vmem:[#allocation3 + $0x158] sm:$0xf] %v850
      %867 = vst [vmem:[#allocation3 + $0x160] sm:$0xf] %v851
      %868 = vst [vmem:[#allocation3 + $0x168] sm:$0xf] %v852
      %869 = vst [vmem:[#allocation3 + $0x170] sm:$0xf] %v853
      %870 = vst.msk [vmem:[#allocation3 + $0x178] sm:$0xf] %vm337, %v854
      %v871 = vld [vmem:[#allocation2] sm:$0xff]
      %v872 = vld [vmem:[#allocation2 + $0x8] sm:$0xff]
      %v873 = vld [vmem:[#allocation2 + $0x10] sm:$0xff]
      %v874 = vld [vmem:[#allocation2 + $0x18] sm:$0xff]
      %v875 = vld [vmem:[#allocation2 + $0x20] sm:$0xf]
      %v881 = vcombine.low %v871, %v871
      %v882 = vcombine.low %v872, %v872
      %v883 = vcombine.low %v873, %v873
      %v884 = vcombine.low %v874, %v874
      %v885 = vcombine.low %v875, %v875
      %886 = vrot.lane.b32.xlu0 %v881, 26
      %v887 = vpop.permute.xlu0 %886
      %888 = vrot.lane.b32.xlu0 %v871, 26
      %v889 = vpop.permute.xlu0 %888
      %890 = vrot.lane.b32.xlu0 %v882, 26
      %v891 = vpop.permute.xlu0 %890
      %892 = vrot.lane.b32.xlu0 %v872, 26
      %v893 = vpop.permute.xlu0 %892
      %894 = vrot.lane.b32.xlu0 %v883, 26
      %v895 = vpop.permute.xlu0 %894
      %896 = vrot.lane.b32.xlu0 %v873, 26
      %v897 = vpop.permute.xlu0 %896
      %898 = vrot.lane.b32.xlu0 %v884, 26
      %v899 = vpop.permute.xlu0 %898
      %900 = vrot.lane.b32.xlu0 %v874, 26
      %v901 = vpop.permute.xlu0 %900
      %902 = vrot.lane.b32.xlu0 %v885, 26
      %v903 = vpop.permute.xlu0 %902
      %vm904 = vcmask 211968
      %v905 = vsel %vm904, %v887, %v889
      %v906 = vsel %vm904, %v889, %v891
      %v907 = vsel %vm904, %v891, %v893
      %v908 = vsel %vm904, %v893, %v895
      %v909 = vsel %vm904, %v895, %v897
      %v910 = vsel %vm904, %v897, %v899
      %v911 = vsel %vm904, %v899, %v901
      %v912 = vsel %vm904, %v901, %v903
      %921 = vst [vmem:[#allocation3 + $0x140] sm:$0xf0] %v905
      %922 = vst [vmem:[#allocation3 + $0x148] sm:$0xf0] %v906
      %923 = vst [vmem:[#allocation3 + $0x150] sm:$0xf0] %v907
      %924 = vst [vmem:[#allocation3 + $0x158] sm:$0xf0] %v908
      %925 = vst [vmem:[#allocation3 + $0x160] sm:$0xf0] %v909
      %926 = vst [vmem:[#allocation3 + $0x168] sm:$0xf0] %v910
      %927 = vst [vmem:[#allocation3 + $0x170] sm:$0xf0] %v911
      %928 = vst.msk [vmem:[#allocation3 + $0x178] sm:$0xf0] %vm390, %v912
      %v929 = vld [vmem:[#allocation2] sm:$0xff]
      %v930 = vld [vmem:[#allocation2 + $0x8] sm:$0xff]
      %v931 = vld [vmem:[#allocation2 + $0x10] sm:$0xff]
      %v932 = vld [vmem:[#allocation2 + $0x18] sm:$0xff]
      %v933 = vld [vmem:[#allocation2 + $0x20] sm:$0xf]
      %v939 = vcombine.high %v929, %v929
      %v940 = vcombine.high %v930, %v930
      %v941 = vcombine.high %v931, %v931
      %v942 = vcombine.high %v932, %v932
      %943 = vrot.lane.b32.xlu0 %v929, 18
      %v944 = vpop.permute.xlu0 %943
      %945 = vrot.lane.b32.xlu0 %v939, 18
      %v946 = vpop.permute.xlu0 %945
      %947 = vrot.lane.b32.xlu0 %v930, 18
      %v948 = vpop.permute.xlu0 %947
      %949 = vrot.lane.b32.xlu0 %v940, 18
      %v950 = vpop.permute.xlu0 %949
      %951 = vrot.lane.b32.xlu0 %v931, 18
      %v952 = vpop.permute.xlu0 %951
      %953 = vrot.lane.b32.xlu0 %v941, 18
      %v954 = vpop.permute.xlu0 %953
      %955 = vrot.lane.b32.xlu0 %v932, 18
      %v956 = vpop.permute.xlu0 %955
      %957 = vrot.lane.b32.xlu0 %v942, 18
      %v958 = vpop.permute.xlu0 %957
      %959 = vrot.lane.b32.xlu0 %v933, 18
      %v960 = vpop.permute.xlu0 %959
      %vm961 = vcmask 146432
      %v962 = vsel %vm961, %v944, %v946
      %v963 = vsel %vm961, %v946, %v948
      %v964 = vsel %vm961, %v948, %v950
      %v965 = vsel %vm961, %v950, %v952
      %v966 = vsel %vm961, %v952, %v954
      %v967 = vsel %vm961, %v954, %v956
      %v968 = vsel %vm961, %v956, %v958
      %v969 = vsel %vm961, %v958, %v960
      %978 = vst [vmem:[#allocation3 + $0x180] sm:$0xf] %v962
      %979 = vst [vmem:[#allocation3 + $0x188] sm:$0xf] %v963
      %980 = vst [vmem:[#allocation3 + $0x190] sm:$0xf] %v964
      %981 = vst [vmem:[#allocation3 + $0x198] sm:$0xf] %v965
      %982 = vst [vmem:[#allocation3 + $0x1a0] sm:$0xf] %v966
      %983 = vst [vmem:[#allocation3 + $0x1a8] sm:$0xf] %v967
      %984 = vst [vmem:[#allocation3 + $0x1b0] sm:$0xf] %v968
      %985 = vst.msk [vmem:[#allocation3 + $0x1b8] sm:$0xf] %vm337, %v969
      %v986 = vld [vmem:[#allocation2] sm:$0xff]
      %v987 = vld [vmem:[#allocation2 + $0x8] sm:$0xff]
      %v988 = vld [vmem:[#allocation2 + $0x10] sm:$0xff]
      %v989 = vld [vmem:[#allocation2 + $0x18] sm:$0xff]
      %v990 = vld [vmem:[#allocation2 + $0x20] sm:$0xf]
      %v996 = vcombine.low %v986, %v986
      %v997 = vcombine.low %v987, %v987
      %v998 = vcombine.low %v988, %v988
      %v999 = vcombine.low %v989, %v989
      %v1000 = vcombine.low %v990, %v990
      %1001 = vrot.lane.b32.xlu0 %v996, 17
      %v1002 = vpop.permute.xlu0 %1001
      %1003 = vrot.lane.b32.xlu0 %v986, 17
      %v1004 = vpop.permute.xlu0 %1003
      %1005 = vrot.lane.b32.xlu0 %v997, 17
      %v1006 = vpop.permute.xlu0 %1005
      %1007 = vrot.lane.b32.xlu0 %v987, 17
      %v1008 = vpop.permute.xlu0 %1007
      %1009 = vrot.lane.b32.xlu0 %v998, 17
      %v1010 = vpop.permute.xlu0 %1009
      %1011 = vrot.lane.b32.xlu0 %v988, 17
      %v1012 = vpop.permute.xlu0 %1011
      %1013 = vrot.lane.b32.xlu0 %v999, 17
      %v1014 = vpop.permute.xlu0 %1013
      %1015 = vrot.lane.b32.xlu0 %v989, 17
      %v1016 = vpop.permute.xlu0 %1015
      %1017 = vrot.lane.b32.xlu0 %v1000, 17
      %v1018 = vpop.permute.xlu0 %1017
      %vm1019 = vcmask 138240
      %v1020 = vsel %vm1019, %v1002, %v1004
      %v1021 = vsel %vm1019, %v1004, %v1006
      %v1022 = vsel %vm1019, %v1006, %v1008
      %v1023 = vsel %vm1019, %v1008, %v1010
      %v1024 = vsel %vm1019, %v1010, %v1012
      %v1025 = vsel %vm1019, %v1012, %v1014
      %v1026 = vsel %vm1019, %v1014, %v1016
      %v1027 = vsel %vm1019, %v1016, %v1018
      %1036 = vst [vmem:[#allocation3 + $0x180] sm:$0xf0] %v1020
      %1037 = vst [vmem:[#allocation3 + $0x188] sm:$0xf0] %v1021
      %1038 = vst [vmem:[#allocation3 + $0x190] sm:$0xf0] %v1022
      %1039 = vst [vmem:[#allocation3 + $0x198] sm:$0xf0] %v1023
      %1040 = vst [vmem:[#allocation3 + $0x1a0] sm:$0xf0] %v1024
      %1041 = vst [vmem:[#allocation3 + $0x1a8] sm:$0xf0] %v1025
      %1042 = vst [vmem:[#allocation3 + $0x1b0] sm:$0xf0] %v1026
      %1043 = vst.msk [vmem:[#allocation3 + $0x1b8] sm:$0xf0] %vm390, %v1027
      %v1044 = vld [vmem:[#allocation2] sm:$0xff]
      %v1045 = vld [vmem:[#allocation2 + $0x8] sm:$0xff]
      %v1046 = vld [vmem:[#allocation2 + $0x10] sm:$0xff]
      %v1047 = vld [vmem:[#allocation2 + $0x18] sm:$0xff]
      %v1048 = vld [vmem:[#allocation2 + $0x20] sm:$0xf]
      %v1054 = vcombine.high %v1044, %v1044
      %v1055 = vcombine.high %v1045, %v1045
      %v1056 = vcombine.high %v1046, %v1046
      %v1057 = vcombine.high %v1047, %v1047
      %1058 = vrot.lane.b32.xlu0 %v1044, 16
      %v1059 = vpop.permute.xlu0 %1058
      %1060 = vrot.lane.b32.xlu0 %v1054, 16
      %v1061 = vpop.permute.xlu0 %1060
      %1062 = vrot.lane.b32.xlu0 %v1045, 16
      %v1063 = vpop.permute.xlu0 %1062
      %1064 = vrot.lane.b32.xlu0 %v1055, 16
      %v1065 = vpop.permute.xlu0 %1064
      %1066 = vrot.lane.b32.xlu0 %v1046, 16
      %v1067 = vpop.permute.xlu0 %1066
      %1068 = vrot.lane.b32.xlu0 %v1056, 16
      %v1069 = vpop.permute.xlu0 %1068
      %1070 = vrot.lane.b32.xlu0 %v1047, 16
      %v1071 = vpop.permute.xlu0 %1070
      %1072 = vrot.lane.b32.xlu0 %v1057, 16
      %v1073 = vpop.permute.xlu0 %1072
      %1074 = vrot.lane.b32.xlu0 %v1048, 16
      %v1075 = vpop.permute.xlu0 %1074
      %vm1076 = vcmask 130048
      %v1077 = vsel %vm1076, %v1059, %v1061
      %v1078 = vsel %vm1076, %v1061, %v1063
      %v1079 = vsel %vm1076, %v1063, %v1065
      %v1080 = vsel %vm1076, %v1065, %v1067
      %v1081 = vsel %vm1076, %v1067, %v1069
      %v1082 = vsel %vm1076, %v1069, %v1071
      %v1083 = vsel %vm1076, %v1071, %v1073
      %v1084 = vsel %vm1076, %v1073, %v1075
      %1093 = vst [vmem:[#allocation3 + $0x1c0] sm:$0xf] %v1077
      %1094 = vst [vmem:[#allocation3 + $0x1c8] sm:$0xf] %v1078
      %1095 = vst [vmem:[#allocation3 + $0x1d0] sm:$0xf] %v1079
      %1096 = vst [vmem:[#allocation3 + $0x1d8] sm:$0xf] %v1080
      %1097 = vst [vmem:[#allocation3 + $0x1e0] sm:$0xf] %v1081
      %1098 = vst [vmem:[#allocation3 + $0x1e8] sm:$0xf] %v1082
      %1099 = vst [vmem:[#allocation3 + $0x1f0] sm:$0xf] %v1083
      %1100 = vst.msk [vmem:[#allocation3 + $0x1f8] sm:$0xf] %vm337, %v1084
      %v1101 = vld [vmem:[#allocation2] sm:$0xff]
      %v1102 = vld [vmem:[#allocation2 + $0x8] sm:$0xff]
      %v1103 = vld [vmem:[#allocation2 + $0x10] sm:$0xff]
      %v1104 = vld [vmem:[#allocation2 + $0x18] sm:$0xff]
      %v1105 = vld [vmem:[#allocation2 + $0x20] sm:$0xf]
      %v1111 = vcombine.low %v1101, %v1101
      %v1112 = vcombine.low %v1102, %v1102
      %v1113 = vcombine.low %v1103, %v1103
      %v1114 = vcombine.low %v1104, %v1104
      %v1115 = vcombine.low %v1105, %v1105
      %1116 = vrot.lane.b32.xlu0 %v1111, 8
      %v1117 = vpop.permute.xlu0 %1116
      %1118 = vrot.lane.b32.xlu0 %v1101, 8
      %v1119 = vpop.permute.xlu0 %1118
      %1120 = vrot.lane.b32.xlu0 %v1112, 8
      %v1121 = vpop.permute.xlu0 %1120
      %1122 = vrot.lane.b32.xlu0 %v1102, 8
      %v1123 = vpop.permute.xlu0 %1122
      %1124 = vrot.lane.b32.xlu0 %v1113, 8
      %v1125 = vpop.permute.xlu0 %1124
      %1126 = vrot.lane.b32.xlu0 %v1103, 8
      %v1127 = vpop.permute.xlu0 %1126
      %1128 = vrot.lane.b32.xlu0 %v1114, 8
      %v1129 = vpop.permute.xlu0 %1128
      %1130 = vrot.lane.b32.xlu0 %v1104, 8
      %v1131 = vpop.permute.xlu0 %1130
      %1132 = vrot.lane.b32.xlu0 %v1115, 8
      %v1133 = vpop.permute.xlu0 %1132
      %vm1134 = vcmask 64512
      %v1135 = vsel %vm1134, %v1117, %v1119
      %v1136 = vsel %vm1134, %v1119, %v1121
      %v1137 = vsel %vm1134, %v1121, %v1123
      %v1138 = vsel %vm1134, %v1123, %v1125
      %v1139 = vsel %vm1134, %v1125, %v1127
      %v1140 = vsel %vm1134, %v1127, %v1129
      %v1141 = vsel %vm1134, %v1129, %v1131
      %v1142 = vsel %vm1134, %v1131, %v1133
      %1151 = vst [vmem:[#allocation3 + $0x1c0] sm:$0xf0] %v1135
      %1152 = vst [vmem:[#allocation3 + $0x1c8] sm:$0xf0] %v1136
      %1153 = vst [vmem:[#allocation3 + $0x1d0] sm:$0xf0] %v1137
      %1154 = vst [vmem:[#allocation3 + $0x1d8] sm:$0xf0] %v1138
      %1155 = vst [vmem:[#allocation3 + $0x1e0] sm:$0xf0] %v1139
      %1156 = vst [vmem:[#allocation3 + $0x1e8] sm:$0xf0] %v1140
      %1157 = vst [vmem:[#allocation3 + $0x1f0] sm:$0xf0] %v1141
      %1158 = vst.msk [vmem:[#allocation3 + $0x1f8] sm:$0xf0] %vm390, %v1142
      %v1159 = vld [vmem:[#allocation2] sm:$0xff]
      %v1160 = vld [vmem:[#allocation2 + $0x8] sm:$0xff]
      %v1161 = vld [vmem:[#allocation2 + $0x10] sm:$0xff]
      %v1162 = vld [vmem:[#allocation2 + $0x18] sm:$0xff]
      %v1163 = vld [vmem:[#allocation2 + $0x20] sm:$0xf]
      %v1169 = vcombine.high %v1159, %v1159
      %v1170 = vcombine.high %v1160, %v1160
      %v1171 = vcombine.high %v1161, %v1161
      %v1172 = vcombine.high %v1162, %v1162
      %1173 = vrot.lane.b32.xlu0 %v1159, 7
      %v1174 = vpop.permute.xlu0 %1173
      %1175 = vrot.lane.b32.xlu0 %v1169, 7
      %v1176 = vpop.permute.xlu0 %1175
      %1177 = vrot.lane.b32.xlu0 %v1160, 7
      %v1178 = vpop.permute.xlu0 %1177
      %1179 = vrot.lane.b32.xlu0 %v1170, 7
      %v1180 = vpop.permute.xlu0 %1179
      %1181 = vrot.lane.b32.xlu0 %v1161, 7
      %v1182 = vpop.permute.xlu0 %1181
      %1183 = vrot.lane.b32.xlu0 %v1171, 7
      %v1184 = vpop.permute.xlu0 %1183
      %1185 = vrot.lane.b32.xlu0 %v1162, 7
      %v1186 = vpop.permute.xlu0 %1185
      %1187 = vrot.lane.b32.xlu0 %v1172, 7
      %v1188 = vpop.permute.xlu0 %1187
      %1189 = vrot.lane.b32.xlu0 %v1163, 7
      %v1190 = vpop.permute.xlu0 %1189
      %vm1191 = vcmask 56320
      %v1192 = vsel %vm1191, %v1174, %v1176
      %v1193 = vsel %vm1191, %v1176, %v1178
      %v1194 = vsel %vm1191, %v1178, %v1180
      %v1195 = vsel %vm1191, %v1180, %v1182
      %v1196 = vsel %vm1191, %v1182, %v1184
      %v1197 = vsel %vm1191, %v1184, %v1186
      %v1198 = vsel %vm1191, %v1186, %v1188
      %v1199 = vsel %vm1191, %v1188, %v1190
      %1208 = vst [vmem:[#allocation3 + $0x200] sm:$0xf] %v1192
      %1209 = vst [vmem:[#allocation3 + $0x208] sm:$0xf] %v1193
      %1210 = vst [vmem:[#allocation3 + $0x210] sm:$0xf] %v1194
      %1211 = vst [vmem:[#allocation3 + $0x218] sm:$0xf] %v1195
      %1212 = vst [vmem:[#allocation3 + $0x220] sm:$0xf] %v1196
      %1213 = vst [vmem:[#allocation3 + $0x228] sm:$0xf] %v1197
      %1214 = vst [vmem:[#allocation3 + $0x230] sm:$0xf] %v1198
      %1215 = vst.msk [vmem:[#allocation3 + $0x238] sm:$0xf] %vm337, %v1199
      %v1216 = vld [vmem:[#allocation2] sm:$0xff]
      %v1217 = vld [vmem:[#allocation2 + $0x8] sm:$0xff]
      %v1218 = vld [vmem:[#allocation2 + $0x10] sm:$0xff]
      %v1219 = vld [vmem:[#allocation2 + $0x18] sm:$0xff]
      %v1220 = vld [vmem:[#allocation2 + $0x20] sm:$0xf]
      %v1226 = vcombine.low %v1216, %v1216
      %v1227 = vcombine.low %v1217, %v1217
      %v1228 = vcombine.low %v1218, %v1218
      %v1229 = vcombine.low %v1219, %v1219
      %v1230 = vcombine.low %v1220, %v1220
      %1231 = vrot.lane.b32.xlu0 %v1226, 6
      %v1232 = vpop.permute.xlu0 %1231
      %1233 = vrot.lane.b32.xlu0 %v1216, 6
      %v1234 = vpop.permute.xlu0 %1233
      %1235 = vrot.lane.b32.xlu0 %v1227, 6
      %v1236 = vpop.permute.xlu0 %1235
      %1237 = vrot.lane.b32.xlu0 %v1217, 6
      %v1238 = vpop.permute.xlu0 %1237
      %1239 = vrot.lane.b32.xlu0 %v1228, 6
      %v1240 = vpop.permute.xlu0 %1239
      %1241 = vrot.lane.b32.xlu0 %v1218, 6
      %v1242 = vpop.permute.xlu0 %1241
      %1243 = vrot.lane.b32.xlu0 %v1229, 6
      %v1244 = vpop.permute.xlu0 %1243
      %1245 = vrot.lane.b32.xlu0 %v1219, 6
      %v1246 = vpop.permute.xlu0 %1245
      %1247 = vrot.lane.b32.xlu0 %v1230, 6
      %v1248 = vpop.permute.xlu0 %1247
      %vm1249 = vcmask 48128
      %v1250 = vsel %vm1249, %v1232, %v1234
      %v1251 = vsel %vm1249, %v1234, %v1236
      %v1252 = vsel %vm1249, %v1236, %v1238
      %v1253 = vsel %vm1249, %v1238, %v1240
      %v1254 = vsel %vm1249, %v1240, %v1242
      %v1255 = vsel %vm1249, %v1242, %v1244
      %v1256 = vsel %vm1249, %v1244, %v1246
      %v1257 = vsel %vm1249, %v1246, %v1248
      %1266 = vst [vmem:[#allocation3 + $0x200] sm:$0xf0] %v1250
      %1267 = vst [vmem:[#allocation3 + $0x208] sm:$0xf0] %v1251
      %1268 = vst [vmem:[#allocation3 + $0x210] sm:$0xf0] %v1252
      %1269 = vst [vmem:[#allocation3 + $0x218] sm:$0xf0] %v1253
      %1270 = vst [vmem:[#allocation3 + $0x220] sm:$0xf0] %v1254
      %1271 = vst [vmem:[#allocation3 + $0x228] sm:$0xf0] %v1255
      %1272 = vst [vmem:[#allocation3 + $0x230] sm:$0xf0] %v1256
      %1273 = vst.msk [vmem:[#allocation3 + $0x238] sm:$0xf0] %vm390, %v1257
      %v1274 = vld [vmem:[#allocation2 + $0x4] sm:$0xff]
      %v1275 = vld [vmem:[#allocation2 + $0xc] sm:$0xff]
      %v1276 = vld [vmem:[#allocation2 + $0x14] sm:$0xff]
      %v1277 = vld [vmem:[#allocation2 + $0x1c] sm:$0xff]
      %v1278 = vld [vmem:[#allocation2 + $0x24] sm:$0xf]
      %v1284 = vcombine.high %v1274, %v1274
      %v1285 = vcombine.high %v1275, %v1275
      %v1286 = vcombine.high %v1276, %v1276
      %v1287 = vcombine.high %v1277, %v1277
      %1288 = vrot.lane.b32.xlu0 %v1274, 56
      %v1289 = vpop.permute.xlu0 %1288
      %1290 = vrot.lane.b32.xlu0 %v1284, 56
      %v1291 = vpop.permute.xlu0 %1290
      %1292 = vrot.lane.b32.xlu0 %v1275, 56
      %v1293 = vpop.permute.xlu0 %1292
      %1294 = vrot.lane.b32.xlu0 %v1285, 56
      %v1295 = vpop.permute.xlu0 %1294
      %1296 = vrot.lane.b32.xlu0 %v1276, 56
      %v1297 = vpop.permute.xlu0 %1296
      %1298 = vrot.lane.b32.xlu0 %v1286, 56
      %v1299 = vpop.permute.xlu0 %1298
      %1300 = vrot.lane.b32.xlu0 %v1277, 56
      %v1301 = vpop.permute.xlu0 %1300
      %1302 = vrot.lane.b32.xlu0 %v1287, 56
      %v1303 = vpop.permute.xlu0 %1302
      %1304 = vrot.lane.b32.xlu0 %v1278, 56
      %v1305 = vpop.permute.xlu0 %1304
      %vm1306 = vcmask 457728
      %v1307 = vsel %vm1306, %v1289, %v1291
      %v1308 = vsel %vm1306, %v1291, %v1293
      %v1309 = vsel %vm1306, %v1293, %v1295
      %v1310 = vsel %vm1306, %v1295, %v1297
      %v1311 = vsel %vm1306, %v1297, %v1299
      %v1312 = vsel %vm1306, %v1299, %v1301
      %v1313 = vsel %vm1306, %v1301, %v1303
      %v1314 = vsel %vm1306, %v1303, %v1305
      %1323 = vst [vmem:[#allocation3 + $0x240] sm:$0xf] %v1307
      %1324 = vst [vmem:[#allocation3 + $0x248] sm:$0xf] %v1308
      %1325 = vst [vmem:[#allocation3 + $0x250] sm:$0xf] %v1309
      %1326 = vst [vmem:[#allocation3 + $0x258] sm:$0xf] %v1310
      %1327 = vst [vmem:[#allocation3 + $0x260] sm:$0xf] %v1311
      %1328 = vst [vmem:[#allocation3 + $0x268] sm:$0xf] %v1312
      %1329 = vst [vmem:[#allocation3 + $0x270] sm:$0xf] %v1313
      %1330 = vst.msk [vmem:[#allocation3 + $0x278] sm:$0xf] %vm337, %v1314
      %v1331 = vld [vmem:[#allocation2 + $0x4] sm:$0xff]
      %v1332 = vld [vmem:[#allocation2 + $0xc] sm:$0xff]
      %v1333 = vld [vmem:[#allocation2 + $0x14] sm:$0xff]
      %v1334 = vld [vmem:[#allocation2 + $0x1c] sm:$0xff]
      %v1335 = vld [vmem:[#allocation2 + $0x24] sm:$0xf]
      %v1341 = vcombine.low %v1331, %v1331
      %v1342 = vcombine.low %v1332, %v1332
      %v1343 = vcombine.low %v1333, %v1333
      %v1344 = vcombine.low %v1334, %v1334
      %v1345 = vcombine.low %v1335, %v1335
      %1346 = vrot.lane.b32.xlu0 %v1341, 55
      %v1347 = vpop.permute.xlu0 %1346
      %1348 = vrot.lane.b32.xlu0 %v1331, 55
      %v1349 = vpop.permute.xlu0 %1348
      %1350 = vrot.lane.b32.xlu0 %v1342, 55
      %v1351 = vpop.permute.xlu0 %1350
      %1352 = vrot.lane.b32.xlu0 %v1332, 55
      %v1353 = vpop.permute.xlu0 %1352
      %1354 = vrot.lane.b32.xlu0 %v1343, 55
      %v1355 = vpop.permute.xlu0 %1354
      %1356 = vrot.lane.b32.xlu0 %v1333, 55
      %v1357 = vpop.permute.xlu0 %1356
      %1358 = vrot.lane.b32.xlu0 %v1344, 55
      %v1359 = vpop.permute.xlu0 %1358
      %1360 = vrot.lane.b32.xlu0 %v1334, 55
      %v1361 = vpop.permute.xlu0 %1360
      %1362 = vrot.lane.b32.xlu0 %v1345, 55
      %v1363 = vpop.permute.xlu0 %1362
      %vm1364 = vcmask 449536
      %v1365 = vsel %vm1364, %v1347, %v1349
      %v1366 = vsel %vm1364, %v1349, %v1351
      %v1367 = vsel %vm1364, %v1351, %v1353
      %v1368 = vsel %vm1364, %v1353, %v1355
      %v1369 = vsel %vm1364, %v1355, %v1357
      %v1370 = vsel %vm1364, %v1357, %v1359
      %v1371 = vsel %vm1364, %v1359, %v1361
      %v1372 = vsel %vm1364, %v1361, %v1363
      %1381 = vst [vmem:[#allocation3 + $0x240] sm:$0xf0] %v1365
      %1382 = vst [vmem:[#allocation3 + $0x248] sm:$0xf0] %v1366
      %1383 = vst [vmem:[#allocation3 + $0x250] sm:$0xf0] %v1367
      %1384 = vst [vmem:[#allocation3 + $0x258] sm:$0xf0] %v1368
      %1385 = vst [vmem:[#allocation3 + $0x260] sm:$0xf0] %v1369
      %1386 = vst [vmem:[#allocation3 + $0x268] sm:$0xf0] %v1370
      %1387 = vst [vmem:[#allocation3 + $0x270] sm:$0xf0] %v1371
      %1388 = vst.msk [vmem:[#allocation3 + $0x278] sm:$0xf0] %vm390, %v1372
      %v1389 = vld [vmem:[#allocation2 + $0x4] sm:$0xff]
      %v1390 = vld [vmem:[#allocation2 + $0xc] sm:$0xff]
      %v1391 = vld [vmem:[#allocation2 + $0x14] sm:$0xff]
      %v1392 = vld [vmem:[#allocation2 + $0x1c] sm:$0xff]
      %v1393 = vld [vmem:[#allocation2 + $0x24] sm:$0xf]
      %v1399 = vcombine.high %v1389, %v1389
      %v1400 = vcombine.high %v1390, %v1390
      %v1401 = vcombine.high %v1391, %v1391
      %v1402 = vcombine.high %v1392, %v1392
      %1403 = vrot.lane.b32.xlu0 %v1389, 54
      %v1404 = vpop.permute.xlu0 %1403
      %1405 = vrot.lane.b32.xlu0 %v1399, 54
      %v1406 = vpop.permute.xlu0 %1405
      %1407 = vrot.lane.b32.xlu0 %v1390, 54
      %v1408 = vpop.permute.xlu0 %1407
      %1409 = vrot.lane.b32.xlu0 %v1400, 54
      %v1410 = vpop.permute.xlu0 %1409
      %1411 = vrot.lane.b32.xlu0 %v1391, 54
      %v1412 = vpop.permute.xlu0 %1411
      %1413 = vrot.lane.b32.xlu0 %v1401, 54
      %v1414 = vpop.permute.xlu0 %1413
      %1415 = vrot.lane.b32.xlu0 %v1392, 54
      %v1416 = vpop.permute.xlu0 %1415
      %1417 = vrot.lane.b32.xlu0 %v1402, 54
      %v1418 = vpop.permute.xlu0 %1417
      %1419 = vrot.lane.b32.xlu0 %v1393, 54
      %v1420 = vpop.permute.xlu0 %1419
      %vm1421 = vcmask 441344
      %v1422 = vsel %vm1421, %v1404, %v1406
      %v1423 = vsel %vm1421, %v1406, %v1408
      %v1424 = vsel %vm1421, %v1408, %v1410
      %v1425 = vsel %vm1421, %v1410, %v1412
      %v1426 = vsel %vm1421, %v1412, %v1414
      %v1427 = vsel %vm1421, %v1414, %v1416
      %v1428 = vsel %vm1421, %v1416, %v1418
      %v1429 = vsel %vm1421, %v1418, %v1420
      %1438 = vst [vmem:[#allocation3 + $0x280] sm:$0xf] %v1422
      %1439 = vst [vmem:[#allocation3 + $0x288] sm:$0xf] %v1423
      %1440 = vst [vmem:[#allocation3 + $0x290] sm:$0xf] %v1424
      %1441 = vst [vmem:[#allocation3 + $0x298] sm:$0xf] %v1425
      %1442 = vst [vmem:[#allocation3 + $0x2a0] sm:$0xf] %v1426
      %1443 = vst [vmem:[#allocation3 + $0x2a8] sm:$0xf] %v1427
      %1444 = vst [vmem:[#allocation3 + $0x2b0] sm:$0xf] %v1428
      %1445 = vst.msk [vmem:[#allocation3 + $0x2b8] sm:$0xf] %vm337, %v1429
      %v1446 = vld [vmem:[#allocation2 + $0x4] sm:$0xff]
      %v1447 = vld [vmem:[#allocation2 + $0xc] sm:$0xff]
      %v1448 = vld [vmem:[#allocation2 + $0x14] sm:$0xff]
      %v1449 = vld [vmem:[#allocation2 + $0x1c] sm:$0xff]
      %v1450 = vld [vmem:[#allocation2 + $0x24] sm:$0xf]
      %v1456 = vcombine.low %v1446, %v1446
      %v1457 = vcombine.low %v1447, %v1447
      %v1458 = vcombine.low %v1448, %v1448
      %v1459 = vcombine.low %v1449, %v1449
      %v1460 = vcombine.low %v1450, %v1450
      %1461 = vrot.lane.b32.xlu0 %v1456, 46
      %v1462 = vpop.permute.xlu0 %1461
      %1463 = vrot.lane.b32.xlu0 %v1446, 46
      %v1464 = vpop.permute.xlu0 %1463
      %1465 = vrot.lane.b32.xlu0 %v1457, 46
      %v1466 = vpop.permute.xlu0 %1465
      %1467 = vrot.lane.b32.xlu0 %v1447, 46
      %v1468 = vpop.permute.xlu0 %1467
      %1469 = vrot.lane.b32.xlu0 %v1458, 46
      %v1470 = vpop.permute.xlu0 %1469
      %1471 = vrot.lane.b32.xlu0 %v1448, 46
      %v1472 = vpop.permute.xlu0 %1471
      %1473 = vrot.lane.b32.xlu0 %v1459, 46
      %v1474 = vpop.permute.xlu0 %1473
      %1475 = vrot.lane.b32.xlu0 %v1449, 46
      %v1476 = vpop.permute.xlu0 %1475
      %1477 = vrot.lane.b32.xlu0 %v1460, 46
      %v1478 = vpop.permute.xlu0 %1477
      %vm1479 = vcmask 375808
      %v1480 = vsel %vm1479, %v1462, %v1464
      %v1481 = vsel %vm1479, %v1464, %v1466
      %v1482 = vsel %vm1479, %v1466, %v1468
      %v1483 = vsel %vm1479, %v1468, %v1470
      %v1484 = vsel %vm1479, %v1470, %v1472
      %v1485 = vsel %vm1479, %v1472, %v1474
      %v1486 = vsel %vm1479, %v1474, %v1476
      %v1487 = vsel %vm1479, %v1476, %v1478
      %1496 = vst [vmem:[#allocation3 + $0x280] sm:$0xf0] %v1480
      %1497 = vst [vmem:[#allocation3 + $0x288] sm:$0xf0] %v1481
      %1498 = vst [vmem:[#allocation3 + $0x290] sm:$0xf0] %v1482
      %1499 = vst [vmem:[#allocation3 + $0x298] sm:$0xf0] %v1483
      %1500 = vst [vmem:[#allocation3 + $0x2a0] sm:$0xf0] %v1484
      %1501 = vst [vmem:[#allocation3 + $0x2a8] sm:$0xf0] %v1485
      %1502 = vst [vmem:[#allocation3 + $0x2b0] sm:$0xf0] %v1486
      %1503 = vst.msk [vmem:[#allocation3 + $0x2b8] sm:$0xf0] %vm390, %v1487
      %v1504 = vld [vmem:[#allocation2 + $0x4] sm:$0xff]
      %v1505 = vld [vmem:[#allocation2 + $0xc] sm:$0xff]
      %v1506 = vld [vmem:[#allocation2 + $0x14] sm:$0xff]
      %v1507 = vld [vmem:[#allocation2 + $0x1c] sm:$0xff]
      %v1508 = vld [vmem:[#allocation2 + $0x24] sm:$0xf]
      %v1514 = vcombine.high %v1504, %v1504
      %v1515 = vcombine.high %v1505, %v1505
      %v1516 = vcombine.high %v1506, %v1506
      %v1517 = vcombine.high %v1507, %v1507
      %1518 = vrot.lane.b32.xlu0 %v1504, 45
      %v1519 = vpop.permute.xlu0 %1518
      %1520 = vrot.lane.b32.xlu0 %v1514, 45
      %v1521 = vpop.permute.xlu0 %1520
      %1522 = vrot.lane.b32.xlu0 %v1505, 45
      %v1523 = vpop.permute.xlu0 %1522
      %1524 = vrot.lane.b32.xlu0 %v1515, 45
      %v1525 = vpop.permute.xlu0 %1524
      %1526 = vrot.lane.b32.xlu0 %v1506, 45
      %v1527 = vpop.permute.xlu0 %1526
      %1528 = vrot.lane.b32.xlu0 %v1516, 45
      %v1529 = vpop.permute.xlu0 %1528
      %1530 = vrot.lane.b32.xlu0 %v1507, 45
      %v1531 = vpop.permute.xlu0 %1530
      %1532 = vrot.lane.b32.xlu0 %v1517, 45
      %v1533 = vpop.permute.xlu0 %1532
      %1534 = vrot.lane.b32.xlu0 %v1508, 45
      %v1535 = vpop.permute.xlu0 %1534
      %vm1536 = vcmask 367616
      %v1537 = vsel %vm1536, %v1519, %v1521
      %v1538 = vsel %vm1536, %v1521, %v1523
      %v1539 = vsel %vm1536, %v1523, %v1525
      %v1540 = vsel %vm1536, %v1525, %v1527
      %v1541 = vsel %vm1536, %v1527, %v1529
      %v1542 = vsel %vm1536, %v1529, %v1531
      %v1543 = vsel %vm1536, %v1531, %v1533
      %v1544 = vsel %vm1536, %v1533, %v1535
      %1553 = vst [vmem:[#allocation3 + $0x2c0] sm:$0xf] %v1537
      %1554 = vst [vmem:[#allocation3 + $0x2c8] sm:$0xf] %v1538
      %1555 = vst [vmem:[#allocation3 + $0x2d0] sm:$0xf] %v1539
      %1556 = vst [vmem:[#allocation3 + $0x2d8] sm:$0xf] %v1540
      %1557 = vst [vmem:[#allocation3 + $0x2e0] sm:$0xf] %v1541
      %1558 = vst [vmem:[#allocation3 + $0x2e8] sm:$0xf] %v1542
      %1559 = vst [vmem:[#allocation3 + $0x2f0] sm:$0xf] %v1543
      %1560 = vst.msk [vmem:[#allocation3 + $0x2f8] sm:$0xf] %vm337, %v1544
      %v1561 = vld [vmem:[#allocation2 + $0x4] sm:$0xff]
      %v1562 = vld [vmem:[#allocation2 + $0xc] sm:$0xff]
      %v1563 = vld [vmem:[#allocation2 + $0x14] sm:$0xff]
      %v1564 = vld [vmem:[#allocation2 + $0x1c] sm:$0xff]
      %v1565 = vld [vmem:[#allocation2 + $0x24] sm:$0xf]
      %v1571 = vcombine.low %v1561, %v1561
      %v1572 = vcombine.low %v1562, %v1562
      %v1573 = vcombine.low %v1563, %v1563
      %v1574 = vcombine.low %v1564, %v1564
      %v1575 = vcombine.low %v1565, %v1565
      %1576 = vrot.lane.b32.xlu0 %v1571, 44
      %v1577 = vpop.permute.xlu0 %1576
      %1578 = vrot.lane.b32.xlu0 %v1561, 44
      %v1579 = vpop.permute.xlu0 %1578
      %1580 = vrot.lane.b32.xlu0 %v1572, 44
      %v1581 = vpop.permute.xlu0 %1580
      %1582 = vrot.lane.b32.xlu0 %v1562, 44
      %v1583 = vpop.permute.xlu0 %1582
      %1584 = vrot.lane.b32.xlu0 %v1573, 44
      %v1585 = vpop.permute.xlu0 %1584
      %1586 = vrot.lane.b32.xlu0 %v1563, 44
      %v1587 = vpop.permute.xlu0 %1586
      %1588 = vrot.lane.b32.xlu0 %v1574, 44
      %v1589 = vpop.permute.xlu0 %1588
      %1590 = vrot.lane.b32.xlu0 %v1564, 44
      %v1591 = vpop.permute.xlu0 %1590
      %1592 = vrot.lane.b32.xlu0 %v1575, 44
      %v1593 = vpop.permute.xlu0 %1592
      %vm1594 = vcmask 359424
      %v1595 = vsel %vm1594, %v1577, %v1579
      %v1596 = vsel %vm1594, %v1579, %v1581
      %v1597 = vsel %vm1594, %v1581, %v1583
      %v1598 = vsel %vm1594, %v1583, %v1585
      %v1599 = vsel %vm1594, %v1585, %v1587
      %v1600 = vsel %vm1594, %v1587, %v1589
      %v1601 = vsel %vm1594, %v1589, %v1591
      %v1602 = vsel %vm1594, %v1591, %v1593
      %1611 = vst [vmem:[#allocation3 + $0x2c0] sm:$0xf0] %v1595
      %1612 = vst [vmem:[#allocation3 + $0x2c8] sm:$0xf0] %v1596
      %1613 = vst [vmem:[#allocation3 + $0x2d0] sm:$0xf0] %v1597
      %1614 = vst [vmem:[#allocation3 + $0x2d8] sm:$0xf0] %v1598
      %1615 = vst [vmem:[#allocation3 + $0x2e0] sm:$0xf0] %v1599
      %1616 = vst [vmem:[#allocation3 + $0x2e8] sm:$0xf0] %v1600
      %1617 = vst [vmem:[#allocation3 + $0x2f0] sm:$0xf0] %v1601
      %1618 = vst.msk [vmem:[#allocation3 + $0x2f8] sm:$0xf0] %vm390, %v1602
      %v1619 = vld [vmem:[#allocation2 + $0x4] sm:$0xff]
      %v1620 = vld [vmem:[#allocation2 + $0xc] sm:$0xff]
      %v1621 = vld [vmem:[#allocation2 + $0x14] sm:$0xff]
      %v1622 = vld [vmem:[#allocation2 + $0x1c] sm:$0xff]
      %v1623 = vld [vmem:[#allocation2 + $0x24] sm:$0xf]
      %v1629 = vcombine.high %v1619, %v1619
      %v1630 = vcombine.high %v1620, %v1620
      %v1631 = vcombine.high %v1621, %v1621
      %v1632 = vcombine.high %v1622, %v1622
      %1633 = vrot.lane.b32.xlu0 %v1619, 36
      %v1634 = vpop.permute.xlu0 %1633
      %1635 = vrot.lane.b32.xlu0 %v1629, 36
      %v1636 = vpop.permute.xlu0 %1635
      %1637 = vrot.lane.b32.xlu0 %v1620, 36
      %v1638 = vpop.permute.xlu0 %1637
      %1639 = vrot.lane.b32.xlu0 %v1630, 36
      %v1640 = vpop.permute.xlu0 %1639
      %1641 = vrot.lane.b32.xlu0 %v1621, 36
      %v1642 = vpop.permute.xlu0 %1641
      %1643 = vrot.lane.b32.xlu0 %v1631, 36
      %v1644 = vpop.permute.xlu0 %1643
      %1645 = vrot.lane.b32.xlu0 %v1622, 36
      %v1646 = vpop.permute.xlu0 %1645
      %1647 = vrot.lane.b32.xlu0 %v1632, 36
      %v1648 = vpop.permute.xlu0 %1647
      %1649 = vrot.lane.b32.xlu0 %v1623, 36
      %v1650 = vpop.permute.xlu0 %1649
      %vm1651 = vcmask 293888
      %v1652 = vsel %vm1651, %v1634, %v1636
      %v1653 = vsel %vm1651, %v1636, %v1638
      %v1654 = vsel %vm1651, %v1638, %v1640
      %v1655 = vsel %vm1651, %v1640, %v1642
      %v1656 = vsel %vm1651, %v1642, %v1644
      %v1657 = vsel %vm1651, %v1644, %v1646
      %v1658 = vsel %vm1651, %v1646, %v1648
      %v1659 = vsel %vm1651, %v1648, %v1650
      %1668 = vst [vmem:[#allocation3 + $0x300] sm:$0xf] %v1652
      %1669 = vst [vmem:[#allocation3 + $0x308] sm:$0xf] %v1653
      %1670 = vst [vmem:[#allocation3 + $0x310] sm:$0xf] %v1654
      %1671 = vst [vmem:[#allocation3 + $0x318] sm:$0xf] %v1655
      %1672 = vst [vmem:[#allocation3 + $0x320] sm:$0xf] %v1656
      %1673 = vst [vmem:[#allocation3 + $0x328] sm:$0xf] %v1657
      %1674 = vst [vmem:[#allocation3 + $0x330] sm:$0xf] %v1658
      %1675 = vst.msk [vmem:[#allocation3 + $0x338] sm:$0xf] %vm337, %v1659
      %v1676 = vld [vmem:[#allocation2 + $0x4] sm:$0xff]
      %v1677 = vld [vmem:[#allocation2 + $0xc] sm:$0xff]
      %v1678 = vld [vmem:[#allocation2 + $0x14] sm:$0xff]
      %v1679 = vld [vmem:[#allocation2 + $0x1c] sm:$0xff]
      %v1680 = vld [vmem:[#allocation2 + $0x24] sm:$0xf]
      %v1686 = vcombine.low %v1676, %v1676
      %v1687 = vcombine.low %v1677, %v1677
      %v1688 = vcombine.low %v1678, %v1678
      %v1689 = vcombine.low %v1679, %v1679
      %v1690 = vcombine.low %v1680, %v1680
      %1691 = vrot.lane.b32.xlu0 %v1686, 35
      %v1692 = vpop.permute.xlu0 %1691
      %1693 = vrot.lane.b32.xlu0 %v1676, 35
      %v1694 = vpop.permute.xlu0 %1693
      %1695 = vrot.lane.b32.xlu0 %v1687, 35
      %v1696 = vpop.permute.xlu0 %1695
      %1697 = vrot.lane.b32.xlu0 %v1677, 35
      %v1698 = vpop.permute.xlu0 %1697
      %1699 = vrot.lane.b32.xlu0 %v1688, 35
      %v1700 = vpop.permute.xlu0 %1699
      %1701 = vrot.lane.b32.xlu0 %v1678, 35
      %v1702 = vpop.permute.xlu0 %1701
      %1703 = vrot.lane.b32.xlu0 %v1689, 35
      %v1704 = vpop.permute.xlu0 %1703
      %1705 = vrot.lane.b32.xlu0 %v1679, 35
      %v1706 = vpop.permute.xlu0 %1705
      %1707 = vrot.lane.b32.xlu0 %v1690, 35
      %v1708 = vpop.permute.xlu0 %1707
      %vm1709 = vcmask 285696
      %v1710 = vsel %vm1709, %v1692, %v1694
      %v1711 = vsel %vm1709, %v1694, %v1696
      %v1712 = vsel %vm1709, %v1696, %v1698
      %v1713 = vsel %vm1709, %v1698, %v1700
      %v1714 = vsel %vm1709, %v1700, %v1702
      %v1715 = vsel %vm1709, %v1702, %v1704
      %v1716 = vsel %vm1709, %v1704, %v1706
      %v1717 = vsel %vm1709, %v1706, %v1708
      %1726 = vst [vmem:[#allocation3 + $0x300] sm:$0xf0] %v1710
      %1727 = vst [vmem:[#allocation3 + $0x308] sm:$0xf0] %v1711
      %1728 = vst [vmem:[#allocation3 + $0x310] sm:$0xf0] %v1712
      %1729 = vst [vmem:[#allocation3 + $0x318] sm:$0xf0] %v1713
      %1730 = vst [vmem:[#allocation3 + $0x320] sm:$0xf0] %v1714
      %1731 = vst [vmem:[#allocation3 + $0x328] sm:$0xf0] %v1715
      %1732 = vst [vmem:[#allocation3 + $0x330] sm:$0xf0] %v1716
      %1733 = vst.msk [vmem:[#allocation3 + $0x338] sm:$0xf0] %vm390, %v1717
      %v1734 = vld [vmem:[#allocation2 + $0x4] sm:$0xff]
      %v1735 = vld [vmem:[#allocation2 + $0xc] sm:$0xff]
      %v1736 = vld [vmem:[#allocation2 + $0x14] sm:$0xff]
      %v1737 = vld [vmem:[#allocation2 + $0x1c] sm:$0xff]
      %v1738 = vld [vmem:[#allocation2 + $0x24] sm:$0xf]
      %v1744 = vcombine.high %v1734, %v1734
      %v1745 = vcombine.high %v1735, %v1735
      %v1746 = vcombine.high %v1736, %v1736
      %v1747 = vcombine.high %v1737, %v1737
      %1748 = vrot.lane.b32.xlu0 %v1734, 34
      %v1749 = vpop.permute.xlu0 %1748
      %1750 = vrot.lane.b32.xlu0 %v1744, 34
      %v1751 = vpop.permute.xlu0 %1750
      %1752 = vrot.lane.b32.xlu0 %v1735, 34
      %v1753 = vpop.permute.xlu0 %1752
      %1754 = vrot.lane.b32.xlu0 %v1745, 34
      %v1755 = vpop.permute.xlu0 %1754
      %1756 = vrot.lane.b32.xlu0 %v1736, 34
      %v1757 = vpop.permute.xlu0 %1756
      %1758 = vrot.lane.b32.xlu0 %v1746, 34
      %v1759 = vpop.permute.xlu0 %1758
      %1760 = vrot.lane.b32.xlu0 %v1737, 34
      %v1761 = vpop.permute.xlu0 %1760
      %1762 = vrot.lane.b32.xlu0 %v1747, 34
      %v1763 = vpop.permute.xlu0 %1762
      %1764 = vrot.lane.b32.xlu0 %v1738, 34
      %v1765 = vpop.permute.xlu0 %1764
      %vm1766 = vcmask 277504
      %v1767 = vsel %vm1766, %v1749, %v1751
      %v1768 = vsel %vm1766, %v1751, %v1753
      %v1769 = vsel %vm1766, %v1753, %v1755
      %v1770 = vsel %vm1766, %v1755, %v1757
      %v1771 = vsel %vm1766, %v1757, %v1759
      %v1772 = vsel %vm1766, %v1759, %v1761
      %v1773 = vsel %vm1766, %v1761, %v1763
      %v1774 = vsel %vm1766, %v1763, %v1765
      %1783 = vst [vmem:[#allocation3 + $0x340] sm:$0xf] %v1767
      %1784 = vst [vmem:[#allocation3 + $0x348] sm:$0xf] %v1768
      %1785 = vst [vmem:[#allocation3 + $0x350] sm:$0xf] %v1769
      %1786 = vst [vmem:[#allocation3 + $0x358] sm:$0xf] %v1770
      %1787 = vst [vmem:[#allocation3 + $0x360] sm:$0xf] %v1771
      %1788 = vst [vmem:[#allocation3 + $0x368] sm:$0xf] %v1772
      %1789 = vst [vmem:[#allocation3 + $0x370] sm:$0xf] %v1773
      %1790 = vst.msk [vmem:[#allocation3 + $0x378] sm:$0xf] %vm337, %v1774
      %v1791 = vld [vmem:[%s4] sm:$0xff]
      %v1792 = vld [vmem:[#allocation3] sm:$0xff]
      %v1793 = vld [vmem:[#allocation3 + $0x8] sm:$0xff]
      %v1794 = vld [vmem:[#allocation3 + $0x10] sm:$0xff]
      %v1795 = vld [vmem:[#allocation3 + $0x18] sm:$0xff]
      %v1796 = vld [vmem:[#allocation3 + $0x20] sm:$0xff]
      %v1797 = vld [vmem:[#allocation3 + $0x28] sm:$0xff]
      %v1798 = vld [vmem:[#allocation3 + $0x30] sm:$0xff]
      %v1799 = vld [vmem:[#allocation3 + $0x38] sm:$0xff]
      %v1800 = vld [vmem:[#allocation3 + $0x40] sm:$0xff]
      %v1801 = vld [vmem:[#allocation3 + $0x48] sm:$0xff]
      %v1802 = vld [vmem:[#allocation3 + $0x50] sm:$0xff]
      %v1803 = vld [vmem:[#allocation3 + $0x58] sm:$0xff]
      %v1804 = vld [vmem:[#allocation3 + $0x60] sm:$0xff]
      %v1805 = vld [vmem:[#allocation3 + $0x68] sm:$0xff]
      %v1806 = vld [vmem:[#allocation3 + $0x70] sm:$0xff]
      %v1807 = vld [vmem:[#allocation3 + $0x78] sm:$0xff]
      %v1808 = vld [vmem:[#allocation3 + $0x80] sm:$0xff]
      %v1809 = vld [vmem:[#allocation3 + $0x88] sm:$0xff]
      %v1810 = vld [vmem:[#allocation3 + $0x90] sm:$0xff]
      %v1811 = vld [vmem:[#allocation3 + $0x98] sm:$0xff]
      %v1812 = vld [vmem:[#allocation3 + $0xa0] sm:$0xff]
      %v1813 = vld [vmem:[#allocation3 + $0xa8] sm:$0xff]
      %v1814 = vld [vmem:[#allocation3 + $0xb0] sm:$0xff]
      %v1815 = vld [vmem:[#allocation3 + $0xb8] sm:$0xff]
      %v1816 = vld [vmem:[#allocation3 + $0xc0] sm:$0xff]
      %v1817 = vld [vmem:[#allocation3 + $0xc8] sm:$0xff]
      %v1818 = vld [vmem:[#allocation3 + $0xd0] sm:$0xff]
      %v1819 = vld [vmem:[#allocation3 + $0xd8] sm:$0xff]
      %v1820 = vld [vmem:[#allocation3 + $0xe0] sm:$0xff]
      %v1821 = vld [vmem:[#allocation3 + $0xe8] sm:$0xff]
      %v1822 = vld [vmem:[#allocation3 + $0xf0] sm:$0xff]
      %v1823 = vld [vmem:[#allocation3 + $0xf8] sm:$0xff]
      %v1824 = vld [vmem:[#allocation3 + $0x100] sm:$0xff]
      %v1825 = vld [vmem:[#allocation3 + $0x108] sm:$0xff]
      %v1826 = vld [vmem:[#allocation3 + $0x110] sm:$0xff]
      %v1827 = vld [vmem:[#allocation3 + $0x118] sm:$0xff]
      %v1828 = vld [vmem:[#allocation3 + $0x120] sm:$0xff]
      %v1829 = vld [vmem:[#allocation3 + $0x128] sm:$0xff]
      %v1830 = vld [vmem:[#allocation3 + $0x130] sm:$0xff]
      %v1831 = vld [vmem:[#allocation3 + $0x138] sm:$0xff]
      %v1832 = vld [vmem:[#allocation3 + $0x140] sm:$0xff]
      %v1833 = vld [vmem:[#allocation3 + $0x148] sm:$0xff]
      %v1834 = vld [vmem:[#allocation3 + $0x150] sm:$0xff]
      %v1835 = vld [vmem:[#allocation3 + $0x158] sm:$0xff]
      %v1836 = vld [vmem:[#allocation3 + $0x160] sm:$0xff]
      %v1837 = vld [vmem:[#allocation3 + $0x168] sm:$0xff]
      %v1838 = vld [vmem:[#allocation3 + $0x170] sm:$0xff]
      %v1839 = vld [vmem:[#allocation3 + $0x178] sm:$0xff]
      %v1840 = vld [vmem:[#allocation3 + $0x180] sm:$0xff]
      %v1841 = vld [vmem:[#allocation3 + $0x188] sm:$0xff]
      %v1842 = vld [vmem:[#allocation3 + $0x190] sm:$0xff]
      %v1843 = vld [vmem:[#allocation3 + $0x198] sm:$0xff]
      %v1844 = vld [vmem:[#allocation3 + $0x1a0] sm:$0xff]
      %v1845 = vld [vmem:[#allocation3 + $0x1a8] sm:$0xff]
      %v1846 = vld [vmem:[#allocation3 + $0x1b0] sm:$0xff]
      %v1847 = vld [vmem:[#allocation3 + $0x1b8] sm:$0xff]
      %v1848 = vld [vmem:[#allocation3 + $0x1c0] sm:$0xff]
      %v1849 = vld [vmem:[#allocation3 + $0x1c8] sm:$0xff]
      %v1850 = vld [vmem:[#allocation3 + $0x1d0] sm:$0xff]
      %v1851 = vld [vmem:[#allocation3 + $0x1d8] sm:$0xff]
      %v1852 = vld [vmem:[#allocation3 + $0x1e0] sm:$0xff]
      %v1853 = vld [vmem:[#allocation3 + $0x1e8] sm:$0xff]
      %v1854 = vld [vmem:[#allocation3 + $0x1f0] sm:$0xff]
      %v1855 = vld [vmem:[#allocation3 + $0x1f8] sm:$0xff]
      %v1856 = vld [vmem:[#allocation3 + $0x200] sm:$0xff]
      %v1857 = vld [vmem:[#allocation3 + $0x208] sm:$0xff]
      %v1858 = vld [vmem:[#allocation3 + $0x210] sm:$0xff]
      %v1859 = vld [vmem:[#allocation3 + $0x218] sm:$0xff]
      %v1860 = vld [vmem:[#allocation3 + $0x220] sm:$0xff]
      %v1861 = vld [vmem:[#allocation3 + $0x228] sm:$0xff]
      %v1862 = vld [vmem:[#allocation3 + $0x230] sm:$0xff]
      %v1863 = vld [vmem:[#allocation3 + $0x238] sm:$0xff]
      %v1864 = vld [vmem:[#allocation3 + $0x240] sm:$0xff]
      %v1865 = vld [vmem:[#allocation3 + $0x248] sm:$0xff]
      %v1866 = vld [vmem:[#allocation3 + $0x250] sm:$0xff]
      %v1867 = vld [vmem:[#allocation3 + $0x258] sm:$0xff]
      %v1868 = vld [vmem:[#allocation3 + $0x260] sm:$0xff]
      %v1869 = vld [vmem:[#allocation3 + $0x268] sm:$0xff]
      %v1870 = vld [vmem:[#allocation3 + $0x270] sm:$0xff]
      %v1871 = vld [vmem:[#allocation3 + $0x278] sm:$0xff]
      %v1872 = vld [vmem:[#allocation3 + $0x280] sm:$0xff]
      %v1873 = vld [vmem:[#allocation3 + $0x288] sm:$0xff]
      %v1874 = vld [vmem:[#allocation3 + $0x290] sm:$0xff]
      %v1875 = vld [vmem:[#allocation3 + $0x298] sm:$0xff]
      %v1876 = vld [vmem:[#allocation3 + $0x2a0] sm:$0xff]
      %v1877 = vld [vmem:[#allocation3 + $0x2a8] sm:$0xff]
      %v1878 = vld [vmem:[#allocation3 + $0x2b0] sm:$0xff]
      %v1879 = vld [vmem:[#allocation3 + $0x2b8] sm:$0xff]
      %v1880 = vld [vmem:[#allocation3 + $0x2c0] sm:$0xff]
      %v1881 = vld [vmem:[#allocation3 + $0x2c8] sm:$0xff]
      %v1882 = vld [vmem:[#allocation3 + $0x2d0] sm:$0xff]
      %v1883 = vld [vmem:[#allocation3 + $0x2d8] sm:$0xff]
      %v1884 = vld [vmem:[#allocation3 + $0x2e0] sm:$0xff]
      %v1885 = vld [vmem:[#allocation3 + $0x2e8] sm:$0xff]
      %v1886 = vld [vmem:[#allocation3 + $0x2f0] sm:$0xff]
      %v1887 = vld [vmem:[#allocation3 + $0x2f8] sm:$0xff]
      %v1888 = vld [vmem:[#allocation3 + $0x300] sm:$0xff]
      %v1889 = vld [vmem:[#allocation3 + $0x308] sm:$0xff]
      %v1890 = vld [vmem:[#allocation3 + $0x310] sm:$0xff]
      %v1891 = vld [vmem:[#allocation3 + $0x318] sm:$0xff]
      %v1892 = vld [vmem:[#allocation3 + $0x320] sm:$0xff]
      %v1893 = vld [vmem:[#allocation3 + $0x328] sm:$0xff]
      %v1894 = vld [vmem:[#allocation3 + $0x330] sm:$0xff]
      %v1895 = vld [vmem:[#allocation3 + $0x338] sm:$0xff]
      %v1896 = vld [vmem:[#allocation3 + $0x340] sm:$0xf]
      %v1897 = vld [vmem:[#allocation3 + $0x348] sm:$0xf]
      %v1898 = vld [vmem:[#allocation3 + $0x350] sm:$0xf]
      %v1899 = vld [vmem:[#allocation3 + $0x358] sm:$0xf]
      %v1900 = vld [vmem:[#allocation3 + $0x360] sm:$0xf]
      %v1901 = vld [vmem:[#allocation3 + $0x368] sm:$0xf]
      %v1902 = vld [vmem:[#allocation3 + $0x370] sm:$0xf]
      %v1903 = vld [vmem:[#allocation3 + $0x378] sm:$0xf]
      %v1905 = vsel %vm628, %v1791, 0
      %v1908 = vsel %vm272, %v1896, 0
      %v1911 = vsel %vm272, %v1897, 0
      %v1914 = vsel %vm272, %v1898, 0
      %v1917 = vsel %vm272, %v1899, 0
      %v1920 = vsel %vm272, %v1900, 0
      %v1923 = vsel %vm272, %v1901, 0
      %v1926 = vsel %vm272, %v1902, 0
      %v1929 = vsel %vm272, %v1903, 0
      %1931 = vmatprep.subr.mxu0 %v1793
      %1932 = vmatpush1.msra.mxu0 %v1792
      %1933 = vmatprep.subr.mxu0 %v1801
      %1934 = vmatpush1.msra.mxu0 %v1800
      %1935 = vmatprep.subr.mxu0 %v1809
      %1936 = vmatpush1.msra.mxu0 %v1808
      %1937 = vmatprep.subr.mxu0 %v1817
      %1938 = vmatpush1.msra.mxu0 %v1816
      %1939 = vmatprep.subr.mxu0 %v1825
      %1940 = vmatpush1.msra.mxu0 %v1824
      %1941 = vmatprep.subr.mxu0 %v1833
      %1942 = vmatpush1.msra.mxu0 %v1832
      %1943 = vmatprep.subr.mxu0 %v1841
      %1944 = vmatpush1.msra.mxu0 %v1840
      %1945 = vmatprep.subr.mxu0 %v1849
      %1946 = vmatpush1.msra.mxu0 %v1848
      %1947 = vmatprep.subr.mxu0 %v1857
      %1948 = vmatpush1.msra.mxu0 %v1856
      %1949 = vmatprep.subr.mxu0 %v1865
      %1950 = vmatpush1.msra.mxu0 %v1864
      %1951 = vmatprep.subr.mxu0 %v1873
      %1952 = vmatpush1.msra.mxu0 %v1872
      %1953 = vmatprep.subr.mxu0 %v1881
      %1954 = vmatpush1.msra.mxu0 %v1880
      %1955 = vmatprep.subr.mxu0 %v1889
      %1956 = vmatpush1.msra.mxu0 %v1888
      %1957 = vmatprep.subr.mxu0 %v1911
      %1958 = vmatpush1.msra.mxu0 %v1908
      %1959 = vmatprep.subr.mxu0 0.0
      %1960 = vmatpush1.msra.mxu0 0.0
      %1961 = vmatprep.subr.mxu0 0.0
      %1962 = vmatpush1.msra.mxu0 0.0
      %1963 = vmatprep.subr.mxu0 0.0
      %1964 = vmatpush1.msra.mxu0 0.0
      %1965 = vmatprep.subr.mxu0 0.0
      %1966 = vmatpush1.msra.mxu0 0.0
      %1967 = vmatprep.subr.mxu0 0.0
      %1968 = vmatpush1.msra.mxu0 0.0
      %1969 = vmatprep.subr.mxu0 0.0
      %1970 = vmatpush1.msra.mxu0 0.0
      %1971 = vmatprep.subr.mxu0 0.0
      %1972 = vmatpush1.msra.mxu0 0.0
      %1973 = vmatprep.subr.mxu0 0.0
      %1974 = vmatpush1.msra.mxu0 0.0
      %1975 = vmatprep.subr.mxu0 0.0
      %1976 = vmatpush1.msra.mxu0 0.0
      %1977 = vmatprep.subr.mxu0 0.0
      %1978 = vmatpush1.msra.mxu0 0.0
      %1979 = vmatprep.subr.mxu0 0.0
      %1980 = vmatpush1.msra.mxu0 0.0
      %1981 = vmatprep.subr.mxu0 0.0
      %1982 = vmatpush1.msra.mxu0 0.0
      %1983 = vmatprep.subr.mxu0 0.0
      %1984 = vmatpush1.msra.mxu0 0.0
      %1985 = vmatprep.subr.mxu0 0.0
      %1986 = vmatpush1.msra.mxu0 0.0
      %1987 = vmatprep.subr.mxu0 0.0
      %1988 = vmatpush1.msra.mxu0 0.0
      %1989 = vmatprep.subr.mxu0 0.0
      %1990 = vmatpush1.msra.mxu0 0.0
      %1991 = vmatprep.subr.mxu0 0.0
      %1992 = vmatpush1.msra.mxu0 0.0
      %1993 = vmatprep.subr.mxu0 0.0
      %1994 = vmatpush1.msra.mxu0 0.0
      %1995 = vmatprep.mubr.f32.mxu0 0.0
      %1996 = vmatmul.mubr.f32.gmra.mrb[0].mxu0 %v1905
      %v1997 = vpop.f32.mrb[0].mxu0
      %v1998 = vadd.f32 0.0, %v1997
      %v1999 = vpop.f32.mrb[0].mxu0
      %v2000 = vadd.f32 0.0, %v1999
      %2001 = vdwg.mxu0
      %2002 = vmatprep.subr.mxu0 %v1795
      %2003 = vmatpush1.msra.mxu0 %v1794
      %2004 = vmatprep.subr.mxu0 %v1803
      %2005 = vmatpush1.msra.mxu0 %v1802
      %2006 = vmatprep.subr.mxu0 %v1811
      %2007 = vmatpush1.msra.mxu0 %v1810
      %2008 = vmatprep.subr.mxu0 %v1819
      %2009 = vmatpush1.msra.mxu0 %v1818
      %2010 = vmatprep.subr.mxu0 %v1827
      %2011 = vmatpush1.msra.mxu0 %v1826
      %2012 = vmatprep.subr.mxu0 %v1835
      %2013 = vmatpush1.msra.mxu0 %v1834
      %2014 = vmatprep.subr.mxu0 %v1843
      %2015 = vmatpush1.msra.mxu0 %v1842
      %2016 = vmatprep.subr.mxu0 %v1851
      %2017 = vmatpush1.msra.mxu0 %v1850
      %2018 = vmatprep.subr.mxu0 %v1859
      %2019 = vmatpush1.msra.mxu0 %v1858
      %2020 = vmatprep.subr.mxu0 %v1867
      %2021 = vmatpush1.msra.mxu0 %v1866
      %2022 = vmatprep.subr.mxu0 %v1875
      %2023 = vmatpush1.msra.mxu0 %v1874
      %2024 = vmatprep.subr.mxu0 %v1883
      %2025 = vmatpush1.msra.mxu0 %v1882
      %2026 = vmatprep.subr.mxu0 %v1891
      %2027 = vmatpush1.msra.mxu0 %v1890
      %2028 = vmatprep.subr.mxu0 %v1917
      %2029 = vmatpush1.msra.mxu0 %v1914
      %2030 = vmatprep.subr.mxu0 0.0
      %2031 = vmatpush1.msra.mxu0 0.0
      %2032 = vmatprep.subr.mxu0 0.0
      %2033 = vmatpush1.msra.mxu0 0.0
      %2034 = vmatprep.subr.mxu0 0.0
      %2035 = vmatpush1.msra.mxu0 0.0
      %2036 = vmatprep.subr.mxu0 0.0
      %2037 = vmatpush1.msra.mxu0 0.0
      %2038 = vmatprep.subr.mxu0 0.0
      %2039 = vmatpush1.msra.mxu0 0.0
      %2040 = vmatprep.subr.mxu0 0.0
      %2041 = vmatpush1.msra.mxu0 0.0
      %2042 = vmatprep.subr.mxu0 0.0
      %2043 = vmatpush1.msra.mxu0 0.0
      %2044 = vmatprep.subr.mxu0 0.0
      %2045 = vmatpush1.msra.mxu0 0.0
      %2046 = vmatprep.subr.mxu0 0.0
      %2047 = vmatpush1.msra.mxu0 0.0
      %2048 = vmatprep.subr.mxu0 0.0
      %2049 = vmatpush1.msra.mxu0 0.0
      %2050 = vmatprep.subr.mxu0 0.0
      %2051 = vmatpush1.msra.mxu0 0.0
      %2052 = vmatprep.subr.mxu0 0.0
      %2053 = vmatpush1.msra.mxu0 0.0
      %2054 = vmatprep.subr.mxu0 0.0
      %2055 = vmatpush1.msra.mxu0 0.0
      %2056 = vmatprep.subr.mxu0 0.0
      %2057 = vmatpush1.msra.mxu0 0.0
      %2058 = vmatprep.subr.mxu0 0.0
      %2059 = vmatpush1.msra.mxu0 0.0
      %2060 = vmatprep.subr.mxu0 0.0
      %2061 = vmatpush1.msra.mxu0 0.0
      %2062 = vmatprep.subr.mxu0 0.0
      %2063 = vmatpush1.msra.mxu0 0.0
      %2064 = vmatprep.subr.mxu0 0.0
      %2065 = vmatpush1.msra.mxu0 0.0
      %2066 = vmatprep.mubr.f32.mxu0 0.0
      %2067 = vmatmul.mubr.f32.gmra.mrb[0].mxu0 %v1905
      %v2068 = vpop.f32.mrb[0].mxu0
      %v2069 = vadd.f32 0.0, %v2068
      %v2070 = vpop.f32.mrb[0].mxu0
      %v2071 = vadd.f32 0.0, %v2070
      %2072 = vdwg.mxu0
      %2073 = vmatprep.subr.mxu0 %v1797
      %2074 = vmatpush1.msra.mxu0 %v1796
      %2075 = vmatprep.subr.mxu0 %v1805
      %2076 = vmatpush1.msra.mxu0 %v1804
      %2077 = vmatprep.subr.mxu0 %v1813
      %2078 = vmatpush1.msra.mxu0 %v1812
      %2079 = vmatprep.subr.mxu0 %v1821
      %2080 = vmatpush1.msra.mxu0 %v1820
      %2081 = vmatprep.subr.mxu0 %v1829
      %2082 = vmatpush1.msra.mxu0 %v1828
      %2083 = vmatprep.subr.mxu0 %v1837
      %2084 = vmatpush1.msra.mxu0 %v1836
      %2085 = vmatprep.subr.mxu0 %v1845
      %2086 = vmatpush1.msra.mxu0 %v1844
      %2087 = vmatprep.subr.mxu0 %v1853
      %2088 = vmatpush1.msra.mxu0 %v1852
      %2089 = vmatprep.subr.mxu0 %v1861
      %2090 = vmatpush1.msra.mxu0 %v1860
      %2091 = vmatprep.subr.mxu0 %v1869
      %2092 = vmatpush1.msra.mxu0 %v1868
      %2093 = vmatprep.subr.mxu0 %v1877
      %2094 = vmatpush1.msra.mxu0 %v1876
      %2095 = vmatprep.subr.mxu0 %v1885
      %2096 = vmatpush1.msra.mxu0 %v1884
      %2097 = vmatprep.subr.mxu0 %v1893
      %2098 = vmatpush1.msra.mxu0 %v1892
      %2099 = vmatprep.subr.mxu0 %v1923
      %2100 = vmatpush1.msra.mxu0 %v1920
      %2101 = vmatprep.subr.mxu0 0.0
      %2102 = vmatpush1.msra.mxu0 0.0
      %2103 = vmatprep.subr.mxu0 0.0
      %2104 = vmatpush1.msra.mxu0 0.0
      %2105 = vmatprep.subr.mxu0 0.0
      %2106 = vmatpush1.msra.mxu0 0.0
      %2107 = vmatprep.subr.mxu0 0.0
      %2108 = vmatpush1.msra.mxu0 0.0
      %2109 = vmatprep.subr.mxu0 0.0
      %2110 = vmatpush1.msra.mxu0 0.0
      %2111 = vmatprep.subr.mxu0 0.0
      %2112 = vmatpush1.msra.mxu0 0.0
      %2113 = vmatprep.subr.mxu0 0.0
      %2114 = vmatpush1.msra.mxu0 0.0
      %2115 = vmatprep.subr.mxu0 0.0
      %2116 = vmatpush1.msra.mxu0 0.0
      %2117 = vmatprep.subr.mxu0 0.0
      %2118 = vmatpush1.msra.mxu0 0.0
      %2119 = vmatprep.subr.mxu0 0.0
      %2120 = vmatpush1.msra.mxu0 0.0
      %2121 = vmatprep.subr.mxu0 0.0
      %2122 = vmatpush1.msra.mxu0 0.0
      %2123 = vmatprep.subr.mxu0 0.0
      %2124 = vmatpush1.msra.mxu0 0.0
      %2125 = vmatprep.subr.mxu0 0.0
      %2126 = vmatpush1.msra.mxu0 0.0
      %2127 = vmatprep.subr.mxu0 0.0
      %2128 = vmatpush1.msra.mxu0 0.0
      %2129 = vmatprep.subr.mxu0 0.0
      %2130 = vmatpush1.msra.mxu0 0.0
      %2131 = vmatprep.subr.mxu0 0.0
      %2132 = vmatpush1.msra.mxu0 0.0
      %2133 = vmatprep.subr.mxu0 0.0
      %2134 = vmatpush1.msra.mxu0 0.0
      %2135 = vmatprep.subr.mxu0 0.0
      %2136 = vmatpush1.msra.mxu0 0.0
      %2137 = vmatprep.mubr.f32.mxu0 0.0
      %2138 = vmatmul.mubr.f32.gmra.mrb[0].mxu0 %v1905
      %v2139 = vpop.f32.mrb[0].mxu0
      %v2140 = vadd.f32 0.0, %v2139
      %v2141 = vpop.f32.mrb[0].mxu0
      %v2142 = vadd.f32 0.0, %v2141
      %2143 = vdwg.mxu0
      %2144 = vmatprep.subr.mxu0 %v1799
      %2145 = vmatpush1.msra.mxu0 %v1798
      %2146 = vmatprep.subr.mxu0 %v1807
      %2147 = vmatpush1.msra.mxu0 %v1806
      %2148 = vmatprep.subr.mxu0 %v1815
      %2149 = vmatpush1.msra.mxu0 %v1814
      %2150 = vmatprep.subr.mxu0 %v1823
      %2151 = vmatpush1.msra.mxu0 %v1822
      %2152 = vmatprep.subr.mxu0 %v1831
      %2153 = vmatpush1.msra.mxu0 %v1830
      %2154 = vmatprep.subr.mxu0 %v1839
      %2155 = vmatpush1.msra.mxu0 %v1838
      %2156 = vmatprep.subr.mxu0 %v1847
      %2157 = vmatpush1.msra.mxu0 %v1846
      %2158 = vmatprep.subr.mxu0 %v1855
      %2159 = vmatpush1.msra.mxu0 %v1854
      %2160 = vmatprep.subr.mxu0 %v1863
      %2161 = vmatpush1.msra.mxu0 %v1862
      %2162 = vmatprep.subr.mxu0 %v1871
      %2163 = vmatpush1.msra.mxu0 %v1870
      %2164 = vmatprep.subr.mxu0 %v1879
      %2165 = vmatpush1.msra.mxu0 %v1878
      %2166 = vmatprep.subr.mxu0 %v1887
      %2167 = vmatpush1.msra.mxu0 %v1886
      %2168 = vmatprep.subr.mxu0 %v1895
      %2169 = vmatpush1.msra.mxu0 %v1894
      %2170 = vmatprep.subr.mxu0 %v1929
      %2171 = vmatpush1.msra.mxu0 %v1926
      %2172 = vmatprep.subr.mxu0 0.0
      %2173 = vmatpush1.msra.mxu0 0.0
      %2174 = vmatprep.subr.mxu0 0.0
      %2175 = vmatpush1.msra.mxu0 0.0
      %2176 = vmatprep.subr.mxu0 0.0
      %2177 = vmatpush1.msra.mxu0 0.0
      %2178 = vmatprep.subr.mxu0 0.0
      %2179 = vmatpush1.msra.mxu0 0.0
      %2180 = vmatprep.subr.mxu0 0.0
      %2181 = vmatpush1.msra.mxu0 0.0
      %2182 = vmatprep.subr.mxu0 0.0
      %2183 = vmatpush1.msra.mxu0 0.0
      %2184 = vmatprep.subr.mxu0 0.0
      %2185 = vmatpush1.msra.mxu0 0.0
      %2186 = vmatprep.subr.mxu0 0.0
      %2187 = vmatpush1.msra.mxu0 0.0
      %2188 = vmatprep.subr.mxu0 0.0
      %2189 = vmatpush1.msra.mxu0 0.0
      %2190 = vmatprep.subr.mxu0 0.0
      %2191 = vmatpush1.msra.mxu0 0.0
      %2192 = vmatprep.subr.mxu0 0.0
      %2193 = vmatpush1.msra.mxu0 0.0
      %2194 = vmatprep.subr.mxu0 0.0
      %2195 = vmatpush1.msra.mxu0 0.0
      %2196 = vmatprep.subr.mxu0 0.0
      %2197 = vmatpush1.msra.mxu0 0.0
      %2198 = vmatprep.subr.mxu0 0.0
      %2199 = vmatpush1.msra.mxu0 0.0
      %2200 = vmatprep.subr.mxu0 0.0
      %2201 = vmatpush1.msra.mxu0 0.0
      %2202 = vmatprep.subr.mxu0 0.0
      %2203 = vmatpush1.msra.mxu0 0.0
      %2204 = vmatprep.subr.mxu0 0.0
      %2205 = vmatpush1.msra.mxu0 0.0
      %2206 = vmatprep.subr.mxu0 0.0
      %2207 = vmatpush1.msra.mxu0 0.0
      %2208 = vmatprep.mubr.f32.mxu0 0.0
      %2209 = vmatmul.mubr.f32.gmra.mrb[0].mxu0 %v1905
      %v2210 = vpop.f32.mrb[0].mxu0
      %v2211 = vadd.f32 0.0, %v2210
      %v2212 = vpop.f32.mrb[0].mxu0
      %v2213 = vadd.f32 0.0, %v2212
      %2214 = vdwg.mxu0
      %2215 = vst [vmem:[%s258] sm:$0xff] %v1998
      %2216 = vst [vmem:[%s258 + $0x8] sm:$0xff] %v2000
      %2217 = vst [vmem:[%s258 + $0x10] sm:$0xff] %v2069
      %2218 = vst [vmem:[%s258 + $0x18] sm:$0xff] %v2071
      %2219 = vst [vmem:[%s258 + $0x20] sm:$0xff] %v2140
      %2220 = vst [vmem:[%s258 + $0x28] sm:$0xff] %v2142
      %2221 = vst [vmem:[%s258 + $0x30] sm:$0xff] %v2211
      %vm2222 = vcmask 850944
      %2223 = vst.msk [vmem:[%s258 + $0x38] sm:$0xff] %vm2222, %v2213
      %v2225 = vlaneseq
      %v2226 = vshrl.u32 %v2225, 7
      %v2227 = vsub.s32 0, %v2226
      %v2228 = vrot.slane %v267, %v2227
      %v2229 = vlaneseq
      %v2230 = vshrl.u32 %v2229, 7
      %v2231 = vsub.s32 1, %v2230
      %v2232 = vrot.slane %v267, %v2231
      %v2233 = vlaneseq
      %v2234 = vshrl.u32 %v2233, 7
      %v2235 = vsub.s32 2, %v2234
      %v2236 = vrot.slane %v267, %v2235
      %v2237 = vlaneseq
      %v2238 = vshrl.u32 %v2237, 7
      %v2239 = vsub.s32 3, %v2238
      %v2240 = vrot.slane %v267, %v2239
      %v2241 = vlaneseq
      %v2242 = vshrl.u32 %v2241, 7
      %v2243 = vsub.s32 4, %v2242
      %v2244 = vrot.slane %v267, %v2243
      %v2245 = vlaneseq
      %v2246 = vshrl.u32 %v2245, 7
      %v2247 = vsub.s32 5, %v2246
      %v2248 = vrot.slane %v267, %v2247
      %v2249 = vlaneseq
      %v2250 = vshrl.u32 %v2249, 7
      %v2251 = vsub.s32 6, %v2250
      %v2252 = vrot.slane %v267, %v2251
      %v2253 = vlaneseq
      %v2254 = vshrl.u32 %v2253, 7
      %v2255 = vsub.s32 7, %v2254
      %v2256 = vrot.slane %v267, %v2255
      %v2265 = vmul.f32 %v1998, %v2228
      %v2266 = vmul.f32 %v2000, %v2232
      %v2267 = vmul.f32 %v2069, %v2236
      %v2268 = vmul.f32 %v2071, %v2240
      %v2269 = vmul.f32 %v2140, %v2244
      %v2270 = vmul.f32 %v2142, %v2248
      %v2271 = vmul.f32 %v2211, %v2252
      %v2272 = vmul.f32 %v2213, %v2256
      %v2273 = vadd.f32 %v2265, %v2266
      %v2274 = vadd.f32 %v2273, %v2267
      %v2275 = vadd.f32 %v2274, %v2268
      %v2276 = vadd.f32 %v2275, %v2269
      %v2277 = vadd.f32 %v2276, %v2270
      %v2278 = vadd.f32 %v2277, %v2271
      %v2279 = vsel %vm2222, %v2272, 0.0
      %v2280 = vadd.f32 %v2278, %v2279
      %2281 = vadd.xlane.f32.xlu0 %v2280
      %v2282 = vpop.xlane.xlu0 %2281
      %v2283 = vmul.f32 %v2265, %v1998
      %v2284 = vmul.f32 %v2266, %v2000
      %v2285 = vmul.f32 %v2267, %v2069
      %v2286 = vmul.f32 %v2268, %v2071
      %v2287 = vmul.f32 %v2269, %v2140
      %v2288 = vmul.f32 %v2270, %v2142
      %v2289 = vmul.f32 %v2271, %v2211
      %v2290 = vmul.f32 %v2272, %v2213
      %v2291 = vadd.f32 %v2283, %v2284
      %v2292 = vadd.f32 %v2291, %v2285
      %v2293 = vadd.f32 %v2292, %v2286
      %v2294 = vadd.f32 %v2293, %v2287
      %v2295 = vadd.f32 %v2294, %v2288
      %v2296 = vadd.f32 %v2295, %v2289
      %v2297 = vsel %vm2222, %v2290, 0.0
      %v2298 = vadd.f32 %v2296, %v2297
      %2299 = vadd.xlane.f32.xlu0 %v2298
      %v2300 = vpop.xlane.xlu0 %2299
      %vm2301 = vcmask 7168
      %v2302 = vsel %vm2301, %v2282, %v2300
      %vm2303 = vcmask 15360
      %2304 = vst.msk [vmem:[%s262] sm:$0xff] %vm2303, %v2302
      %p2305 = scmp.lt.s32.totalorder %s18, 1
      %s2306 = scalar_select %p2305, %s18, 1
      %s2307 = smul.addr %s2306, 8
      %s2308 = smul.addr %s2307, 8
      %s2309 = scalar_lea.vmem %s5, %s2308
      %p2310 = scmp.lt.s32.totalorder %s18, 1
      %s2311 = scalar_select %p2310, %s18, 1
      %s2312 = smul.addr %s2311, 8
      %s2313 = scalar_lea.vmem %s6, %s2312
      // Predicated region
      $region41: #{double_conv3d_forward.3} parent=39 // pred_check
        %p2314 = pneg %p146
      $region42: #{double_conv3d_forward.3} parent=39 // pred_check_branch
        %2316 = sbr.rel (%p2314) target = $region44
      $region43: #{double_conv3d_forward.3} parent=39 // pred_region
        _
      $region44: #{double_conv3d_forward.3} parent=39 // pred_fallthru
        _
      // Predicated region
      $region45: #{double_conv3d_forward.3} parent=39 // pred_check
        %p2317 = pneg %p172
      $region46: #{double_conv3d_forward.3} parent=39 // pred_check_branch
        %2319 = sbr.rel (%p2317) target = $region48
      $region47: #{double_conv3d_forward.3} parent=39 // pred_region
        _
      $region48: #{double_conv3d_forward.3} parent=39 // pred_fallthru
        _
    $region40: #{double_conv3d_forward.3} parent=5 // pred_fallthru
      _
    %p2320 = scmp.le.s32.totalorder 2, %s13
    // Predicated region
    $region49: #{double_conv3d_forward.3} parent=5 // pred_check
      %p2321 = pneg %p2320
    $region50: #{double_conv3d_forward.3} parent=5 // pred_check_branch
      %2323 = sbr.rel (%p2321) target = $region52
    $region51: #{double_conv3d_forward.3} parent=5 // pred_region
      %s2324 = ssub.s32 %s13, 2
      // Predicated region
      $region53: #{double_conv3d_forward.3} parent=51 // pred_check
        %p2325 = pneg %p152
      $region54: #{double_conv3d_forward.3} parent=51 // pred_check_branch
        %2327 = sbr.rel (%p2325) target = $region56
      $region55: #{double_conv3d_forward.3} parent=51 // pred_region
        %p2328 = scmp.lt.s32.totalorder %s19, 1
        %s2329 = scalar_select %p2328, %s19, 1
        %s2330 = smul.addr %s2329, 8
        %s2331 = smul.addr %s2330, 8
        %s2332 = scalar_lea.vmem %s5, %s2331
      $region56: #{double_conv3d_forward.3} parent=51 // pred_fallthru
        _
      // Predicated region
      $region57: #{double_conv3d_forward.3} parent=51 // pred_check
        %p2333 = pneg %p178
      $region58: #{double_conv3d_forward.3} parent=51 // pred_check_branch
        %2335 = sbr.rel (%p2333) target = $region60
      $region59: #{double_conv3d_forward.3} parent=51 // pred_region
        %p2336 = scmp.lt.s32.totalorder %s19, 1
        %s2337 = scalar_select %p2336, %s19, 1
        %s2338 = smul.addr %s2337, 8
        %s2339 = scalar_lea.vmem %s6, %s2338
      $region60: #{double_conv3d_forward.3} parent=51 // pred_fallthru
        _
    $region52: #{double_conv3d_forward.3} parent=5 // pred_fallthru
      _
  $region6: #{double_conv3d_forward.3} parent=0 // loop_footer
    %s17 = sadd.s32 1, %s13
  $region7: #{double_conv3d_forward.3} parent=0 // loop_footer_branch
    %12 = sbr.rel target = $region3
  $region8: #{double_conv3d_forward.3} parent=0 // loop_exit
    _

// kernel: double_conv3d_forward.4
$region0: #{double_conv3d_forward.4}
  #allocation0 [shape = 'u32[]', space=smem, size = 0x4, offset = 0x4, fixed_abs, tag = 'smem constant byte address 0x4 - core index']
  #allocation1 [shape = 'u32[144,128]{1,0:T(1,128)}', space=vmem, size = 0x12000, scoped, tag = 'internal scratch']
  #allocation2 [shape = 'f32[8,1222]{1,0:T(8,128)}', space=vmem, size = 0xa000, scoped, tag = 'scratch operand']
  #allocation3 [shape = 'f32[216,1000]{1,0:T(8,128)}', space=vmem, size = 0xd8000, scoped, tag = 'scratch operand']
  %s0 = inlined_call_operand.vmem [shape: f32[2,8,1000], index: 0, kind: input, shape index: {}]
  %s1 = inlined_call_operand.vmem [shape: f32[8,1], index: 1, kind: input, shape index: {}]
  %s2 = inlined_call_operand.vmem [shape: f32[8,1], index: 2, kind: input, shape index: {}]
  %s3 = inlined_call_operand.vmem [shape: f32[1,1000], index: 3, kind: input, shape index: {}]
  %s4 = inlined_call_operand.vmem [shape: f32[8,216], index: 4, kind: input, shape index: {}]
  %s5 = inlined_call_operand.vmem [shape: f32[2,8,1000], index: 5, kind: output, shape index: {0}]
  %s6 = inlined_call_operand.vmem [shape: f32[2,8,2], index: 6, kind: output, shape index: {1}]
  %7 = xla_tuple %s5, %s6
  %s8 = sld [smem:[#allocation0]]
  $region61: #{double_conv3d_forward.4} parent=0
    _
  %s10 = ssub.s32 1, %s8
  %s11 = scalar_select 0, %s10, %s8
  loop: start=0, step=1, limit=4
  $region2: #{double_conv3d_forward.4} parent=0 // loop_pre_header
    _
  $region3: #{double_conv3d_forward.4} parent=0 // loop_header
    %s13 = sphi 0, %s17
    %p14 = scmp.ge.s32.totalorder %s13, 4
    %s23 = sphi 0, %s25
    %s26 = sphi 0, %s23
    %s27 = sphi 0, %s26
    %s43 = sphi 0, %s27
    %s47 = sphi 0, %s47
    %s49 = sphi 0, %s47
    %s50 = sphi 0, %s49
    %s64 = sphi 0, %s50
    %s68 = sphi 0, %s68
    %s70 = sphi 0, %s68
    %s71 = sphi 0, %s70
    %s85 = sphi 0, %s71
    %s89 = sphi 0, %s89
    %s91 = sphi 0, %s89
    %s92 = sphi 0, %s91
    %s106 = sphi 0, %s92
    %s110 = sphi 0, %s110
    %s112 = sphi 0, %s110
    %s113 = sphi 0, %s112
    %s127 = sphi 0, %s113
    %s133 = sphi 0, %s135
    %s136 = sphi 0, %s133
    %s137 = sphi 0, %s136
    %s153 = sphi 0, %s137
    %s159 = sphi 0, %s161
    %s162 = sphi 0, %s159
    %s163 = sphi 0, %s162
    %s179 = sphi 0, %s163
  $region4: #{double_conv3d_forward.4} parent=0 // loop_header_branch
    %16 = sbr.rel (%p14) target = $region8
  $region5: #{double_conv3d_forward.4} parent=0 // loop_body
    %s18 = ssub.s32 %s13, 1
    %s19 = ssub.s32 %s13, 2
    %s20 = sadd.s32 %s13, 1
    %s21 = ssub.s32 %s13, %s20
    %p22 = scmp.eq.s32.totalorder %s21, 0
    %s24 = sadd.s32 %s23, 1
    %s25 = scalar_select %p22, %s23, %s24
    %p28 = pneg %p22
    %p29 = scmp.eq.s32.totalorder %s13, 1
    %p30 = por %p28, %p29
    %p31 = scmp.ne.s32.totalorder %s23, %s26
    %p32 = scmp.eq.s32.totalorder %s13, 0
    %p33 = por %p31, %p32
    %p34 = scmp.ne.s32.totalorder %s23, %s26
    %p35 = scmp.eq.s32.totalorder %s18, 1
    %p36 = por %p34, %p35
    %p37 = scmp.ne.s32.totalorder %s26, %s27
    %p38 = scmp.eq.s32.totalorder %s18, 0
    %p39 = por %p37, %p38
    %p40 = scmp.ne.s32.totalorder %s26, %s27
    %p41 = scmp.eq.s32.totalorder %s19, 1
    %p42 = por %p40, %p41
    %p44 = scmp.ne.s32.totalorder %s27, %s43
    %p45 = scmp.eq.s32.totalorder %s19, 0
    %p46 = por %p44, %p45
    %s48 = sadd.s32 %s47, 1
    %p51 = scmp.eq.s32.totalorder %s13, 1
    %p52 = scmp.ne.s32.totalorder %s47, %s49
    %p53 = scmp.eq.s32.totalorder %s13, 0
    %p54 = por %p52, %p53
    %p55 = scmp.ne.s32.totalorder %s47, %s49
    %p56 = scmp.eq.s32.totalorder %s18, 1
    %p57 = por %p55, %p56
    %p58 = scmp.ne.s32.totalorder %s49, %s50
    %p59 = scmp.eq.s32.totalorder %s18, 0
    %p60 = por %p58, %p59
    %p61 = scmp.ne.s32.totalorder %s49, %s50
    %p62 = scmp.eq.s32.totalorder %s19, 1
    %p63 = por %p61, %p62
    %p65 = scmp.ne.s32.totalorder %s50, %s64
    %p66 = scmp.eq.s32.totalorder %s19, 0
    %p67 = por %p65, %p66
    %s69 = sadd.s32 %s68, 1
    %p72 = scmp.eq.s32.totalorder %s13, 1
    %p73 = scmp.ne.s32.totalorder %s68, %s70
    %p74 = scmp.eq.s32.totalorder %s13, 0
    %p75 = por %p73, %p74
    %p76 = scmp.ne.s32.totalorder %s68, %s70
    %p77 = scmp.eq.s32.totalorder %s18, 1
    %p78 = por %p76, %p77
    %p79 = scmp.ne.s32.totalorder %s70, %s71
    %p80 = scmp.eq.s32.totalorder %s18, 0
    %p81 = por %p79, %p80
    %p82 = scmp.ne.s32.totalorder %s70, %s71
    %p83 = scmp.eq.s32.totalorder %s19, 1
    %p84 = por %p82, %p83
    %p86 = scmp.ne.s32.totalorder %s71, %s85
    %p87 = scmp.eq.s32.totalorder %s19, 0
    %p88 = por %p86, %p87
    %s90 = sadd.s32 %s89, 1
    %p93 = scmp.eq.s32.totalorder %s13, 1
    %p94 = scmp.ne.s32.totalorder %s89, %s91
    %p95 = scmp.eq.s32.totalorder %s13, 0
    %p96 = por %p94, %p95
    %p97 = scmp.ne.s32.totalorder %s89, %s91
    %p98 = scmp.eq.s32.totalorder %s18, 1
    %p99 = por %p97, %p98
    %p100 = scmp.ne.s32.totalorder %s91, %s92
    %p101 = scmp.eq.s32.totalorder %s18, 0
    %p102 = por %p100, %p101
    %p103 = scmp.ne.s32.totalorder %s91, %s92
    %p104 = scmp.eq.s32.totalorder %s19, 1
    %p105 = por %p103, %p104
    %p107 = scmp.ne.s32.totalorder %s92, %s106
    %p108 = scmp.eq.s32.totalorder %s19, 0
    %p109 = por %p107, %p108
    %s111 = sadd.s32 %s110, 1
    %p114 = scmp.eq.s32.totalorder %s13, 1
    %p115 = scmp.ne.s32.totalorder %s110, %s112
    %p116 = scmp.eq.s32.totalorder %s13, 0
    %p117 = por %p115, %p116
    %p118 = scmp.ne.s32.totalorder %s110, %s112
    %p119 = scmp.eq.s32.totalorder %s18, 1
    %p120 = por %p118, %p119
    %p121 = scmp.ne.s32.totalorder %s112, %s113
    %p122 = scmp.eq.s32.totalorder %s18, 0
    %p123 = por %p121, %p122
    %p124 = scmp.ne.s32.totalorder %s112, %s113
    %p125 = scmp.eq.s32.totalorder %s19, 1
    %p126 = por %p124, %p125
    %p128 = scmp.ne.s32.totalorder %s113, %s127
    %p129 = scmp.eq.s32.totalorder %s19, 0
    %p130 = por %p128, %p129
    %s131 = ssub.s32 %s13, %s20
    %p132 = scmp.eq.s32.totalorder %s131, 0
    %s134 = sadd.s32 %s133, 1
    %s135 = scalar_select %p132, %s133, %s134
    %p138 = pneg %p132
    %p139 = scmp.eq.s32.totalorder %s13, 1
    %p140 = por %p138, %p139
    %p141 = scmp.ne.s32.totalorder %s133, %s136
    %p142 = scmp.eq.s32.totalorder %s13, 0
    %p143 = por %p141, %p142
    %p144 = scmp.ne.s32.totalorder %s133, %s136
    %p145 = scmp.eq.s32.totalorder %s18, 1
    %p146 = por %p144, %p145
    %p147 = scmp.ne.s32.totalorder %s136, %s137
    %p148 = scmp.eq.s32.totalorder %s18, 0
    %p149 = por %p147, %p148
    %p150 = scmp.ne.s32.totalorder %s136, %s137
    %p151 = scmp.eq.s32.totalorder %s19, 1
    %p152 = por %p150, %p151
    %p154 = scmp.ne.s32.totalorder %s137, %s153
    %p155 = scmp.eq.s32.totalorder %s19, 0
    %p156 = por %p154, %p155
    %s157 = ssub.s32 %s13, %s20
    %p158 = scmp.eq.s32.totalorder %s157, 0
    %s160 = sadd.s32 %s159, 1
    %s161 = scalar_select %p158, %s159, %s160
    %p164 = pneg %p158
    %p165 = scmp.eq.s32.totalorder %s13, 1
    %p166 = por %p164, %p165
    %p167 = scmp.ne.s32.totalorder %s159, %s162
    %p168 = scmp.eq.s32.totalorder %s13, 0
    %p169 = por %p167, %p168
    %p170 = scmp.ne.s32.totalorder %s159, %s162
    %p171 = scmp.eq.s32.totalorder %s18, 1
    %p172 = por %p170, %p171
    %p173 = scmp.ne.s32.totalorder %s162, %s163
    %p174 = scmp.eq.s32.totalorder %s18, 0
    %p175 = por %p173, %p174
    %p176 = scmp.ne.s32.totalorder %s162, %s163
    %p177 = scmp.eq.s32.totalorder %s19, 1
    %p178 = por %p176, %p177
    %p180 = scmp.ne.s32.totalorder %s163, %s179
    %p181 = scmp.eq.s32.totalorder %s19, 0
    %p182 = por %p180, %p181
    %p183 = scmp.le.s32.totalorder 1, %s13
    %p184 = scmp.lt.s32.totalorder %s13, 3
    %p185 = pnand %p183, %p184
    %p186 = pneg %p185
    // Predicated region
    $region9: #{double_conv3d_forward.4} parent=5 // pred_check
      _
    $region10: #{double_conv3d_forward.4} parent=5 // pred_check_branch
      %188 = sbr.rel (%p185) target = $region12
    $region11: #{double_conv3d_forward.4} parent=5 // pred_region
      %s189 = ssub.s32 %s13, 1
      // Predicated region
      $region13: #{double_conv3d_forward.4} parent=11 // pred_check
        %p190 = pneg %p60
      $region14: #{double_conv3d_forward.4} parent=11 // pred_check_branch
        %192 = sbr.rel (%p190) target = $region16
      $region15: #{double_conv3d_forward.4} parent=11 // pred_region
        _
      $region16: #{double_conv3d_forward.4} parent=11 // pred_fallthru
        _
      // Predicated region
      $region17: #{double_conv3d_forward.4} parent=11 // pred_check
        %p193 = pneg %p81
      $region18: #{double_conv3d_forward.4} parent=11 // pred_check_branch
        %195 = sbr.rel (%p193) target = $region20
      $region19: #{double_conv3d_forward.4} parent=11 // pred_region
        _
      $region20: #{double_conv3d_forward.4} parent=11 // pred_fallthru
        _
      // Predicated region
      $region21: #{double_conv3d_forward.4} parent=11 // pred_check
        %p196 = pneg %p102
      $region22: #{double_conv3d_forward.4} parent=11 // pred_check_branch
        %198 = sbr.rel (%p196) target = $region24
      $region23: #{double_conv3d_forward.4} parent=11 // pred_region
        _
      $region24: #{double_conv3d_forward.4} parent=11 // pred_fallthru
        _
      // Predicated region
      $region25: #{double_conv3d_forward.4} parent=11 // pred_check
        %p199 = pneg %p123
      $region26: #{double_conv3d_forward.4} parent=11 // pred_check_branch
        %201 = sbr.rel (%p199) target = $region28
      $region27: #{double_conv3d_forward.4} parent=11 // pred_region
        _
      $region28: #{double_conv3d_forward.4} parent=11 // pred_fallthru
        _
    $region12: #{double_conv3d_forward.4} parent=5 // pred_fallthru
      _
    %p202 = scmp.lt.s32.totalorder %s13, 2
    // Predicated region
    $region29: #{double_conv3d_forward.4} parent=5 // pred_check
      %p203 = pneg %p202
    $region30: #{double_conv3d_forward.4} parent=5 // pred_check_branch
      %205 = sbr.rel (%p203) target = $region32
    $region31: #{double_conv3d_forward.4} parent=5 // pred_region
      // Predicated region
      $region33: #{double_conv3d_forward.4} parent=31 // pred_check
        %p206 = pneg %p33
      $region34: #{double_conv3d_forward.4} parent=31 // pred_check_branch
        %208 = sbr.rel (%p206) target = $region36
      $region35: #{double_conv3d_forward.4} parent=31 // pred_region
        %p209 = scmp.lt.s32.totalorder %s13, 1
        %s210 = scalar_select %p209, %s13, 1
        %s211 = smul.addr %s210, 8
        %s212 = smul.addr %s211, 8
        %s213 = scalar_lea.vmem %s0, %s212
      $region36: #{double_conv3d_forward.4} parent=31 // pred_fallthru
        _
    $region32: #{double_conv3d_forward.4} parent=5 // pred_fallthru
      _
    %p214 = scmp.le.s32.totalorder 1, %s13
    %p215 = scmp.lt.s32.totalorder %s13, 3
    %p216 = pnand %p214, %p215
    %p217 = pneg %p216
    // Predicated region
    $region37: #{double_conv3d_forward.4} parent=5 // pred_check
      _
    $region38: #{double_conv3d_forward.4} parent=5 // pred_check_branch
      %219 = sbr.rel (%p216) target = $region40
    $region39: #{double_conv3d_forward.4} parent=5 // pred_region
      %s220 = ssub.s32 %s13, 1
      %p221 = scmp.lt.s32.totalorder %s18, 1
      %s222 = scalar_select %p221, %s18, 1
      %s223 = smul.addr %s222, 8
      %s224 = smul.addr %s223, 8
      %s225 = scalar_lea.vmem %s0, %s224
      %p226 = pneg %p39
      %p227 = pneg %p36
      %p228 = pneg %p60
      %p229 = pneg %p57
      %p230 = pneg %p81
      %p231 = pneg %p78
      %p232 = pneg %p102
      %p233 = pneg %p99
      %p234 = pneg %p123
      %p235 = pneg %p120
      %p236 = pneg %p149
      %p237 = pneg %p146
      %p238 = scmp.lt.s32.totalorder %s18, 1
      %s239 = scalar_select %p238, %s18, 1
      %s240 = smul.addr %s239, 8
      %s241 = smul.addr %s240, 8
      %s242 = scalar_lea.vmem %s5, %s241
      %p243 = pneg %p175
      %p244 = pneg %p172
      %p245 = scmp.lt.s32.totalorder %s18, 1
      %s246 = scalar_select %p245, %s18, 1
      %s247 = smul.addr %s246, 8
      %s248 = scalar_lea.vmem %s6, %s247
      %p249 = scmp.lt.s32.totalorder %s18, 1
      %s250 = scalar_select %p249, %s18, 1
      %s251 = smul.addr %s250, 8
      %s252 = smul.addr %s251, 8
      %s253 = scalar_lea.vmem %s0, %s252
      %p254 = scmp.lt.s32.totalorder %s18, 1
      %s255 = scalar_select %p254, %s18, 1
      %s256 = smul.addr %s255, 8
      %s257 = smul.addr %s256, 8
      %s258 = scalar_lea.vmem %s5, %s257
      %p259 = scmp.lt.s32.totalorder %s18, 1
      %s260 = scalar_select %p259, %s18, 1
      %s261 = smul.addr %s260, 8
      %s262 = scalar_lea.vmem %s6, %s261
      %v263 = vld [vmem:[%s253] sm:$0xff]
      %v264 = vld [vmem:[%s253 + $0x8] sm:$0xff]
      %v265 = vld [vmem:[%s253 + $0x10] sm:$0xff]
      %v266 = vld [vmem:[%s253 + $0x18] sm:$0xff]
      %v267 = vld [vmem:[%s253 + $0x20] sm:$0xff]
      %v268 = vld [vmem:[%s253 + $0x28] sm:$0xff]
      %v269 = vld [vmem:[%s253 + $0x30] sm:$0xff]
      %v270 = vld [vmem:[%s253 + $0x38] sm:$0xff]
      %v271 = vld [vmem:[%s3] sm:$0xff]
      %v272 = vld [vmem:[%s1] sm:$0xff]
      %274 = vset.pattern.permute.xlu0 0
      %275 = vperm.xlu0 %274, %v272
      %v276 = vpop.permute.xlu0 %275
      %v278 = vmul.f32 %v263, %v276
      %v279 = vmul.f32 %v264, %v276
      %v280 = vmul.f32 %v265, %v276
      %v281 = vmul.f32 %v266, %v276
      %v282 = vmul.f32 %v267, %v276
      %v283 = vmul.f32 %v268, %v276
      %v284 = vmul.f32 %v269, %v276
      %v285 = vmul.f32 %v270, %v276
      %v286 = vld [vmem:[%s2] sm:$0xff]
      %288 = vset.pattern.permute.xlu0 0
      %289 = vperm.xlu0 %288, %v286
      %v290 = vpop.permute.xlu0 %289
      %v292 = vadd.f32 %v278, %v290
      %v293 = vadd.f32 %v279, %v290
      %v294 = vadd.f32 %v280, %v290
      %v295 = vadd.f32 %v281, %v290
      %v296 = vadd.f32 %v282, %v290
      %v297 = vadd.f32 %v283, %v290
      %v298 = vadd.f32 %v284, %v290
      %v299 = vadd.f32 %v285, %v290
      %v300 = vmax.f32 %v292, 0.0
      %v301 = vmax.f32 %v293, 0.0
      %v302 = vmax.f32 %v294, 0.0
      %v303 = vmax.f32 %v295, 0.0
      %v304 = vmax.f32 %v296, 0.0
      %v305 = vmax.f32 %v297, 0.0
      %v306 = vmax.f32 %v298, 0.0
      %v307 = vmax.f32 %v299, 0.0
      %v309 = vlaneseq
      %v310 = vshrl.u32 %v309, 7
      %v311 = vsub.s32 0, %v310
      %v312 = vrot.slane %v271, %v311
      %v313 = vlaneseq
      %v314 = vshrl.u32 %v313, 7
      %v315 = vsub.s32 1, %v314
      %v316 = vrot.slane %v271, %v315
      %v317 = vlaneseq
      %v318 = vshrl.u32 %v317, 7
      %v319 = vsub.s32 2, %v318
      %v320 = vrot.slane %v271, %v319
      %v321 = vlaneseq
      %v322 = vshrl.u32 %v321, 7
      %v323 = vsub.s32 3, %v322
      %v324 = vrot.slane %v271, %v323
      %v325 = vlaneseq
      %v326 = vshrl.u32 %v325, 7
      %v327 = vsub.s32 4, %v326
      %v328 = vrot.slane %v271, %v327
      %v329 = vlaneseq
      %v330 = vshrl.u32 %v329, 7
      %v331 = vsub.s32 5, %v330
      %v332 = vrot.slane %v271, %v331
      %v333 = vlaneseq
      %v334 = vshrl.u32 %v333, 7
      %v335 = vsub.s32 6, %v334
      %v336 = vrot.slane %v271, %v335
      %v337 = vlaneseq
      %v338 = vshrl.u32 %v337, 7
      %v339 = vsub.s32 7, %v338
      %v340 = vrot.slane %v271, %v339
      %v349 = vmul.f32 %v300, %v312
      %v350 = vmul.f32 %v301, %v316
      %v351 = vmul.f32 %v302, %v320
      %v352 = vmul.f32 %v303, %v324
      %v353 = vmul.f32 %v304, %v328
      %v354 = vmul.f32 %v305, %v332
      %v355 = vmul.f32 %v306, %v336
      %v356 = vmul.f32 %v307, %v340
      %357 = vst [vmem:[#allocation2] sm:$0xff] 0.0
      %358 = vst [vmem:[#allocation2 + $0x8] sm:$0xff] 0.0
      %359 = vst [vmem:[#allocation2 + $0x10] sm:$0xff] 0.0
      %360 = vst [vmem:[#allocation2 + $0x18] sm:$0xff] 0.0
      %361 = vst [vmem:[#allocation2 + $0x20] sm:$0xff] 0.0
      %362 = vst [vmem:[#allocation2 + $0x28] sm:$0xff] 0.0
      %363 = vst [vmem:[#allocation2 + $0x30] sm:$0xff] 0.0
      %364 = vst [vmem:[#allocation2 + $0x38] sm:$0xff] 0.0
      %365 = vst [vmem:[#allocation2 + $0x40] sm:$0xff] 0.0
      %vm366 = vcmask 572416
      %367 = vst.msk [vmem:[#allocation2 + $0x48] sm:$0xff] %vm366, 0.0
      %376 = vrot.lane.b32.xlu0 %v349, 111
      %v377 = vpop.permute.xlu0 %376
      %378 = vrot.lane.b32.xlu0 %v350, 111
      %v379 = vpop.permute.xlu0 %378
      %380 = vrot.lane.b32.xlu0 %v351, 111
      %v381 = vpop.permute.xlu0 %380
      %382 = vrot.lane.b32.xlu0 %v352, 111
      %v383 = vpop.permute.xlu0 %382
      %384 = vrot.lane.b32.xlu0 %v353, 111
      %v385 = vpop.permute.xlu0 %384
      %386 = vrot.lane.b32.xlu0 %v354, 111
      %v387 = vpop.permute.xlu0 %386
      %388 = vrot.lane.b32.xlu0 %v355, 111
      %v389 = vpop.permute.xlu0 %388
      %390 = vrot.lane.b32.xlu0 %v356, 111
      %v391 = vpop.permute.xlu0 %390
      %vm392 = vcmask 908288
      %v393 = vsel %vm392, %v377, %v379
      %v394 = vsel %vm392, %v379, %v381
      %v395 = vsel %vm392, %v381, %v383
      %v396 = vsel %vm392, %v383, %v385
      %v397 = vsel %vm392, %v385, %v387
      %v398 = vsel %vm392, %v387, %v389
      %v399 = vsel %vm392, %v389, %v391
      %vm409 = vcmask 1048440
      %410 = vst.msk [vmem:[#allocation2] sm:$0xff] %vm409, %v377
      %411 = vst [vmem:[#allocation2 + $0x8] sm:$0xff] %v393
      %412 = vst [vmem:[#allocation2 + $0x10] sm:$0xff] %v394
      %413 = vst [vmem:[#allocation2 + $0x18] sm:$0xff] %v395
      %414 = vst [vmem:[#allocation2 + $0x20] sm:$0xff] %v396
      %415 = vst [vmem:[#allocation2 + $0x28] sm:$0xff] %v397
      %416 = vst [vmem:[#allocation2 + $0x30] sm:$0xff] %v398
      %417 = vst [vmem:[#allocation2 + $0x38] sm:$0xff] %v399
      %vm418 = vcmask 711680
      %419 = vst.msk [vmem:[#allocation2 + $0x40] sm:$0xff] %vm418, %v391
      %v420 = vld [vmem:[#allocation2] sm:$0xff]
      %v421 = vld [vmem:[#allocation2 + $0x8] sm:$0xff]
      %v422 = vld [vmem:[#allocation2 + $0x10] sm:$0xff]
      %v423 = vld [vmem:[#allocation2 + $0x18] sm:$0xff]
      %v424 = vld [vmem:[#allocation2 + $0x20] sm:$0xff]
      %v425 = vld [vmem:[#allocation2 + $0x28] sm:$0xff]
      %v426 = vld [vmem:[#allocation2 + $0x30] sm:$0xff]
      %v427 = vld [vmem:[#allocation2 + $0x38] sm:$0xff]
      %428 = vst [vmem:[#allocation3] sm:$0xff] %v420
      %429 = vst [vmem:[#allocation3 + $0x8] sm:$0xff] %v421
      %430 = vst [vmem:[#allocation3 + $0x10] sm:$0xff] %v422
      %431 = vst [vmem:[#allocation3 + $0x18] sm:$0xff] %v423
      %432 = vst [vmem:[#allocation3 + $0x20] sm:$0xff] %v424
      %433 = vst [vmem:[#allocation3 + $0x28] sm:$0xff] %v425
      %434 = vst [vmem:[#allocation3 + $0x30] sm:$0xff] %v426
      %vm435 = vcmask 850944
      %436 = vst.msk [vmem:[#allocation3 + $0x38] sm:$0xff] %vm435, %v427
      %v437 = vld [vmem:[#allocation2] sm:$0xff]
      %v438 = vld [vmem:[#allocation2 + $0x8] sm:$0xff]
      %v439 = vld [vmem:[#allocation2 + $0x10] sm:$0xff]
      %v440 = vld [vmem:[#allocation2 + $0x18] sm:$0xff]
      %v441 = vld [vmem:[#allocation2 + $0x20] sm:$0xff]
      %v442 = vld [vmem:[#allocation2 + $0x28] sm:$0xff]
      %v443 = vld [vmem:[#allocation2 + $0x30] sm:$0xff]
      %v444 = vld [vmem:[#allocation2 + $0x38] sm:$0xff]
      %453 = vrot.lane.b32.xlu0 %v437, 127
      %v454 = vpop.permute.xlu0 %453
      %455 = vrot.lane.b32.xlu0 %v438, 127
      %v456 = vpop.permute.xlu0 %455
      %457 = vrot.lane.b32.xlu0 %v439, 127
      %v458 = vpop.permute.xlu0 %457
      %459 = vrot.lane.b32.xlu0 %v440, 127
      %v460 = vpop.permute.xlu0 %459
      %461 = vrot.lane.b32.xlu0 %v441, 127
      %v462 = vpop.permute.xlu0 %461
      %463 = vrot.lane.b32.xlu0 %v442, 127
      %v464 = vpop.permute.xlu0 %463
      %465 = vrot.lane.b32.xlu0 %v443, 127
      %v466 = vpop.permute.xlu0 %465
      %467 = vrot.lane.b32.xlu0 %v444, 127
      %v468 = vpop.permute.xlu0 %467
      %vm469 = vcmask 1039360
      %v470 = vsel %vm469, %v454, %v456
      %v471 = vsel %vm469, %v456, %v458
      %v472 = vsel %vm469, %v458, %v460
      %v473 = vsel %vm469, %v460, %v462
      %v474 = vsel %vm469, %v462, %v464
      %v475 = vsel %vm469, %v464, %v466
      %v476 = vsel %vm469, %v466, %v468
      %485 = vst [vmem:[#allocation3 + $0x40] sm:$0xff] %v470
      %486 = vst [vmem:[#allocation3 + $0x48] sm:$0xff] %v471
      %487 = vst [vmem:[#allocation3 + $0x50] sm:$0xff] %v472
      %488 = vst [vmem:[#allocation3 + $0x58] sm:$0xff] %v473
      %489 = vst [vmem:[#allocation3 + $0x60] sm:$0xff] %v474
      %490 = vst [vmem:[#allocation3 + $0x68] sm:$0xff] %v475
      %491 = vst [vmem:[#allocation3 + $0x70] sm:$0xff] %v476
      %492 = vst.msk [vmem:[#allocation3 + $0x78] sm:$0xff] %vm435, %v468
      %v493 = vld [vmem:[#allocation2] sm:$0xff]
      %v494 = vld [vmem:[#allocation2 + $0x8] sm:$0xff]
      %v495 = vld [vmem:[#allocation2 + $0x10] sm:$0xff]
      %v496 = vld [vmem:[#allocation2 + $0x18] sm:$0xff]
      %v497 = vld [vmem:[#allocation2 + $0x20] sm:$0xff]
      %v498 = vld [vmem:[#allocation2 + $0x28] sm:$0xff]
      %v499 = vld [vmem:[#allocation2 + $0x30] sm:$0xff]
      %v500 = vld [vmem:[#allocation2 + $0x38] sm:$0xff]
      %509 = vrot.lane.b32.xlu0 %v493, 126
      %v510 = vpop.permute.xlu0 %509
      %511 = vrot.lane.b32.xlu0 %v494, 126
      %v512 = vpop.permute.xlu0 %511
      %513 = vrot.lane.b32.xlu0 %v495, 126
      %v514 = vpop.permute.xlu0 %513
      %515 = vrot.lane.b32.xlu0 %v496, 126
      %v516 = vpop.permute.xlu0 %515
      %517 = vrot.lane.b32.xlu0 %v497, 126
      %v518 = vpop.permute.xlu0 %517
      %519 = vrot.lane.b32.xlu0 %v498, 126
      %v520 = vpop.permute.xlu0 %519
      %521 = vrot.lane.b32.xlu0 %v499, 126
      %v522 = vpop.permute.xlu0 %521
      %523 = vrot.lane.b32.xlu0 %v500, 126
      %v524 = vpop.permute.xlu0 %523
      %vm525 = vcmask 1031168
      %v526 = vsel %vm525, %v510, %v512
      %v527 = vsel %vm525, %v512, %v514
      %v528 = vsel %vm525, %v514, %v516
      %v529 = vsel %vm525, %v516, %v518
      %v530 = vsel %vm525, %v518, %v520
      %v531 = vsel %vm525, %v520, %v522
      %v532 = vsel %vm525, %v522, %v524
      %541 = vst [vmem:[#allocation3 + $0x80] sm:$0xff] %v526
      %542 = vst [vmem:[#allocation3 + $0x88] sm:$0xff] %v527
      %543 = vst [vmem:[#allocation3 + $0x90] sm:$0xff] %v528
      %544 = vst [vmem:[#allocation3 + $0x98] sm:$0xff] %v529
      %545 = vst [vmem:[#allocation3 + $0xa0] sm:$0xff] %v530
      %546 = vst [vmem:[#allocation3 + $0xa8] sm:$0xff] %v531
      %547 = vst [vmem:[#allocation3 + $0xb0] sm:$0xff] %v532
      %548 = vst.msk [vmem:[#allocation3 + $0xb8] sm:$0xff] %vm435, %v524
      %v549 = vld [vmem:[#allocation2] sm:$0xff]
      %v550 = vld [vmem:[#allocation2 + $0x8] sm:$0xff]
      %v551 = vld [vmem:[#allocation2 + $0x10] sm:$0xff]
      %v552 = vld [vmem:[#allocation2 + $0x18] sm:$0xff]
      %v553 = vld [vmem:[#allocation2 + $0x20] sm:$0xff]
      %v554 = vld [vmem:[#allocation2 + $0x28] sm:$0xff]
      %v555 = vld [vmem:[#allocation2 + $0x30] sm:$0xff]
      %v556 = vld [vmem:[#allocation2 + $0x38] sm:$0xff]
      %565 = vrot.lane.b32.xlu0 %v549, 118
      %v566 = vpop.permute.xlu0 %565
      %567 = vrot.lane.b32.xlu0 %v550, 118
      %v568 = vpop.permute.xlu0 %567
      %569 = vrot.lane.b32.xlu0 %v551, 118
      %v570 = vpop.permute.xlu0 %569
      %571 = vrot.lane.b32.xlu0 %v552, 118
      %v572 = vpop.permute.xlu0 %571
      %573 = vrot.lane.b32.xlu0 %v553, 118
      %v574 = vpop.permute.xlu0 %573
      %575 = vrot.lane.b32.xlu0 %v554, 118
      %v576 = vpop.permute.xlu0 %575
      %577 = vrot.lane.b32.xlu0 %v555, 118
      %v578 = vpop.permute.xlu0 %577
      %579 = vrot.lane.b32.xlu0 %v556, 118
      %v580 = vpop.permute.xlu0 %579
      %vm581 = vcmask 965632
      %v582 = vsel %vm581, %v566, %v568
      %v583 = vsel %vm581, %v568, %v570
      %v584 = vsel %vm581, %v570, %v572
      %v585 = vsel %vm581, %v572, %v574
      %v586 = vsel %vm581, %v574, %v576
      %v587 = vsel %vm581, %v576, %v578
      %v588 = vsel %vm581, %v578, %v580
      %597 = vst [vmem:[#allocation3 + $0xc0] sm:$0xff] %v582
      %598 = vst [vmem:[#allocation3 + $0xc8] sm:$0xff] %v583
      %599 = vst [vmem:[#allocation3 + $0xd0] sm:$0xff] %v584
      %600 = vst [vmem:[#allocation3 + $0xd8] sm:$0xff] %v585
      %601 = vst [vmem:[#allocation3 + $0xe0] sm:$0xff] %v586
      %602 = vst [vmem:[#allocation3 + $0xe8] sm:$0xff] %v587
      %603 = vst [vmem:[#allocation3 + $0xf0] sm:$0xff] %v588
      %604 = vst.msk [vmem:[#allocation3 + $0xf8] sm:$0xff] %vm435, %v580
      %v605 = vld [vmem:[#allocation2] sm:$0xff]
      %v606 = vld [vmem:[#allocation2 + $0x8] sm:$0xff]
      %v607 = vld [vmem:[#allocation2 + $0x10] sm:$0xff]
      %v608 = vld [vmem:[#allocation2 + $0x18] sm:$0xff]
      %v609 = vld [vmem:[#allocation2 + $0x20] sm:$0xff]
      %v610 = vld [vmem:[#allocation2 + $0x28] sm:$0xff]
      %v611 = vld [vmem:[#allocation2 + $0x30] sm:$0xff]
      %v612 = vld [vmem:[#allocation2 + $0x38] sm:$0xff]
      %621 = vrot.lane.b32.xlu0 %v605, 117
      %v622 = vpop.permute.xlu0 %621
      %623 = vrot.lane.b32.xlu0 %v606, 117
      %v624 = vpop.permute.xlu0 %623
      %625 = vrot.lane.b32.xlu0 %v607, 117
      %v626 = vpop.permute.xlu0 %625
      %627 = vrot.lane.b32.xlu0 %v608, 117
      %v628 = vpop.permute.xlu0 %627
      %629 = vrot.lane.b32.xlu0 %v609, 117
      %v630 = vpop.permute.xlu0 %629
      %631 = vrot.lane.b32.xlu0 %v610, 117
      %v632 = vpop.permute.xlu0 %631
      %633 = vrot.lane.b32.xlu0 %v611, 117
      %v634 = vpop.permute.xlu0 %633
      %635 = vrot.lane.b32.xlu0 %v612, 117
      %v636 = vpop.permute.xlu0 %635
      %vm637 = vcmask 957440
      %v638 = vsel %vm637, %v622, %v624
      %v639 = vsel %vm637, %v624, %v626
      %v640 = vsel %vm637, %v626, %v628
      %v641 = vsel %vm637, %v628, %v630
      %v642 = vsel %vm637, %v630, %v632
      %v643 = vsel %vm637, %v632, %v634
      %v644 = vsel %vm637, %v634, %v636
      %653 = vst [vmem:[#allocation3 + $0x100] sm:$0xff] %v638
      %654 = vst [vmem:[#allocation3 + $0x108] sm:$0xff] %v639
      %655 = vst [vmem:[#allocation3 + $0x110] sm:$0xff] %v640
      %656 = vst [vmem:[#allocation3 + $0x118] sm:$0xff] %v641
      %657 = vst [vmem:[#allocation3 + $0x120] sm:$0xff] %v642
      %658 = vst [vmem:[#allocation3 + $0x128] sm:$0xff] %v643
      %659 = vst [vmem:[#allocation3 + $0x130] sm:$0xff] %v644
      %660 = vst.msk [vmem:[#allocation3 + $0x138] sm:$0xff] %vm435, %v636
      %v661 = vld [vmem:[#allocation2] sm:$0xff]
      %v662 = vld [vmem:[#allocation2 + $0x8] sm:$0xff]
      %v663 = vld [vmem:[#allocation2 + $0x10] sm:$0xff]
      %v664 = vld [vmem:[#allocation2 + $0x18] sm:$0xff]
      %v665 = vld [vmem:[#allocation2 + $0x20] sm:$0xff]
      %v666 = vld [vmem:[#allocation2 + $0x28] sm:$0xff]
      %v667 = vld [vmem:[#allocation2 + $0x30] sm:$0xff]
      %v668 = vld [vmem:[#allocation2 + $0x38] sm:$0xff]
      %677 = vrot.lane.b32.xlu0 %v661, 116
      %v678 = vpop.permute.xlu0 %677
      %679 = vrot.lane.b32.xlu0 %v662, 116
      %v680 = vpop.permute.xlu0 %679
      %681 = vrot.lane.b32.xlu0 %v663, 116
      %v682 = vpop.permute.xlu0 %681
      %683 = vrot.lane.b32.xlu0 %v664, 116
      %v684 = vpop.permute.xlu0 %683
      %685 = vrot.lane.b32.xlu0 %v665, 116
      %v686 = vpop.permute.xlu0 %685
      %687 = vrot.lane.b32.xlu0 %v666, 116
      %v688 = vpop.permute.xlu0 %687
      %689 = vrot.lane.b32.xlu0 %v667, 116
      %v690 = vpop.permute.xlu0 %689
      %691 = vrot.lane.b32.xlu0 %v668, 116
      %v692 = vpop.permute.xlu0 %691
      %vm693 = vcmask 949248
      %v694 = vsel %vm693, %v678, %v680
      %v695 = vsel %vm693, %v680, %v682
      %v696 = vsel %vm693, %v682, %v684
      %v697 = vsel %vm693, %v684, %v686
      %v698 = vsel %vm693, %v686, %v688
      %v699 = vsel %vm693, %v688, %v690
      %v700 = vsel %vm693, %v690, %v692
      %709 = vst [vmem:[#allocation3 + $0x140] sm:$0xff] %v694
      %710 = vst [vmem:[#allocation3 + $0x148] sm:$0xff] %v695
      %711 = vst [vmem:[#allocation3 + $0x150] sm:$0xff] %v696
      %712 = vst [vmem:[#allocation3 + $0x158] sm:$0xff] %v697
      %713 = vst [vmem:[#allocation3 + $0x160] sm:$0xff] %v698
      %714 = vst [vmem:[#allocation3 + $0x168] sm:$0xff] %v699
      %715 = vst [vmem:[#allocation3 + $0x170] sm:$0xff] %v700
      %716 = vst.msk [vmem:[#allocation3 + $0x178] sm:$0xff] %vm435, %v692
      %v717 = vld [vmem:[#allocation2] sm:$0xff]
      %v718 = vld [vmem:[#allocation2 + $0x8] sm:$0xff]
      %v719 = vld [vmem:[#allocation2 + $0x10] sm:$0xff]
      %v720 = vld [vmem:[#allocation2 + $0x18] sm:$0xff]
      %v721 = vld [vmem:[#allocation2 + $0x20] sm:$0xff]
      %v722 = vld [vmem:[#allocation2 + $0x28] sm:$0xff]
      %v723 = vld [vmem:[#allocation2 + $0x30] sm:$0xff]
      %v724 = vld [vmem:[#allocation2 + $0x38] sm:$0xff]
      %733 = vrot.lane.b32.xlu0 %v717, 108
      %v734 = vpop.permute.xlu0 %733
      %735 = vrot.lane.b32.xlu0 %v718, 108
      %v736 = vpop.permute.xlu0 %735
      %737 = vrot.lane.b32.xlu0 %v719, 108
      %v738 = vpop.permute.xlu0 %737
      %739 = vrot.lane.b32.xlu0 %v720, 108
      %v740 = vpop.permute.xlu0 %739
      %741 = vrot.lane.b32.xlu0 %v721, 108
      %v742 = vpop.permute.xlu0 %741
      %743 = vrot.lane.b32.xlu0 %v722, 108
      %v744 = vpop.permute.xlu0 %743
      %745 = vrot.lane.b32.xlu0 %v723, 108
      %v746 = vpop.permute.xlu0 %745
      %747 = vrot.lane.b32.xlu0 %v724, 108
      %v748 = vpop.permute.xlu0 %747
      %vm749 = vcmask 883712
      %v750 = vsel %vm749, %v734, %v736
      %v751 = vsel %vm749, %v736, %v738
      %v752 = vsel %vm749, %v738, %v740
      %v753 = vsel %vm749, %v740, %v742
      %v754 = vsel %vm749, %v742, %v744
      %v755 = vsel %vm749, %v744, %v746
      %v756 = vsel %vm749, %v746, %v748
      %765 = vst [vmem:[#allocation3 + $0x180] sm:$0xff] %v750
      %766 = vst [vmem:[#allocation3 + $0x188] sm:$0xff] %v751
      %767 = vst [vmem:[#allocation3 + $0x190] sm:$0xff] %v752
      %768 = vst [vmem:[#allocation3 + $0x198] sm:$0xff] %v753
      %769 = vst [vmem:[#allocation3 + $0x1a0] sm:$0xff] %v754
      %770 = vst [vmem:[#allocation3 + $0x1a8] sm:$0xff] %v755
      %771 = vst [vmem:[#allocation3 + $0x1b0] sm:$0xff] %v756
      %772 = vst.msk [vmem:[#allocation3 + $0x1b8] sm:$0xff] %vm435, %v748
      %v773 = vld [vmem:[#allocation2] sm:$0xff]
      %v774 = vld [vmem:[#allocation2 + $0x8] sm:$0xff]
      %v775 = vld [vmem:[#allocation2 + $0x10] sm:$0xff]
      %v776 = vld [vmem:[#allocation2 + $0x18] sm:$0xff]
      %v777 = vld [vmem:[#allocation2 + $0x20] sm:$0xff]
      %v778 = vld [vmem:[#allocation2 + $0x28] sm:$0xff]
      %v779 = vld [vmem:[#allocation2 + $0x30] sm:$0xff]
      %v780 = vld [vmem:[#allocation2 + $0x38] sm:$0xff]
      %789 = vrot.lane.b32.xlu0 %v773, 107
      %v790 = vpop.permute.xlu0 %789
      %791 = vrot.lane.b32.xlu0 %v774, 107
      %v792 = vpop.permute.xlu0 %791
      %793 = vrot.lane.b32.xlu0 %v775, 107
      %v794 = vpop.permute.xlu0 %793
      %795 = vrot.lane.b32.xlu0 %v776, 107
      %v796 = vpop.permute.xlu0 %795
      %797 = vrot.lane.b32.xlu0 %v777, 107
      %v798 = vpop.permute.xlu0 %797
      %799 = vrot.lane.b32.xlu0 %v778, 107
      %v800 = vpop.permute.xlu0 %799
      %801 = vrot.lane.b32.xlu0 %v779, 107
      %v802 = vpop.permute.xlu0 %801
      %803 = vrot.lane.b32.xlu0 %v780, 107
      %v804 = vpop.permute.xlu0 %803
      %vm805 = vcmask 875520
      %v806 = vsel %vm805, %v790, %v792
      %v807 = vsel %vm805, %v792, %v794
      %v808 = vsel %vm805, %v794, %v796
      %v809 = vsel %vm805, %v796, %v798
      %v810 = vsel %vm805, %v798, %v800
      %v811 = vsel %vm805, %v800, %v802
      %v812 = vsel %vm805, %v802, %v804
      %821 = vst [vmem:[#allocation3 + $0x1c0] sm:$0xff] %v806
      %822 = vst [vmem:[#allocation3 + $0x1c8] sm:$0xff] %v807
      %823 = vst [vmem:[#allocation3 + $0x1d0] sm:$0xff] %v808
      %824 = vst [vmem:[#allocation3 + $0x1d8] sm:$0xff] %v809
      %825 = vst [vmem:[#allocation3 + $0x1e0] sm:$0xff] %v810
      %826 = vst [vmem:[#allocation3 + $0x1e8] sm:$0xff] %v811
      %827 = vst [vmem:[#allocation3 + $0x1f0] sm:$0xff] %v812
      %828 = vst.msk [vmem:[#allocation3 + $0x1f8] sm:$0xff] %vm435, %v804
      %v829 = vld [vmem:[#allocation2] sm:$0xff]
      %v830 = vld [vmem:[#allocation2 + $0x8] sm:$0xff]
      %v831 = vld [vmem:[#allocation2 + $0x10] sm:$0xff]
      %v832 = vld [vmem:[#allocation2 + $0x18] sm:$0xff]
      %v833 = vld [vmem:[#allocation2 + $0x20] sm:$0xff]
      %v834 = vld [vmem:[#allocation2 + $0x28] sm:$0xff]
      %v835 = vld [vmem:[#allocation2 + $0x30] sm:$0xff]
      %v836 = vld [vmem:[#allocation2 + $0x38] sm:$0xff]
      %845 = vrot.lane.b32.xlu0 %v829, 106
      %v846 = vpop.permute.xlu0 %845
      %847 = vrot.lane.b32.xlu0 %v830, 106
      %v848 = vpop.permute.xlu0 %847
      %849 = vrot.lane.b32.xlu0 %v831, 106
      %v850 = vpop.permute.xlu0 %849
      %851 = vrot.lane.b32.xlu0 %v832, 106
      %v852 = vpop.permute.xlu0 %851
      %853 = vrot.lane.b32.xlu0 %v833, 106
      %v854 = vpop.permute.xlu0 %853
      %855 = vrot.lane.b32.xlu0 %v834, 106
      %v856 = vpop.permute.xlu0 %855
      %857 = vrot.lane.b32.xlu0 %v835, 106
      %v858 = vpop.permute.xlu0 %857
      %859 = vrot.lane.b32.xlu0 %v836, 106
      %v860 = vpop.permute.xlu0 %859
      %vm861 = vcmask 867328
      %v862 = vsel %vm861, %v846, %v848
      %v863 = vsel %vm861, %v848, %v850
      %v864 = vsel %vm861, %v850, %v852
      %v865 = vsel %vm861, %v852, %v854
      %v866 = vsel %vm861, %v854, %v856
      %v867 = vsel %vm861, %v856, %v858
      %v868 = vsel %vm861, %v858, %v860
      %877 = vst [vmem:[#allocation3 + $0x200] sm:$0xff] %v862
      %878 = vst [vmem:[#allocation3 + $0x208] sm:$0xff] %v863
      %879 = vst [vmem:[#allocation3 + $0x210] sm:$0xff] %v864
      %880 = vst [vmem:[#allocation3 + $0x218] sm:$0xff] %v865
      %881 = vst [vmem:[#allocation3 + $0x220] sm:$0xff] %v866
      %882 = vst [vmem:[#allocation3 + $0x228] sm:$0xff] %v867
      %883 = vst [vmem:[#allocation3 + $0x230] sm:$0xff] %v868
      %884 = vst.msk [vmem:[#allocation3 + $0x238] sm:$0xff] %vm435, %v860
      %v885 = vld [vmem:[#allocation2] sm:$0xff]
      %v886 = vld [vmem:[#allocation2 + $0x8] sm:$0xff]
      %v887 = vld [vmem:[#allocation2 + $0x10] sm:$0xff]
      %v888 = vld [vmem:[#allocation2 + $0x18] sm:$0xff]
      %v889 = vld [vmem:[#allocation2 + $0x20] sm:$0xff]
      %v890 = vld [vmem:[#allocation2 + $0x28] sm:$0xff]
      %v891 = vld [vmem:[#allocation2 + $0x30] sm:$0xff]
      %v892 = vld [vmem:[#allocation2 + $0x38] sm:$0xff]
      %v893 = vld [vmem:[#allocation2 + $0x40] sm:$0xff]
      %903 = vrot.lane.b32.xlu0 %v885, 28
      %v904 = vpop.permute.xlu0 %903
      %905 = vrot.lane.b32.xlu0 %v886, 28
      %v906 = vpop.permute.xlu0 %905
      %907 = vrot.lane.b32.xlu0 %v887, 28
      %v908 = vpop.permute.xlu0 %907
      %909 = vrot.lane.b32.xlu0 %v888, 28
      %v910 = vpop.permute.xlu0 %909
      %911 = vrot.lane.b32.xlu0 %v889, 28
      %v912 = vpop.permute.xlu0 %911
      %913 = vrot.lane.b32.xlu0 %v890, 28
      %v914 = vpop.permute.xlu0 %913
      %915 = vrot.lane.b32.xlu0 %v891, 28
      %v916 = vpop.permute.xlu0 %915
      %917 = vrot.lane.b32.xlu0 %v892, 28
      %v918 = vpop.permute.xlu0 %917
      %919 = vrot.lane.b32.xlu0 %v893, 28
      %v920 = vpop.permute.xlu0 %919
      %vm921 = vcmask 228352
      %v922 = vsel %vm921, %v904, %v906
      %v923 = vsel %vm921, %v906, %v908
      %v924 = vsel %vm921, %v908, %v910
      %v925 = vsel %vm921, %v910, %v912
      %v926 = vsel %vm921, %v912, %v914
      %v927 = vsel %vm921, %v914, %v916
      %v928 = vsel %vm921, %v916, %v918
      %v929 = vsel %vm921, %v918, %v920
      %938 = vst [vmem:[#allocation3 + $0x240] sm:$0xff] %v922
      %939 = vst [vmem:[#allocation3 + $0x248] sm:$0xff] %v923
      %940 = vst [vmem:[#allocation3 + $0x250] sm:$0xff] %v924
      %941 = vst [vmem:[#allocation3 + $0x258] sm:$0xff] %v925
      %942 = vst [vmem:[#allocation3 + $0x260] sm:$0xff] %v926
      %943 = vst [vmem:[#allocation3 + $0x268] sm:$0xff] %v927
      %944 = vst [vmem:[#allocation3 + $0x270] sm:$0xff] %v928
      %945 = vst.msk [vmem:[#allocation3 + $0x278] sm:$0xff] %vm435, %v929
      %v946 = vld [vmem:[#allocation2] sm:$0xff]
      %v947 = vld [vmem:[#allocation2 + $0x8] sm:$0xff]
      %v948 = vld [vmem:[#allocation2 + $0x10] sm:$0xff]
      %v949 = vld [vmem:[#allocation2 + $0x18] sm:$0xff]
      %v950 = vld [vmem:[#allocation2 + $0x20] sm:$0xff]
      %v951 = vld [vmem:[#allocation2 + $0x28] sm:$0xff]
      %v952 = vld [vmem:[#allocation2 + $0x30] sm:$0xff]
      %v953 = vld [vmem:[#allocation2 + $0x38] sm:$0xff]
      %v954 = vld [vmem:[#allocation2 + $0x40] sm:$0xff]
      %964 = vrot.lane.b32.xlu0 %v946, 27
      %v965 = vpop.permute.xlu0 %964
      %966 = vrot.lane.b32.xlu0 %v947, 27
      %v967 = vpop.permute.xlu0 %966
      %968 = vrot.lane.b32.xlu0 %v948, 27
      %v969 = vpop.permute.xlu0 %968
      %970 = vrot.lane.b32.xlu0 %v949, 27
      %v971 = vpop.permute.xlu0 %970
      %972 = vrot.lane.b32.xlu0 %v950, 27
      %v973 = vpop.permute.xlu0 %972
      %974 = vrot.lane.b32.xlu0 %v951, 27
      %v975 = vpop.permute.xlu0 %974
      %976 = vrot.lane.b32.xlu0 %v952, 27
      %v977 = vpop.permute.xlu0 %976
      %978 = vrot.lane.b32.xlu0 %v953, 27
      %v979 = vpop.permute.xlu0 %978
      %980 = vrot.lane.b32.xlu0 %v954, 27
      %v981 = vpop.permute.xlu0 %980
      %vm982 = vcmask 220160
      %v983 = vsel %vm982, %v965, %v967
      %v984 = vsel %vm982, %v967, %v969
      %v985 = vsel %vm982, %v969, %v971
      %v986 = vsel %vm982, %v971, %v973
      %v987 = vsel %vm982, %v973, %v975
      %v988 = vsel %vm982, %v975, %v977
      %v989 = vsel %vm982, %v977, %v979
      %v990 = vsel %vm982, %v979, %v981
      %999 = vst [vmem:[#allocation3 + $0x280] sm:$0xff] %v983
      %1000 = vst [vmem:[#allocation3 + $0x288] sm:$0xff] %v984
      %1001 = vst [vmem:[#allocation3 + $0x290] sm:$0xff] %v985
      %1002 = vst [vmem:[#allocation3 + $0x298] sm:$0xff] %v986
      %1003 = vst [vmem:[#allocation3 + $0x2a0] sm:$0xff] %v987
      %1004 = vst [vmem:[#allocation3 + $0x2a8] sm:$0xff] %v988
      %1005 = vst [vmem:[#allocation3 + $0x2b0] sm:$0xff] %v989
      %1006 = vst.msk [vmem:[#allocation3 + $0x2b8] sm:$0xff] %vm435, %v990
      %v1007 = vld [vmem:[#allocation2] sm:$0xff]
      %v1008 = vld [vmem:[#allocation2 + $0x8] sm:$0xff]
      %v1009 = vld [vmem:[#allocation2 + $0x10] sm:$0xff]
      %v1010 = vld [vmem:[#allocation2 + $0x18] sm:$0xff]
      %v1011 = vld [vmem:[#allocation2 + $0x20] sm:$0xff]
      %v1012 = vld [vmem:[#allocation2 + $0x28] sm:$0xff]
      %v1013 = vld [vmem:[#allocation2 + $0x30] sm:$0xff]
      %v1014 = vld [vmem:[#allocation2 + $0x38] sm:$0xff]
      %v1015 = vld [vmem:[#allocation2 + $0x40] sm:$0xff]
      %1025 = vrot.lane.b32.xlu0 %v1007, 26
      %v1026 = vpop.permute.xlu0 %1025
      %1027 = vrot.lane.b32.xlu0 %v1008, 26
      %v1028 = vpop.permute.xlu0 %1027
      %1029 = vrot.lane.b32.xlu0 %v1009, 26
      %v1030 = vpop.permute.xlu0 %1029
      %1031 = vrot.lane.b32.xlu0 %v1010, 26
      %v1032 = vpop.permute.xlu0 %1031
      %1033 = vrot.lane.b32.xlu0 %v1011, 26
      %v1034 = vpop.permute.xlu0 %1033
      %1035 = vrot.lane.b32.xlu0 %v1012, 26
      %v1036 = vpop.permute.xlu0 %1035
      %1037 = vrot.lane.b32.xlu0 %v1013, 26
      %v1038 = vpop.permute.xlu0 %1037
      %1039 = vrot.lane.b32.xlu0 %v1014, 26
      %v1040 = vpop.permute.xlu0 %1039
      %1041 = vrot.lane.b32.xlu0 %v1015, 26
      %v1042 = vpop.permute.xlu0 %1041
      %vm1043 = vcmask 211968
      %v1044 = vsel %vm1043, %v1026, %v1028
      %v1045 = vsel %vm1043, %v1028, %v1030
      %v1046 = vsel %vm1043, %v1030, %v1032
      %v1047 = vsel %vm1043, %v1032, %v1034
      %v1048 = vsel %vm1043, %v1034, %v1036
      %v1049 = vsel %vm1043, %v1036, %v1038
      %v1050 = vsel %vm1043, %v1038, %v1040
      %v1051 = vsel %vm1043, %v1040, %v1042
      %1060 = vst [vmem:[#allocation3 + $0x2c0] sm:$0xff] %v1044
      %1061 = vst [vmem:[#allocation3 + $0x2c8] sm:$0xff] %v1045
      %1062 = vst [vmem:[#allocation3 + $0x2d0] sm:$0xff] %v1046
      %1063 = vst [vmem:[#allocation3 + $0x2d8] sm:$0xff] %v1047
      %1064 = vst [vmem:[#allocation3 + $0x2e0] sm:$0xff] %v1048
      %1065 = vst [vmem:[#allocation3 + $0x2e8] sm:$0xff] %v1049
      %1066 = vst [vmem:[#allocation3 + $0x2f0] sm:$0xff] %v1050
      %1067 = vst.msk [vmem:[#allocation3 + $0x2f8] sm:$0xff] %vm435, %v1051
      %v1068 = vld [vmem:[#allocation2] sm:$0xff]
      %v1069 = vld [vmem:[#allocation2 + $0x8] sm:$0xff]
      %v1070 = vld [vmem:[#allocation2 + $0x10] sm:$0xff]
      %v1071 = vld [vmem:[#allocation2 + $0x18] sm:$0xff]
      %v1072 = vld [vmem:[#allocation2 + $0x20] sm:$0xff]
      %v1073 = vld [vmem:[#allocation2 + $0x28] sm:$0xff]
      %v1074 = vld [vmem:[#allocation2 + $0x30] sm:$0xff]
      %v1075 = vld [vmem:[#allocation2 + $0x38] sm:$0xff]
      %v1076 = vld [vmem:[#allocation2 + $0x40] sm:$0xff]
      %1086 = vrot.lane.b32.xlu0 %v1068, 18
      %v1087 = vpop.permute.xlu0 %1086
      %1088 = vrot.lane.b32.xlu0 %v1069, 18
      %v1089 = vpop.permute.xlu0 %1088
      %1090 = vrot.lane.b32.xlu0 %v1070, 18
      %v1091 = vpop.permute.xlu0 %1090
      %1092 = vrot.lane.b32.xlu0 %v1071, 18
      %v1093 = vpop.permute.xlu0 %1092
      %1094 = vrot.lane.b32.xlu0 %v1072, 18
      %v1095 = vpop.permute.xlu0 %1094
      %1096 = vrot.lane.b32.xlu0 %v1073, 18
      %v1097 = vpop.permute.xlu0 %1096
      %1098 = vrot.lane.b32.xlu0 %v1074, 18
      %v1099 = vpop.permute.xlu0 %1098
      %1100 = vrot.lane.b32.xlu0 %v1075, 18
      %v1101 = vpop.permute.xlu0 %1100
      %1102 = vrot.lane.b32.xlu0 %v1076, 18
      %v1103 = vpop.permute.xlu0 %1102
      %vm1104 = vcmask 146432
      %v1105 = vsel %vm1104, %v1087, %v1089
      %v1106 = vsel %vm1104, %v1089, %v1091
      %v1107 = vsel %vm1104, %v1091, %v1093
      %v1108 = vsel %vm1104, %v1093, %v1095
      %v1109 = vsel %vm1104, %v1095, %v1097
      %v1110 = vsel %vm1104, %v1097, %v1099
      %v1111 = vsel %vm1104, %v1099, %v1101
      %v1112 = vsel %vm1104, %v1101, %v1103
      %1121 = vst [vmem:[#allocation3 + $0x300] sm:$0xff] %v1105
      %1122 = vst [vmem:[#allocation3 + $0x308] sm:$0xff] %v1106
      %1123 = vst [vmem:[#allocation3 + $0x310] sm:$0xff] %v1107
      %1124 = vst [vmem:[#allocation3 + $0x318] sm:$0xff] %v1108
      %1125 = vst [vmem:[#allocation3 + $0x320] sm:$0xff] %v1109
      %1126 = vst [vmem:[#allocation3 + $0x328] sm:$0xff] %v1110
      %1127 = vst [vmem:[#allocation3 + $0x330] sm:$0xff] %v1111
      %1128 = vst.msk [vmem:[#allocation3 + $0x338] sm:$0xff] %vm435, %v1112
      %v1129 = vld [vmem:[#allocation2] sm:$0xff]
      %v1130 = vld [vmem:[#allocation2 + $0x8] sm:$0xff]
      %v1131 = vld [vmem:[#allocation2 + $0x10] sm:$0xff]
      %v1132 = vld [vmem:[#allocation2 + $0x18] sm:$0xff]
      %v1133 = vld [vmem:[#allocation2 + $0x20] sm:$0xff]
      %v1134 = vld [vmem:[#allocation2 + $0x28] sm:$0xff]
      %v1135 = vld [vmem:[#allocation2 + $0x30] sm:$0xff]
      %v1136 = vld [vmem:[#allocation2 + $0x38] sm:$0xff]
      %v1137 = vld [vmem:[#allocation2 + $0x40] sm:$0xff]
      %1147 = vrot.lane.b32.xlu0 %v1129, 17
      %v1148 = vpop.permute.xlu0 %1147
      %1149 = vrot.lane.b32.xlu0 %v1130, 17
      %v1150 = vpop.permute.xlu0 %1149
      %1151 = vrot.lane.b32.xlu0 %v1131, 17
      %v1152 = vpop.permute.xlu0 %1151
      %1153 = vrot.lane.b32.xlu0 %v1132, 17
      %v1154 = vpop.permute.xlu0 %1153
      %1155 = vrot.lane.b32.xlu0 %v1133, 17
      %v1156 = vpop.permute.xlu0 %1155
      %1157 = vrot.lane.b32.xlu0 %v1134, 17
      %v1158 = vpop.permute.xlu0 %1157
      %1159 = vrot.lane.b32.xlu0 %v1135, 17
      %v1160 = vpop.permute.xlu0 %1159
      %1161 = vrot.lane.b32.xlu0 %v1136, 17
      %v1162 = vpop.permute.xlu0 %1161
      %1163 = vrot.lane.b32.xlu0 %v1137, 17
      %v1164 = vpop.permute.xlu0 %1163
      %vm1165 = vcmask 138240
      %v1166 = vsel %vm1165, %v1148, %v1150
      %v1167 = vsel %vm1165, %v1150, %v1152
      %v1168 = vsel %vm1165, %v1152, %v1154
      %v1169 = vsel %vm1165, %v1154, %v1156
      %v1170 = vsel %vm1165, %v1156, %v1158
      %v1171 = vsel %vm1165, %v1158, %v1160
      %v1172 = vsel %vm1165, %v1160, %v1162
      %v1173 = vsel %vm1165, %v1162, %v1164
      %1182 = vst [vmem:[#allocation3 + $0x340] sm:$0xff] %v1166
      %1183 = vst [vmem:[#allocation3 + $0x348] sm:$0xff] %v1167
      %1184 = vst [vmem:[#allocation3 + $0x350] sm:$0xff] %v1168
      %1185 = vst [vmem:[#allocation3 + $0x358] sm:$0xff] %v1169
      %1186 = vst [vmem:[#allocation3 + $0x360] sm:$0xff] %v1170
      %1187 = vst [vmem:[#allocation3 + $0x368] sm:$0xff] %v1171
      %1188 = vst [vmem:[#allocation3 + $0x370] sm:$0xff] %v1172
      %1189 = vst.msk [vmem:[#allocation3 + $0x378] sm:$0xff] %vm435, %v1173
      %v1190 = vld [vmem:[#allocation2] sm:$0xff]
      %v1191 = vld [vmem:[#allocation2 + $0x8] sm:$0xff]
      %v1192 = vld [vmem:[#allocation2 + $0x10] sm:$0xff]
      %v1193 = vld [vmem:[#allocation2 + $0x18] sm:$0xff]
      %v1194 = vld [vmem:[#allocation2 + $0x20] sm:$0xff]
      %v1195 = vld [vmem:[#allocation2 + $0x28] sm:$0xff]
      %v1196 = vld [vmem:[#allocation2 + $0x30] sm:$0xff]
      %v1197 = vld [vmem:[#allocation2 + $0x38] sm:$0xff]
      %v1198 = vld [vmem:[#allocation2 + $0x40] sm:$0xff]
      %1208 = vrot.lane.b32.xlu0 %v1190, 16
      %v1209 = vpop.permute.xlu0 %1208
      %1210 = vrot.lane.b32.xlu0 %v1191, 16
      %v1211 = vpop.permute.xlu0 %1210
      %1212 = vrot.lane.b32.xlu0 %v1192, 16
      %v1213 = vpop.permute.xlu0 %1212
      %1214 = vrot.lane.b32.xlu0 %v1193, 16
      %v1215 = vpop.permute.xlu0 %1214
      %1216 = vrot.lane.b32.xlu0 %v1194, 16
      %v1217 = vpop.permute.xlu0 %1216
      %1218 = vrot.lane.b32.xlu0 %v1195, 16
      %v1219 = vpop.permute.xlu0 %1218
      %1220 = vrot.lane.b32.xlu0 %v1196, 16
      %v1221 = vpop.permute.xlu0 %1220
      %1222 = vrot.lane.b32.xlu0 %v1197, 16
      %v1223 = vpop.permute.xlu0 %1222
      %1224 = vrot.lane.b32.xlu0 %v1198, 16
      %v1225 = vpop.permute.xlu0 %1224
      %vm1226 = vcmask 130048
      %v1227 = vsel %vm1226, %v1209, %v1211
      %v1228 = vsel %vm1226, %v1211, %v1213
      %v1229 = vsel %vm1226, %v1213, %v1215
      %v1230 = vsel %vm1226, %v1215, %v1217
      %v1231 = vsel %vm1226, %v1217, %v1219
      %v1232 = vsel %vm1226, %v1219, %v1221
      %v1233 = vsel %vm1226, %v1221, %v1223
      %v1234 = vsel %vm1226, %v1223, %v1225
      %1243 = vst [vmem:[#allocation3 + $0x380] sm:$0xff] %v1227
      %1244 = vst [vmem:[#allocation3 + $0x388] sm:$0xff] %v1228
      %1245 = vst [vmem:[#allocation3 + $0x390] sm:$0xff] %v1229
      %1246 = vst [vmem:[#allocation3 + $0x398] sm:$0xff] %v1230
      %1247 = vst [vmem:[#allocation3 + $0x3a0] sm:$0xff] %v1231
      %1248 = vst [vmem:[#allocation3 + $0x3a8] sm:$0xff] %v1232
      %1249 = vst [vmem:[#allocation3 + $0x3b0] sm:$0xff] %v1233
      %1250 = vst.msk [vmem:[#allocation3 + $0x3b8] sm:$0xff] %vm435, %v1234
      %v1251 = vld [vmem:[#allocation2] sm:$0xff]
      %v1252 = vld [vmem:[#allocation2 + $0x8] sm:$0xff]
      %v1253 = vld [vmem:[#allocation2 + $0x10] sm:$0xff]
      %v1254 = vld [vmem:[#allocation2 + $0x18] sm:$0xff]
      %v1255 = vld [vmem:[#allocation2 + $0x20] sm:$0xff]
      %v1256 = vld [vmem:[#allocation2 + $0x28] sm:$0xff]
      %v1257 = vld [vmem:[#allocation2 + $0x30] sm:$0xff]
      %v1258 = vld [vmem:[#allocation2 + $0x38] sm:$0xff]
      %v1259 = vld [vmem:[#allocation2 + $0x40] sm:$0xff]
      %1269 = vrot.lane.b32.xlu0 %v1251, 8
      %v1270 = vpop.permute.xlu0 %1269
      %1271 = vrot.lane.b32.xlu0 %v1252, 8
      %v1272 = vpop.permute.xlu0 %1271
      %1273 = vrot.lane.b32.xlu0 %v1253, 8
      %v1274 = vpop.permute.xlu0 %1273
      %1275 = vrot.lane.b32.xlu0 %v1254, 8
      %v1276 = vpop.permute.xlu0 %1275
      %1277 = vrot.lane.b32.xlu0 %v1255, 8
      %v1278 = vpop.permute.xlu0 %1277
      %1279 = vrot.lane.b32.xlu0 %v1256, 8
      %v1280 = vpop.permute.xlu0 %1279
      %1281 = vrot.lane.b32.xlu0 %v1257, 8
      %v1282 = vpop.permute.xlu0 %1281
      %1283 = vrot.lane.b32.xlu0 %v1258, 8
      %v1284 = vpop.permute.xlu0 %1283
      %1285 = vrot.lane.b32.xlu0 %v1259, 8
      %v1286 = vpop.permute.xlu0 %1285
      %vm1287 = vcmask 64512
      %v1288 = vsel %vm1287, %v1270, %v1272
      %v1289 = vsel %vm1287, %v1272, %v1274
      %v1290 = vsel %vm1287, %v1274, %v1276
      %v1291 = vsel %vm1287, %v1276, %v1278
      %v1292 = vsel %vm1287, %v1278, %v1280
      %v1293 = vsel %vm1287, %v1280, %v1282
      %v1294 = vsel %vm1287, %v1282, %v1284
      %v1295 = vsel %vm1287, %v1284, %v1286
      %1304 = vst [vmem:[#allocation3 + $0x3c0] sm:$0xff] %v1288
      %1305 = vst [vmem:[#allocation3 + $0x3c8] sm:$0xff] %v1289
      %1306 = vst [vmem:[#allocation3 + $0x3d0] sm:$0xff] %v1290
      %1307 = vst [vmem:[#allocation3 + $0x3d8] sm:$0xff] %v1291
      %1308 = vst [vmem:[#allocation3 + $0x3e0] sm:$0xff] %v1292
      %1309 = vst [vmem:[#allocation3 + $0x3e8] sm:$0xff] %v1293
      %1310 = vst [vmem:[#allocation3 + $0x3f0] sm:$0xff] %v1294
      %1311 = vst.msk [vmem:[#allocation3 + $0x3f8] sm:$0xff] %vm435, %v1295
      %v1312 = vld [vmem:[#allocation2] sm:$0xff]
      %v1313 = vld [vmem:[#allocation2 + $0x8] sm:$0xff]
      %v1314 = vld [vmem:[#allocation2 + $0x10] sm:$0xff]
      %v1315 = vld [vmem:[#allocation2 + $0x18] sm:$0xff]
      %v1316 = vld [vmem:[#allocation2 + $0x20] sm:$0xff]
      %v1317 = vld [vmem:[#allocation2 + $0x28] sm:$0xff]
      %v1318 = vld [vmem:[#allocation2 + $0x30] sm:$0xff]
      %v1319 = vld [vmem:[#allocation2 + $0x38] sm:$0xff]
      %v1320 = vld [vmem:[#allocation2 + $0x40] sm:$0xff]
      %1330 = vrot.lane.b32.xlu0 %v1312, 7
      %v1331 = vpop.permute.xlu0 %1330
      %1332 = vrot.lane.b32.xlu0 %v1313, 7
      %v1333 = vpop.permute.xlu0 %1332
      %1334 = vrot.lane.b32.xlu0 %v1314, 7
      %v1335 = vpop.permute.xlu0 %1334
      %1336 = vrot.lane.b32.xlu0 %v1315, 7
      %v1337 = vpop.permute.xlu0 %1336
      %1338 = vrot.lane.b32.xlu0 %v1316, 7
      %v1339 = vpop.permute.xlu0 %1338
      %1340 = vrot.lane.b32.xlu0 %v1317, 7
      %v1341 = vpop.permute.xlu0 %1340
      %1342 = vrot.lane.b32.xlu0 %v1318, 7
      %v1343 = vpop.permute.xlu0 %1342
      %1344 = vrot.lane.b32.xlu0 %v1319, 7
      %v1345 = vpop.permute.xlu0 %1344
      %1346 = vrot.lane.b32.xlu0 %v1320, 7
      %v1347 = vpop.permute.xlu0 %1346
      %vm1348 = vcmask 56320
      %v1349 = vsel %vm1348, %v1331, %v1333
      %v1350 = vsel %vm1348, %v1333, %v1335
      %v1351 = vsel %vm1348, %v1335, %v1337
      %v1352 = vsel %vm1348, %v1337, %v1339
      %v1353 = vsel %vm1348, %v1339, %v1341
      %v1354 = vsel %vm1348, %v1341, %v1343
      %v1355 = vsel %vm1348, %v1343, %v1345
      %v1356 = vsel %vm1348, %v1345, %v1347
      %1365 = vst [vmem:[#allocation3 + $0x400] sm:$0xff] %v1349
      %1366 = vst [vmem:[#allocation3 + $0x408] sm:$0xff] %v1350
      %1367 = vst [vmem:[#allocation3 + $0x410] sm:$0xff] %v1351
      %1368 = vst [vmem:[#allocation3 + $0x418] sm:$0xff] %v1352
      %1369 = vst [vmem:[#allocation3 + $0x420] sm:$0xff] %v1353
      %1370 = vst [vmem:[#allocation3 + $0x428] sm:$0xff] %v1354
      %1371 = vst [vmem:[#allocation3 + $0x430] sm:$0xff] %v1355
      %1372 = vst.msk [vmem:[#allocation3 + $0x438] sm:$0xff] %vm435, %v1356
      %v1373 = vld [vmem:[#allocation2] sm:$0xff]
      %v1374 = vld [vmem:[#allocation2 + $0x8] sm:$0xff]
      %v1375 = vld [vmem:[#allocation2 + $0x10] sm:$0xff]
      %v1376 = vld [vmem:[#allocation2 + $0x18] sm:$0xff]
      %v1377 = vld [vmem:[#allocation2 + $0x20] sm:$0xff]
      %v1378 = vld [vmem:[#allocation2 + $0x28] sm:$0xff]
      %v1379 = vld [vmem:[#allocation2 + $0x30] sm:$0xff]
      %v1380 = vld [vmem:[#allocation2 + $0x38] sm:$0xff]
      %v1381 = vld [vmem:[#allocation2 + $0x40] sm:$0xff]
      %1391 = vrot.lane.b32.xlu0 %v1373, 6
      %v1392 = vpop.permute.xlu0 %1391
      %1393 = vrot.lane.b32.xlu0 %v1374, 6
      %v1394 = vpop.permute.xlu0 %1393
      %1395 = vrot.lane.b32.xlu0 %v1375, 6
      %v1396 = vpop.permute.xlu0 %1395
      %1397 = vrot.lane.b32.xlu0 %v1376, 6
      %v1398 = vpop.permute.xlu0 %1397
      %1399 = vrot.lane.b32.xlu0 %v1377, 6
      %v1400 = vpop.permute.xlu0 %1399
      %1401 = vrot.lane.b32.xlu0 %v1378, 6
      %v1402 = vpop.permute.xlu0 %1401
      %1403 = vrot.lane.b32.xlu0 %v1379, 6
      %v1404 = vpop.permute.xlu0 %1403
      %1405 = vrot.lane.b32.xlu0 %v1380, 6
      %v1406 = vpop.permute.xlu0 %1405
      %1407 = vrot.lane.b32.xlu0 %v1381, 6
      %v1408 = vpop.permute.xlu0 %1407
      %vm1409 = vcmask 48128
      %v1410 = vsel %vm1409, %v1392, %v1394
      %v1411 = vsel %vm1409, %v1394, %v1396
      %v1412 = vsel %vm1409, %v1396, %v1398
      %v1413 = vsel %vm1409, %v1398, %v1400
      %v1414 = vsel %vm1409, %v1400, %v1402
      %v1415 = vsel %vm1409, %v1402, %v1404
      %v1416 = vsel %vm1409, %v1404, %v1406
      %v1417 = vsel %vm1409, %v1406, %v1408
      %1426 = vst [vmem:[#allocation3 + $0x440] sm:$0xff] %v1410
      %1427 = vst [vmem:[#allocation3 + $0x448] sm:$0xff] %v1411
      %1428 = vst [vmem:[#allocation3 + $0x450] sm:$0xff] %v1412
      %1429 = vst [vmem:[#allocation3 + $0x458] sm:$0xff] %v1413
      %1430 = vst [vmem:[#allocation3 + $0x460] sm:$0xff] %v1414
      %1431 = vst [vmem:[#allocation3 + $0x468] sm:$0xff] %v1415
      %1432 = vst [vmem:[#allocation3 + $0x470] sm:$0xff] %v1416
      %1433 = vst.msk [vmem:[#allocation3 + $0x478] sm:$0xff] %vm435, %v1417
      %v1434 = vld [vmem:[#allocation2 + $0x8] sm:$0xff]
      %v1435 = vld [vmem:[#allocation2 + $0x10] sm:$0xff]
      %v1436 = vld [vmem:[#allocation2 + $0x18] sm:$0xff]
      %v1437 = vld [vmem:[#allocation2 + $0x20] sm:$0xff]
      %v1438 = vld [vmem:[#allocation2 + $0x28] sm:$0xff]
      %v1439 = vld [vmem:[#allocation2 + $0x30] sm:$0xff]
      %v1440 = vld [vmem:[#allocation2 + $0x38] sm:$0xff]
      %v1441 = vld [vmem:[#allocation2 + $0x40] sm:$0xff]
      %v1442 = vld [vmem:[#allocation2 + $0x48] sm:$0xff]
      %1452 = vrot.lane.b32.xlu0 %v1434, 56
      %v1453 = vpop.permute.xlu0 %1452
      %1454 = vrot.lane.b32.xlu0 %v1435, 56
      %v1455 = vpop.permute.xlu0 %1454
      %1456 = vrot.lane.b32.xlu0 %v1436, 56
      %v1457 = vpop.permute.xlu0 %1456
      %1458 = vrot.lane.b32.xlu0 %v1437, 56
      %v1459 = vpop.permute.xlu0 %1458
      %1460 = vrot.lane.b32.xlu0 %v1438, 56
      %v1461 = vpop.permute.xlu0 %1460
      %1462 = vrot.lane.b32.xlu0 %v1439, 56
      %v1463 = vpop.permute.xlu0 %1462
      %1464 = vrot.lane.b32.xlu0 %v1440, 56
      %v1465 = vpop.permute.xlu0 %1464
      %1466 = vrot.lane.b32.xlu0 %v1441, 56
      %v1467 = vpop.permute.xlu0 %1466
      %1468 = vrot.lane.b32.xlu0 %v1442, 56
      %v1469 = vpop.permute.xlu0 %1468
      %vm1470 = vcmask 457728
      %v1471 = vsel %vm1470, %v1453, %v1455
      %v1472 = vsel %vm1470, %v1455, %v1457
      %v1473 = vsel %vm1470, %v1457, %v1459
      %v1474 = vsel %vm1470, %v1459, %v1461
      %v1475 = vsel %vm1470, %v1461, %v1463
      %v1476 = vsel %vm1470, %v1463, %v1465
      %v1477 = vsel %vm1470, %v1465, %v1467
      %v1478 = vsel %vm1470, %v1467, %v1469
      %1487 = vst [vmem:[#allocation3 + $0x480] sm:$0xff] %v1471
      %1488 = vst [vmem:[#allocation3 + $0x488] sm:$0xff] %v1472
      %1489 = vst [vmem:[#allocation3 + $0x490] sm:$0xff] %v1473
      %1490 = vst [vmem:[#allocation3 + $0x498] sm:$0xff] %v1474
      %1491 = vst [vmem:[#allocation3 + $0x4a0] sm:$0xff] %v1475
      %1492 = vst [vmem:[#allocation3 + $0x4a8] sm:$0xff] %v1476
      %1493 = vst [vmem:[#allocation3 + $0x4b0] sm:$0xff] %v1477
      %1494 = vst.msk [vmem:[#allocation3 + $0x4b8] sm:$0xff] %vm435, %v1478
      %v1495 = vld [vmem:[#allocation2 + $0x8] sm:$0xff]
      %v1496 = vld [vmem:[#allocation2 + $0x10] sm:$0xff]
      %v1497 = vld [vmem:[#allocation2 + $0x18] sm:$0xff]
      %v1498 = vld [vmem:[#allocation2 + $0x20] sm:$0xff]
      %v1499 = vld [vmem:[#allocation2 + $0x28] sm:$0xff]
      %v1500 = vld [vmem:[#allocation2 + $0x30] sm:$0xff]
      %v1501 = vld [vmem:[#allocation2 + $0x38] sm:$0xff]
      %v1502 = vld [vmem:[#allocation2 + $0x40] sm:$0xff]
      %v1503 = vld [vmem:[#allocation2 + $0x48] sm:$0xff]
      %1513 = vrot.lane.b32.xlu0 %v1495, 55
      %v1514 = vpop.permute.xlu0 %1513
      %1515 = vrot.lane.b32.xlu0 %v1496, 55
      %v1516 = vpop.permute.xlu0 %1515
      %1517 = vrot.lane.b32.xlu0 %v1497, 55
      %v1518 = vpop.permute.xlu0 %1517
      %1519 = vrot.lane.b32.xlu0 %v1498, 55
      %v1520 = vpop.permute.xlu0 %1519
      %1521 = vrot.lane.b32.xlu0 %v1499, 55
      %v1522 = vpop.permute.xlu0 %1521
      %1523 = vrot.lane.b32.xlu0 %v1500, 55
      %v1524 = vpop.permute.xlu0 %1523
      %1525 = vrot.lane.b32.xlu0 %v1501, 55
      %v1526 = vpop.permute.xlu0 %1525
      %1527 = vrot.lane.b32.xlu0 %v1502, 55
      %v1528 = vpop.permute.xlu0 %1527
      %1529 = vrot.lane.b32.xlu0 %v1503, 55
      %v1530 = vpop.permute.xlu0 %1529
      %vm1531 = vcmask 449536
      %v1532 = vsel %vm1531, %v1514, %v1516
      %v1533 = vsel %vm1531, %v1516, %v1518
      %v1534 = vsel %vm1531, %v1518, %v1520
      %v1535 = vsel %vm1531, %v1520, %v1522
      %v1536 = vsel %vm1531, %v1522, %v1524
      %v1537 = vsel %vm1531, %v1524, %v1526
      %v1538 = vsel %vm1531, %v1526, %v1528
      %v1539 = vsel %vm1531, %v1528, %v1530
      %1548 = vst [vmem:[#allocation3 + $0x4c0] sm:$0xff] %v1532
      %1549 = vst [vmem:[#allocation3 + $0x4c8] sm:$0xff] %v1533
      %1550 = vst [vmem:[#allocation3 + $0x4d0] sm:$0xff] %v1534
      %1551 = vst [vmem:[#allocation3 + $0x4d8] sm:$0xff] %v1535
      %1552 = vst [vmem:[#allocation3 + $0x4e0] sm:$0xff] %v1536
      %1553 = vst [vmem:[#allocation3 + $0x4e8] sm:$0xff] %v1537
      %1554 = vst [vmem:[#allocation3 + $0x4f0] sm:$0xff] %v1538
      %1555 = vst.msk [vmem:[#allocation3 + $0x4f8] sm:$0xff] %vm435, %v1539
      %v1556 = vld [vmem:[#allocation2 + $0x8] sm:$0xff]
      %v1557 = vld [vmem:[#allocation2 + $0x10] sm:$0xff]
      %v1558 = vld [vmem:[#allocation2 + $0x18] sm:$0xff]
      %v1559 = vld [vmem:[#allocation2 + $0x20] sm:$0xff]
      %v1560 = vld [vmem:[#allocation2 + $0x28] sm:$0xff]
      %v1561 = vld [vmem:[#allocation2 + $0x30] sm:$0xff]
      %v1562 = vld [vmem:[#allocation2 + $0x38] sm:$0xff]
      %v1563 = vld [vmem:[#allocation2 + $0x40] sm:$0xff]
      %v1564 = vld [vmem:[#allocation2 + $0x48] sm:$0xff]
      %1574 = vrot.lane.b32.xlu0 %v1556, 54
      %v1575 = vpop.permute.xlu0 %1574
      %1576 = vrot.lane.b32.xlu0 %v1557, 54
      %v1577 = vpop.permute.xlu0 %1576
      %1578 = vrot.lane.b32.xlu0 %v1558, 54
      %v1579 = vpop.permute.xlu0 %1578
      %1580 = vrot.lane.b32.xlu0 %v1559, 54
      %v1581 = vpop.permute.xlu0 %1580
      %1582 = vrot.lane.b32.xlu0 %v1560, 54
      %v1583 = vpop.permute.xlu0 %1582
      %1584 = vrot.lane.b32.xlu0 %v1561, 54
      %v1585 = vpop.permute.xlu0 %1584
      %1586 = vrot.lane.b32.xlu0 %v1562, 54
      %v1587 = vpop.permute.xlu0 %1586
      %1588 = vrot.lane.b32.xlu0 %v1563, 54
      %v1589 = vpop.permute.xlu0 %1588
      %1590 = vrot.lane.b32.xlu0 %v1564, 54
      %v1591 = vpop.permute.xlu0 %1590
      %vm1592 = vcmask 441344
      %v1593 = vsel %vm1592, %v1575, %v1577
      %v1594 = vsel %vm1592, %v1577, %v1579
      %v1595 = vsel %vm1592, %v1579, %v1581
      %v1596 = vsel %vm1592, %v1581, %v1583
      %v1597 = vsel %vm1592, %v1583, %v1585
      %v1598 = vsel %vm1592, %v1585, %v1587
      %v1599 = vsel %vm1592, %v1587, %v1589
      %v1600 = vsel %vm1592, %v1589, %v1591
      %1609 = vst [vmem:[#allocation3 + $0x500] sm:$0xff] %v1593
      %1610 = vst [vmem:[#allocation3 + $0x508] sm:$0xff] %v1594
      %1611 = vst [vmem:[#allocation3 + $0x510] sm:$0xff] %v1595
      %1612 = vst [vmem:[#allocation3 + $0x518] sm:$0xff] %v1596
      %1613 = vst [vmem:[#allocation3 + $0x520] sm:$0xff] %v1597
      %1614 = vst [vmem:[#allocation3 + $0x528] sm:$0xff] %v1598
      %1615 = vst [vmem:[#allocation3 + $0x530] sm:$0xff] %v1599
      %1616 = vst.msk [vmem:[#allocation3 + $0x538] sm:$0xff] %vm435, %v1600
      %v1617 = vld [vmem:[#allocation2 + $0x8] sm:$0xff]
      %v1618 = vld [vmem:[#allocation2 + $0x10] sm:$0xff]
      %v1619 = vld [vmem:[#allocation2 + $0x18] sm:$0xff]
      %v1620 = vld [vmem:[#allocation2 + $0x20] sm:$0xff]
      %v1621 = vld [vmem:[#allocation2 + $0x28] sm:$0xff]
      %v1622 = vld [vmem:[#allocation2 + $0x30] sm:$0xff]
      %v1623 = vld [vmem:[#allocation2 + $0x38] sm:$0xff]
      %v1624 = vld [vmem:[#allocation2 + $0x40] sm:$0xff]
      %v1625 = vld [vmem:[#allocation2 + $0x48] sm:$0xff]
      %1635 = vrot.lane.b32.xlu0 %v1617, 46
      %v1636 = vpop.permute.xlu0 %1635
      %1637 = vrot.lane.b32.xlu0 %v1618, 46
      %v1638 = vpop.permute.xlu0 %1637
      %1639 = vrot.lane.b32.xlu0 %v1619, 46
      %v1640 = vpop.permute.xlu0 %1639
      %1641 = vrot.lane.b32.xlu0 %v1620, 46
      %v1642 = vpop.permute.xlu0 %1641
      %1643 = vrot.lane.b32.xlu0 %v1621, 46
      %v1644 = vpop.permute.xlu0 %1643
      %1645 = vrot.lane.b32.xlu0 %v1622, 46
      %v1646 = vpop.permute.xlu0 %1645
      %1647 = vrot.lane.b32.xlu0 %v1623, 46
      %v1648 = vpop.permute.xlu0 %1647
      %1649 = vrot.lane.b32.xlu0 %v1624, 46
      %v1650 = vpop.permute.xlu0 %1649
      %1651 = vrot.lane.b32.xlu0 %v1625, 46
      %v1652 = vpop.permute.xlu0 %1651
      %vm1653 = vcmask 375808
      %v1654 = vsel %vm1653, %v1636, %v1638
      %v1655 = vsel %vm1653, %v1638, %v1640
      %v1656 = vsel %vm1653, %v1640, %v1642
      %v1657 = vsel %vm1653, %v1642, %v1644
      %v1658 = vsel %vm1653, %v1644, %v1646
      %v1659 = vsel %vm1653, %v1646, %v1648
      %v1660 = vsel %vm1653, %v1648, %v1650
      %v1661 = vsel %vm1653, %v1650, %v1652
      %1670 = vst [vmem:[#allocation3 + $0x540] sm:$0xff] %v1654
      %1671 = vst [vmem:[#allocation3 + $0x548] sm:$0xff] %v1655
      %1672 = vst [vmem:[#allocation3 + $0x550] sm:$0xff] %v1656
      %1673 = vst [vmem:[#allocation3 + $0x558] sm:$0xff] %v1657
      %1674 = vst [vmem:[#allocation3 + $0x560] sm:$0xff] %v1658
      %1675 = vst [vmem:[#allocation3 + $0x568] sm:$0xff] %v1659
      %1676 = vst [vmem:[#allocation3 + $0x570] sm:$0xff] %v1660
      %1677 = vst.msk [vmem:[#allocation3 + $0x578] sm:$0xff] %vm435, %v1661
      %v1678 = vld [vmem:[#allocation2 + $0x8] sm:$0xff]
      %v1679 = vld [vmem:[#allocation2 + $0x10] sm:$0xff]
      %v1680 = vld [vmem:[#allocation2 + $0x18] sm:$0xff]
      %v1681 = vld [vmem:[#allocation2 + $0x20] sm:$0xff]
      %v1682 = vld [vmem:[#allocation2 + $0x28] sm:$0xff]
      %v1683 = vld [vmem:[#allocation2 + $0x30] sm:$0xff]
      %v1684 = vld [vmem:[#allocation2 + $0x38] sm:$0xff]
      %v1685 = vld [vmem:[#allocation2 + $0x40] sm:$0xff]
      %v1686 = vld [vmem:[#allocation2 + $0x48] sm:$0xff]
      %1696 = vrot.lane.b32.xlu0 %v1678, 45
      %v1697 = vpop.permute.xlu0 %1696
      %1698 = vrot.lane.b32.xlu0 %v1679, 45
      %v1699 = vpop.permute.xlu0 %1698
      %1700 = vrot.lane.b32.xlu0 %v1680, 45
      %v1701 = vpop.permute.xlu0 %1700
      %1702 = vrot.lane.b32.xlu0 %v1681, 45
      %v1703 = vpop.permute.xlu0 %1702
      %1704 = vrot.lane.b32.xlu0 %v1682, 45
      %v1705 = vpop.permute.xlu0 %1704
      %1706 = vrot.lane.b32.xlu0 %v1683, 45
      %v1707 = vpop.permute.xlu0 %1706
      %1708 = vrot.lane.b32.xlu0 %v1684, 45
      %v1709 = vpop.permute.xlu0 %1708
      %1710 = vrot.lane.b32.xlu0 %v1685, 45
      %v1711 = vpop.permute.xlu0 %1710
      %1712 = vrot.lane.b32.xlu0 %v1686, 45
      %v1713 = vpop.permute.xlu0 %1712
      %vm1714 = vcmask 367616
      %v1715 = vsel %vm1714, %v1697, %v1699
      %v1716 = vsel %vm1714, %v1699, %v1701
      %v1717 = vsel %vm1714, %v1701, %v1703
      %v1718 = vsel %vm1714, %v1703, %v1705
      %v1719 = vsel %vm1714, %v1705, %v1707
      %v1720 = vsel %vm1714, %v1707, %v1709
      %v1721 = vsel %vm1714, %v1709, %v1711
      %v1722 = vsel %vm1714, %v1711, %v1713
      %1731 = vst [vmem:[#allocation3 + $0x580] sm:$0xff] %v1715
      %1732 = vst [vmem:[#allocation3 + $0x588] sm:$0xff] %v1716
      %1733 = vst [vmem:[#allocation3 + $0x590] sm:$0xff] %v1717
      %1734 = vst [vmem:[#allocation3 + $0x598] sm:$0xff] %v1718
      %1735 = vst [vmem:[#allocation3 + $0x5a0] sm:$0xff] %v1719
      %1736 = vst [vmem:[#allocation3 + $0x5a8] sm:$0xff] %v1720
      %1737 = vst [vmem:[#allocation3 + $0x5b0] sm:$0xff] %v1721
      %1738 = vst.msk [vmem:[#allocation3 + $0x5b8] sm:$0xff] %vm435, %v1722
      %v1739 = vld [vmem:[#allocation2 + $0x8] sm:$0xff]
      %v1740 = vld [vmem:[#allocation2 + $0x10] sm:$0xff]
      %v1741 = vld [vmem:[#allocation2 + $0x18] sm:$0xff]
      %v1742 = vld [vmem:[#allocation2 + $0x20] sm:$0xff]
      %v1743 = vld [vmem:[#allocation2 + $0x28] sm:$0xff]
      %v1744 = vld [vmem:[#allocation2 + $0x30] sm:$0xff]
      %v1745 = vld [vmem:[#allocation2 + $0x38] sm:$0xff]
      %v1746 = vld [vmem:[#allocation2 + $0x40] sm:$0xff]
      %v1747 = vld [vmem:[#allocation2 + $0x48] sm:$0xff]
      %1757 = vrot.lane.b32.xlu0 %v1739, 44
      %v1758 = vpop.permute.xlu0 %1757
      %1759 = vrot.lane.b32.xlu0 %v1740, 44
      %v1760 = vpop.permute.xlu0 %1759
      %1761 = vrot.lane.b32.xlu0 %v1741, 44
      %v1762 = vpop.permute.xlu0 %1761
      %1763 = vrot.lane.b32.xlu0 %v1742, 44
      %v1764 = vpop.permute.xlu0 %1763
      %1765 = vrot.lane.b32.xlu0 %v1743, 44
      %v1766 = vpop.permute.xlu0 %1765
      %1767 = vrot.lane.b32.xlu0 %v1744, 44
      %v1768 = vpop.permute.xlu0 %1767
      %1769 = vrot.lane.b32.xlu0 %v1745, 44
      %v1770 = vpop.permute.xlu0 %1769
      %1771 = vrot.lane.b32.xlu0 %v1746, 44
      %v1772 = vpop.permute.xlu0 %1771
      %1773 = vrot.lane.b32.xlu0 %v1747, 44
      %v1774 = vpop.permute.xlu0 %1773
      %vm1775 = vcmask 359424
      %v1776 = vsel %vm1775, %v1758, %v1760
      %v1777 = vsel %vm1775, %v1760, %v1762
      %v1778 = vsel %vm1775, %v1762, %v1764
      %v1779 = vsel %vm1775, %v1764, %v1766
      %v1780 = vsel %vm1775, %v1766, %v1768
      %v1781 = vsel %vm1775, %v1768, %v1770
      %v1782 = vsel %vm1775, %v1770, %v1772
      %v1783 = vsel %vm1775, %v1772, %v1774
      %1792 = vst [vmem:[#allocation3 + $0x5c0] sm:$0xff] %v1776
      %1793 = vst [vmem:[#allocation3 + $0x5c8] sm:$0xff] %v1777
      %1794 = vst [vmem:[#allocation3 + $0x5d0] sm:$0xff] %v1778
      %1795 = vst [vmem:[#allocation3 + $0x5d8] sm:$0xff] %v1779
      %1796 = vst [vmem:[#allocation3 + $0x5e0] sm:$0xff] %v1780
      %1797 = vst [vmem:[#allocation3 + $0x5e8] sm:$0xff] %v1781
      %1798 = vst [vmem:[#allocation3 + $0x5f0] sm:$0xff] %v1782
      %1799 = vst.msk [vmem:[#allocation3 + $0x5f8] sm:$0xff] %vm435, %v1783
      %v1800 = vld [vmem:[#allocation2 + $0x8] sm:$0xff]
      %v1801 = vld [vmem:[#allocation2 + $0x10] sm:$0xff]
      %v1802 = vld [vmem:[#allocation2 + $0x18] sm:$0xff]
      %v1803 = vld [vmem:[#allocation2 + $0x20] sm:$0xff]
      %v1804 = vld [vmem:[#allocation2 + $0x28] sm:$0xff]
      %v1805 = vld [vmem:[#allocation2 + $0x30] sm:$0xff]
      %v1806 = vld [vmem:[#allocation2 + $0x38] sm:$0xff]
      %v1807 = vld [vmem:[#allocation2 + $0x40] sm:$0xff]
      %v1808 = vld [vmem:[#allocation2 + $0x48] sm:$0xff]
      %1818 = vrot.lane.b32.xlu0 %v1800, 36
      %v1819 = vpop.permute.xlu0 %1818
      %1820 = vrot.lane.b32.xlu0 %v1801, 36
      %v1821 = vpop.permute.xlu0 %1820
      %1822 = vrot.lane.b32.xlu0 %v1802, 36
      %v1823 = vpop.permute.xlu0 %1822
      %1824 = vrot.lane.b32.xlu0 %v1803, 36
      %v1825 = vpop.permute.xlu0 %1824
      %1826 = vrot.lane.b32.xlu0 %v1804, 36
      %v1827 = vpop.permute.xlu0 %1826
      %1828 = vrot.lane.b32.xlu0 %v1805, 36
      %v1829 = vpop.permute.xlu0 %1828
      %1830 = vrot.lane.b32.xlu0 %v1806, 36
      %v1831 = vpop.permute.xlu0 %1830
      %1832 = vrot.lane.b32.xlu0 %v1807, 36
      %v1833 = vpop.permute.xlu0 %1832
      %1834 = vrot.lane.b32.xlu0 %v1808, 36
      %v1835 = vpop.permute.xlu0 %1834
      %vm1836 = vcmask 293888
      %v1837 = vsel %vm1836, %v1819, %v1821
      %v1838 = vsel %vm1836, %v1821, %v1823
      %v1839 = vsel %vm1836, %v1823, %v1825
      %v1840 = vsel %vm1836, %v1825, %v1827
      %v1841 = vsel %vm1836, %v1827, %v1829
      %v1842 = vsel %vm1836, %v1829, %v1831
      %v1843 = vsel %vm1836, %v1831, %v1833
      %v1844 = vsel %vm1836, %v1833, %v1835
      %1853 = vst [vmem:[#allocation3 + $0x600] sm:$0xff] %v1837
      %1854 = vst [vmem:[#allocation3 + $0x608] sm:$0xff] %v1838
      %1855 = vst [vmem:[#allocation3 + $0x610] sm:$0xff] %v1839
      %1856 = vst [vmem:[#allocation3 + $0x618] sm:$0xff] %v1840
      %1857 = vst [vmem:[#allocation3 + $0x620] sm:$0xff] %v1841
      %1858 = vst [vmem:[#allocation3 + $0x628] sm:$0xff] %v1842
      %1859 = vst [vmem:[#allocation3 + $0x630] sm:$0xff] %v1843
      %1860 = vst.msk [vmem:[#allocation3 + $0x638] sm:$0xff] %vm435, %v1844
      %v1861 = vld [vmem:[#allocation2 + $0x8] sm:$0xff]
      %v1862 = vld [vmem:[#allocation2 + $0x10] sm:$0xff]
      %v1863 = vld [vmem:[#allocation2 + $0x18] sm:$0xff]
      %v1864 = vld [vmem:[#allocation2 + $0x20] sm:$0xff]
      %v1865 = vld [vmem:[#allocation2 + $0x28] sm:$0xff]
      %v1866 = vld [vmem:[#allocation2 + $0x30] sm:$0xff]
      %v1867 = vld [vmem:[#allocation2 + $0x38] sm:$0xff]
      %v1868 = vld [vmem:[#allocation2 + $0x40] sm:$0xff]
      %v1869 = vld [vmem:[#allocation2 + $0x48] sm:$0xff]
      %1879 = vrot.lane.b32.xlu0 %v1861, 35
      %v1880 = vpop.permute.xlu0 %1879
      %1881 = vrot.lane.b32.xlu0 %v1862, 35
      %v1882 = vpop.permute.xlu0 %1881
      %1883 = vrot.lane.b32.xlu0 %v1863, 35
      %v1884 = vpop.permute.xlu0 %1883
      %1885 = vrot.lane.b32.xlu0 %v1864, 35
      %v1886 = vpop.permute.xlu0 %1885
      %1887 = vrot.lane.b32.xlu0 %v1865, 35
      %v1888 = vpop.permute.xlu0 %1887
      %1889 = vrot.lane.b32.xlu0 %v1866, 35
      %v1890 = vpop.permute.xlu0 %1889
      %1891 = vrot.lane.b32.xlu0 %v1867, 35
      %v1892 = vpop.permute.xlu0 %1891
      %1893 = vrot.lane.b32.xlu0 %v1868, 35
      %v1894 = vpop.permute.xlu0 %1893
      %1895 = vrot.lane.b32.xlu0 %v1869, 35
      %v1896 = vpop.permute.xlu0 %1895
      %vm1897 = vcmask 285696
      %v1898 = vsel %vm1897, %v1880, %v1882
      %v1899 = vsel %vm1897, %v1882, %v1884
      %v1900 = vsel %vm1897, %v1884, %v1886
      %v1901 = vsel %vm1897, %v1886, %v1888
      %v1902 = vsel %vm1897, %v1888, %v1890
      %v1903 = vsel %vm1897, %v1890, %v1892
      %v1904 = vsel %vm1897, %v1892, %v1894
      %v1905 = vsel %vm1897, %v1894, %v1896
      %1914 = vst [vmem:[#allocation3 + $0x640] sm:$0xff] %v1898
      %1915 = vst [vmem:[#allocation3 + $0x648] sm:$0xff] %v1899
      %1916 = vst [vmem:[#allocation3 + $0x650] sm:$0xff] %v1900
      %1917 = vst [vmem:[#allocation3 + $0x658] sm:$0xff] %v1901
      %1918 = vst [vmem:[#allocation3 + $0x660] sm:$0xff] %v1902
      %1919 = vst [vmem:[#allocation3 + $0x668] sm:$0xff] %v1903
      %1920 = vst [vmem:[#allocation3 + $0x670] sm:$0xff] %v1904
      %1921 = vst.msk [vmem:[#allocation3 + $0x678] sm:$0xff] %vm435, %v1905
      %v1922 = vld [vmem:[#allocation2 + $0x8] sm:$0xff]
      %v1923 = vld [vmem:[#allocation2 + $0x10] sm:$0xff]
      %v1924 = vld [vmem:[#allocation2 + $0x18] sm:$0xff]
      %v1925 = vld [vmem:[#allocation2 + $0x20] sm:$0xff]
      %v1926 = vld [vmem:[#allocation2 + $0x28] sm:$0xff]
      %v1927 = vld [vmem:[#allocation2 + $0x30] sm:$0xff]
      %v1928 = vld [vmem:[#allocation2 + $0x38] sm:$0xff]
      %v1929 = vld [vmem:[#allocation2 + $0x40] sm:$0xff]
      %v1930 = vld [vmem:[#allocation2 + $0x48] sm:$0xff]
      %1940 = vrot.lane.b32.xlu0 %v1922, 34
      %v1941 = vpop.permute.xlu0 %1940
      %1942 = vrot.lane.b32.xlu0 %v1923, 34
      %v1943 = vpop.permute.xlu0 %1942
      %1944 = vrot.lane.b32.xlu0 %v1924, 34
      %v1945 = vpop.permute.xlu0 %1944
      %1946 = vrot.lane.b32.xlu0 %v1925, 34
      %v1947 = vpop.permute.xlu0 %1946
      %1948 = vrot.lane.b32.xlu0 %v1926, 34
      %v1949 = vpop.permute.xlu0 %1948
      %1950 = vrot.lane.b32.xlu0 %v1927, 34
      %v1951 = vpop.permute.xlu0 %1950
      %1952 = vrot.lane.b32.xlu0 %v1928, 34
      %v1953 = vpop.permute.xlu0 %1952
      %1954 = vrot.lane.b32.xlu0 %v1929, 34
      %v1955 = vpop.permute.xlu0 %1954
      %1956 = vrot.lane.b32.xlu0 %v1930, 34
      %v1957 = vpop.permute.xlu0 %1956
      %vm1958 = vcmask 277504
      %v1959 = vsel %vm1958, %v1941, %v1943
      %v1960 = vsel %vm1958, %v1943, %v1945
      %v1961 = vsel %vm1958, %v1945, %v1947
      %v1962 = vsel %vm1958, %v1947, %v1949
      %v1963 = vsel %vm1958, %v1949, %v1951
      %v1964 = vsel %vm1958, %v1951, %v1953
      %v1965 = vsel %vm1958, %v1953, %v1955
      %v1966 = vsel %vm1958, %v1955, %v1957
      %1975 = vst [vmem:[#allocation3 + $0x680] sm:$0xff] %v1959
      %1976 = vst [vmem:[#allocation3 + $0x688] sm:$0xff] %v1960
      %1977 = vst [vmem:[#allocation3 + $0x690] sm:$0xff] %v1961
      %1978 = vst [vmem:[#allocation3 + $0x698] sm:$0xff] %v1962
      %1979 = vst [vmem:[#allocation3 + $0x6a0] sm:$0xff] %v1963
      %1980 = vst [vmem:[#allocation3 + $0x6a8] sm:$0xff] %v1964
      %1981 = vst [vmem:[#allocation3 + $0x6b0] sm:$0xff] %v1965
      %1982 = vst.msk [vmem:[#allocation3 + $0x6b8] sm:$0xff] %vm435, %v1966
      %v1983 = vld [vmem:[%s4] sm:$0xff]
      %v1984 = vld [vmem:[%s4 + $0x8] sm:$0xff]
      %v1985 = vld [vmem:[#allocation3] sm:$0xff]
      %v1986 = vld [vmem:[#allocation3 + $0x8] sm:$0xff]
      %v1987 = vld [vmem:[#allocation3 + $0x10] sm:$0xff]
      %v1988 = vld [vmem:[#allocation3 + $0x18] sm:$0xff]
      %v1989 = vld [vmem:[#allocation3 + $0x20] sm:$0xff]
      %v1990 = vld [vmem:[#allocation3 + $0x28] sm:$0xff]
      %v1991 = vld [vmem:[#allocation3 + $0x30] sm:$0xff]
      %v1992 = vld [vmem:[#allocation3 + $0x38] sm:$0xff]
      %v1993 = vld [vmem:[#allocation3 + $0x40] sm:$0xff]
      %v1994 = vld [vmem:[#allocation3 + $0x48] sm:$0xff]
      %v1995 = vld [vmem:[#allocation3 + $0x50] sm:$0xff]
      %v1996 = vld [vmem:[#allocation3 + $0x58] sm:$0xff]
      %v1997 = vld [vmem:[#allocation3 + $0x60] sm:$0xff]
      %v1998 = vld [vmem:[#allocation3 + $0x68] sm:$0xff]
      %v1999 = vld [vmem:[#allocation3 + $0x70] sm:$0xff]
      %v2000 = vld [vmem:[#allocation3 + $0x78] sm:$0xff]
      %v2001 = vld [vmem:[#allocation3 + $0x80] sm:$0xff]
      %v2002 = vld [vmem:[#allocation3 + $0x88] sm:$0xff]
      %v2003 = vld [vmem:[#allocation3 + $0x90] sm:$0xff]
      %v2004 = vld [vmem:[#allocation3 + $0x98] sm:$0xff]
      %v2005 = vld [vmem:[#allocation3 + $0xa0] sm:$0xff]
      %v2006 = vld [vmem:[#allocation3 + $0xa8] sm:$0xff]
      %v2007 = vld [vmem:[#allocation3 + $0xb0] sm:$0xff]
      %v2008 = vld [vmem:[#allocation3 + $0xb8] sm:$0xff]
      %v2009 = vld [vmem:[#allocation3 + $0xc0] sm:$0xff]
      %v2010 = vld [vmem:[#allocation3 + $0xc8] sm:$0xff]
      %v2011 = vld [vmem:[#allocation3 + $0xd0] sm:$0xff]
      %v2012 = vld [vmem:[#allocation3 + $0xd8] sm:$0xff]
      %v2013 = vld [vmem:[#allocation3 + $0xe0] sm:$0xff]
      %v2014 = vld [vmem:[#allocation3 + $0xe8] sm:$0xff]
      %v2015 = vld [vmem:[#allocation3 + $0xf0] sm:$0xff]
      %v2016 = vld [vmem:[#allocation3 + $0xf8] sm:$0xff]
      %v2017 = vld [vmem:[#allocation3 + $0x100] sm:$0xff]
      %v2018 = vld [vmem:[#allocation3 + $0x108] sm:$0xff]
      %v2019 = vld [vmem:[#allocation3 + $0x110] sm:$0xff]
      %v2020 = vld [vmem:[#allocation3 + $0x118] sm:$0xff]
      %v2021 = vld [vmem:[#allocation3 + $0x120] sm:$0xff]
      %v2022 = vld [vmem:[#allocation3 + $0x128] sm:$0xff]
      %v2023 = vld [vmem:[#allocation3 + $0x130] sm:$0xff]
      %v2024 = vld [vmem:[#allocation3 + $0x138] sm:$0xff]
      %v2025 = vld [vmem:[#allocation3 + $0x140] sm:$0xff]
      %v2026 = vld [vmem:[#allocation3 + $0x148] sm:$0xff]
      %v2027 = vld [vmem:[#allocation3 + $0x150] sm:$0xff]
      %v2028 = vld [vmem:[#allocation3 + $0x158] sm:$0xff]
      %v2029 = vld [vmem:[#allocation3 + $0x160] sm:$0xff]
      %v2030 = vld [vmem:[#allocation3 + $0x168] sm:$0xff]
      %v2031 = vld [vmem:[#allocation3 + $0x170] sm:$0xff]
      %v2032 = vld [vmem:[#allocation3 + $0x178] sm:$0xff]
      %v2033 = vld [vmem:[#allocation3 + $0x180] sm:$0xff]
      %v2034 = vld [vmem:[#allocation3 + $0x188] sm:$0xff]
      %v2035 = vld [vmem:[#allocation3 + $0x190] sm:$0xff]
      %v2036 = vld [vmem:[#allocation3 + $0x198] sm:$0xff]
      %v2037 = vld [vmem:[#allocation3 + $0x1a0] sm:$0xff]
      %v2038 = vld [vmem:[#allocation3 + $0x1a8] sm:$0xff]
      %v2039 = vld [vmem:[#allocation3 + $0x1b0] sm:$0xff]
      %v2040 = vld [vmem:[#allocation3 + $0x1b8] sm:$0xff]
      %v2041 = vld [vmem:[#allocation3 + $0x1c0] sm:$0xff]
      %v2042 = vld [vmem:[#allocation3 + $0x1c8] sm:$0xff]
      %v2043 = vld [vmem:[#allocation3 + $0x1d0] sm:$0xff]
      %v2044 = vld [vmem:[#allocation3 + $0x1d8] sm:$0xff]
      %v2045 = vld [vmem:[#allocation3 + $0x1e0] sm:$0xff]
      %v2046 = vld [vmem:[#allocation3 + $0x1e8] sm:$0xff]
      %v2047 = vld [vmem:[#allocation3 + $0x1f0] sm:$0xff]
      %v2048 = vld [vmem:[#allocation3 + $0x1f8] sm:$0xff]
      %v2049 = vld [vmem:[#allocation3 + $0x200] sm:$0xff]
      %v2050 = vld [vmem:[#allocation3 + $0x208] sm:$0xff]
      %v2051 = vld [vmem:[#allocation3 + $0x210] sm:$0xff]
      %v2052 = vld [vmem:[#allocation3 + $0x218] sm:$0xff]
      %v2053 = vld [vmem:[#allocation3 + $0x220] sm:$0xff]
      %v2054 = vld [vmem:[#allocation3 + $0x228] sm:$0xff]
      %v2055 = vld [vmem:[#allocation3 + $0x230] sm:$0xff]
      %v2056 = vld [vmem:[#allocation3 + $0x238] sm:$0xff]
      %v2057 = vld [vmem:[#allocation3 + $0x240] sm:$0xff]
      %v2058 = vld [vmem:[#allocation3 + $0x248] sm:$0xff]
      %v2059 = vld [vmem:[#allocation3 + $0x250] sm:$0xff]
      %v2060 = vld [vmem:[#allocation3 + $0x258] sm:$0xff]
      %v2061 = vld [vmem:[#allocation3 + $0x260] sm:$0xff]
      %v2062 = vld [vmem:[#allocation3 + $0x268] sm:$0xff]
      %v2063 = vld [vmem:[#allocation3 + $0x270] sm:$0xff]
      %v2064 = vld [vmem:[#allocation3 + $0x278] sm:$0xff]
      %v2065 = vld [vmem:[#allocation3 + $0x280] sm:$0xff]
      %v2066 = vld [vmem:[#allocation3 + $0x288] sm:$0xff]
      %v2067 = vld [vmem:[#allocation3 + $0x290] sm:$0xff]
      %v2068 = vld [vmem:[#allocation3 + $0x298] sm:$0xff]
      %v2069 = vld [vmem:[#allocation3 + $0x2a0] sm:$0xff]
      %v2070 = vld [vmem:[#allocation3 + $0x2a8] sm:$0xff]
      %v2071 = vld [vmem:[#allocation3 + $0x2b0] sm:$0xff]
      %v2072 = vld [vmem:[#allocation3 + $0x2b8] sm:$0xff]
      %v2073 = vld [vmem:[#allocation3 + $0x2c0] sm:$0xff]
      %v2074 = vld [vmem:[#allocation3 + $0x2c8] sm:$0xff]
      %v2075 = vld [vmem:[#allocation3 + $0x2d0] sm:$0xff]
      %v2076 = vld [vmem:[#allocation3 + $0x2d8] sm:$0xff]
      %v2077 = vld [vmem:[#allocation3 + $0x2e0] sm:$0xff]
      %v2078 = vld [vmem:[#allocation3 + $0x2e8] sm:$0xff]
      %v2079 = vld [vmem:[#allocation3 + $0x2f0] sm:$0xff]
      %v2080 = vld [vmem:[#allocation3 + $0x2f8] sm:$0xff]
      %v2081 = vld [vmem:[#allocation3 + $0x300] sm:$0xff]
      %v2082 = vld [vmem:[#allocation3 + $0x308] sm:$0xff]
      %v2083 = vld [vmem:[#allocation3 + $0x310] sm:$0xff]
      %v2084 = vld [vmem:[#allocation3 + $0x318] sm:$0xff]
      %v2085 = vld [vmem:[#allocation3 + $0x320] sm:$0xff]
      %v2086 = vld [vmem:[#allocation3 + $0x328] sm:$0xff]
      %v2087 = vld [vmem:[#allocation3 + $0x330] sm:$0xff]
      %v2088 = vld [vmem:[#allocation3 + $0x338] sm:$0xff]
      %v2089 = vld [vmem:[#allocation3 + $0x340] sm:$0xff]
      %v2090 = vld [vmem:[#allocation3 + $0x348] sm:$0xff]
      %v2091 = vld [vmem:[#allocation3 + $0x350] sm:$0xff]
      %v2092 = vld [vmem:[#allocation3 + $0x358] sm:$0xff]
      %v2093 = vld [vmem:[#allocation3 + $0x360] sm:$0xff]
      %v2094 = vld [vmem:[#allocation3 + $0x368] sm:$0xff]
      %v2095 = vld [vmem:[#allocation3 + $0x370] sm:$0xff]
      %v2096 = vld [vmem:[#allocation3 + $0x378] sm:$0xff]
      %v2097 = vld [vmem:[#allocation3 + $0x380] sm:$0xff]
      %v2098 = vld [vmem:[#allocation3 + $0x388] sm:$0xff]
      %v2099 = vld [vmem:[#allocation3 + $0x390] sm:$0xff]
      %v2100 = vld [vmem:[#allocation3 + $0x398] sm:$0xff]
      %v2101 = vld [vmem:[#allocation3 + $0x3a0] sm:$0xff]
      %v2102 = vld [vmem:[#allocation3 + $0x3a8] sm:$0xff]
      %v2103 = vld [vmem:[#allocation3 + $0x3b0] sm:$0xff]
      %v2104 = vld [vmem:[#allocation3 + $0x3b8] sm:$0xff]
      %v2105 = vld [vmem:[#allocation3 + $0x3c0] sm:$0xff]
      %v2106 = vld [vmem:[#allocation3 + $0x3c8] sm:$0xff]
      %v2107 = vld [vmem:[#allocation3 + $0x3d0] sm:$0xff]
      %v2108 = vld [vmem:[#allocation3 + $0x3d8] sm:$0xff]
      %v2109 = vld [vmem:[#allocation3 + $0x3e0] sm:$0xff]
      %v2110 = vld [vmem:[#allocation3 + $0x3e8] sm:$0xff]
      %v2111 = vld [vmem:[#allocation3 + $0x3f0] sm:$0xff]
      %v2112 = vld [vmem:[#allocation3 + $0x3f8] sm:$0xff]
      %v2113 = vld [vmem:[#allocation3 + $0x400] sm:$0xff]
      %v2114 = vld [vmem:[#allocation3 + $0x408] sm:$0xff]
      %v2115 = vld [vmem:[#allocation3 + $0x410] sm:$0xff]
      %v2116 = vld [vmem:[#allocation3 + $0x418] sm:$0xff]
      %v2117 = vld [vmem:[#allocation3 + $0x420] sm:$0xff]
      %v2118 = vld [vmem:[#allocation3 + $0x428] sm:$0xff]
      %v2119 = vld [vmem:[#allocation3 + $0x430] sm:$0xff]
      %v2120 = vld [vmem:[#allocation3 + $0x438] sm:$0xff]
      %v2121 = vld [vmem:[#allocation3 + $0x440] sm:$0xff]
      %v2122 = vld [vmem:[#allocation3 + $0x448] sm:$0xff]
      %v2123 = vld [vmem:[#allocation3 + $0x450] sm:$0xff]
      %v2124 = vld [vmem:[#allocation3 + $0x458] sm:$0xff]
      %v2125 = vld [vmem:[#allocation3 + $0x460] sm:$0xff]
      %v2126 = vld [vmem:[#allocation3 + $0x468] sm:$0xff]
      %v2127 = vld [vmem:[#allocation3 + $0x470] sm:$0xff]
      %v2128 = vld [vmem:[#allocation3 + $0x478] sm:$0xff]
      %v2129 = vld [vmem:[#allocation3 + $0x480] sm:$0xff]
      %v2130 = vld [vmem:[#allocation3 + $0x488] sm:$0xff]
      %v2131 = vld [vmem:[#allocation3 + $0x490] sm:$0xff]
      %v2132 = vld [vmem:[#allocation3 + $0x498] sm:$0xff]
      %v2133 = vld [vmem:[#allocation3 + $0x4a0] sm:$0xff]
      %v2134 = vld [vmem:[#allocation3 + $0x4a8] sm:$0xff]
      %v2135 = vld [vmem:[#allocation3 + $0x4b0] sm:$0xff]
      %v2136 = vld [vmem:[#allocation3 + $0x4b8] sm:$0xff]
      %v2137 = vld [vmem:[#allocation3 + $0x4c0] sm:$0xff]
      %v2138 = vld [vmem:[#allocation3 + $0x4c8] sm:$0xff]
      %v2139 = vld [vmem:[#allocation3 + $0x4d0] sm:$0xff]
      %v2140 = vld [vmem:[#allocation3 + $0x4d8] sm:$0xff]
      %v2141 = vld [vmem:[#allocation3 + $0x4e0] sm:$0xff]
      %v2142 = vld [vmem:[#allocation3 + $0x4e8] sm:$0xff]
      %v2143 = vld [vmem:[#allocation3 + $0x4f0] sm:$0xff]
      %v2144 = vld [vmem:[#allocation3 + $0x4f8] sm:$0xff]
      %v2145 = vld [vmem:[#allocation3 + $0x500] sm:$0xff]
      %v2146 = vld [vmem:[#allocation3 + $0x508] sm:$0xff]
      %v2147 = vld [vmem:[#allocation3 + $0x510] sm:$0xff]
      %v2148 = vld [vmem:[#allocation3 + $0x518] sm:$0xff]
      %v2149 = vld [vmem:[#allocation3 + $0x520] sm:$0xff]
      %v2150 = vld [vmem:[#allocation3 + $0x528] sm:$0xff]
      %v2151 = vld [vmem:[#allocation3 + $0x530] sm:$0xff]
      %v2152 = vld [vmem:[#allocation3 + $0x538] sm:$0xff]
      %v2153 = vld [vmem:[#allocation3 + $0x540] sm:$0xff]
      %v2154 = vld [vmem:[#allocation3 + $0x548] sm:$0xff]
      %v2155 = vld [vmem:[#allocation3 + $0x550] sm:$0xff]
      %v2156 = vld [vmem:[#allocation3 + $0x558] sm:$0xff]
      %v2157 = vld [vmem:[#allocation3 + $0x560] sm:$0xff]
      %v2158 = vld [vmem:[#allocation3 + $0x568] sm:$0xff]
      %v2159 = vld [vmem:[#allocation3 + $0x570] sm:$0xff]
      %v2160 = vld [vmem:[#allocation3 + $0x578] sm:$0xff]
      %v2161 = vld [vmem:[#allocation3 + $0x580] sm:$0xff]
      %v2162 = vld [vmem:[#allocation3 + $0x588] sm:$0xff]
      %v2163 = vld [vmem:[#allocation3 + $0x590] sm:$0xff]
      %v2164 = vld [vmem:[#allocation3 + $0x598] sm:$0xff]
      %v2165 = vld [vmem:[#allocation3 + $0x5a0] sm:$0xff]
      %v2166 = vld [vmem:[#allocation3 + $0x5a8] sm:$0xff]
      %v2167 = vld [vmem:[#allocation3 + $0x5b0] sm:$0xff]
      %v2168 = vld [vmem:[#allocation3 + $0x5b8] sm:$0xff]
      %v2169 = vld [vmem:[#allocation3 + $0x5c0] sm:$0xff]
      %v2170 = vld [vmem:[#allocation3 + $0x5c8] sm:$0xff]
      %v2171 = vld [vmem:[#allocation3 + $0x5d0] sm:$0xff]
      %v2172 = vld [vmem:[#allocation3 + $0x5d8] sm:$0xff]
      %v2173 = vld [vmem:[#allocation3 + $0x5e0] sm:$0xff]
      %v2174 = vld [vmem:[#allocation3 + $0x5e8] sm:$0xff]
      %v2175 = vld [vmem:[#allocation3 + $0x5f0] sm:$0xff]
      %v2176 = vld [vmem:[#allocation3 + $0x5f8] sm:$0xff]
      %v2177 = vld [vmem:[#allocation3 + $0x600] sm:$0xff]
      %v2178 = vld [vmem:[#allocation3 + $0x608] sm:$0xff]
      %v2179 = vld [vmem:[#allocation3 + $0x610] sm:$0xff]
      %v2180 = vld [vmem:[#allocation3 + $0x618] sm:$0xff]
      %v2181 = vld [vmem:[#allocation3 + $0x620] sm:$0xff]
      %v2182 = vld [vmem:[#allocation3 + $0x628] sm:$0xff]
      %v2183 = vld [vmem:[#allocation3 + $0x630] sm:$0xff]
      %v2184 = vld [vmem:[#allocation3 + $0x638] sm:$0xff]
      %v2185 = vld [vmem:[#allocation3 + $0x640] sm:$0xff]
      %v2186 = vld [vmem:[#allocation3 + $0x648] sm:$0xff]
      %v2187 = vld [vmem:[#allocation3 + $0x650] sm:$0xff]
      %v2188 = vld [vmem:[#allocation3 + $0x658] sm:$0xff]
      %v2189 = vld [vmem:[#allocation3 + $0x660] sm:$0xff]
      %v2190 = vld [vmem:[#allocation3 + $0x668] sm:$0xff]
      %v2191 = vld [vmem:[#allocation3 + $0x670] sm:$0xff]
      %v2192 = vld [vmem:[#allocation3 + $0x678] sm:$0xff]
      %v2193 = vld [vmem:[#allocation3 + $0x680] sm:$0xff]
      %v2194 = vld [vmem:[#allocation3 + $0x688] sm:$0xff]
      %v2195 = vld [vmem:[#allocation3 + $0x690] sm:$0xff]
      %v2196 = vld [vmem:[#allocation3 + $0x698] sm:$0xff]
      %v2197 = vld [vmem:[#allocation3 + $0x6a0] sm:$0xff]
      %v2198 = vld [vmem:[#allocation3 + $0x6a8] sm:$0xff]
      %v2199 = vld [vmem:[#allocation3 + $0x6b0] sm:$0xff]
      %v2200 = vld [vmem:[#allocation3 + $0x6b8] sm:$0xff]
      %vm2201 = vcmask 719872
      %v2203 = vsel %vm2201, %v1984, 0
      %2205 = vmatprep.subr.mxu0 %v1986
      %2206 = vmatpush1.msra.mxu0 %v1985
      %2207 = vmatprep.subr.mxu0 %v1994
      %2208 = vmatpush1.msra.mxu0 %v1993
      %2209 = vmatprep.subr.mxu0 %v2002
      %2210 = vmatpush1.msra.mxu0 %v2001
      %2211 = vmatprep.subr.mxu0 %v2010
      %2212 = vmatpush1.msra.mxu0 %v2009
      %2213 = vmatprep.subr.mxu0 %v2018
      %2214 = vmatpush1.msra.mxu0 %v2017
      %2215 = vmatprep.subr.mxu0 %v2026
      %2216 = vmatpush1.msra.mxu0 %v2025
      %2217 = vmatprep.subr.mxu0 %v2034
      %2218 = vmatpush1.msra.mxu0 %v2033
      %2219 = vmatprep.subr.mxu0 %v2042
      %2220 = vmatpush1.msra.mxu0 %v2041
      %2221 = vmatprep.subr.mxu0 %v2050
      %2222 = vmatpush1.msra.mxu0 %v2049
      %2223 = vmatprep.subr.mxu0 %v2058
      %2224 = vmatpush1.msra.mxu0 %v2057
      %2225 = vmatprep.subr.mxu0 %v2066
      %2226 = vmatpush1.msra.mxu0 %v2065
      %2227 = vmatprep.subr.mxu0 %v2074
      %2228 = vmatpush1.msra.mxu0 %v2073
      %2229 = vmatprep.subr.mxu0 %v2082
      %2230 = vmatpush1.msra.mxu0 %v2081
      %2231 = vmatprep.subr.mxu0 %v2090
      %2232 = vmatpush1.msra.mxu0 %v2089
      %2233 = vmatprep.subr.mxu0 %v2098
      %2234 = vmatpush1.msra.mxu0 %v2097
      %2235 = vmatprep.subr.mxu0 %v2106
      %2236 = vmatpush1.msra.mxu0 %v2105
      %2237 = vmatprep.subr.mxu0 %v2114
      %2238 = vmatpush1.msra.mxu0 %v2113
      %2239 = vmatprep.subr.mxu0 %v2122
      %2240 = vmatpush1.msra.mxu0 %v2121
      %2241 = vmatprep.subr.mxu0 %v2130
      %2242 = vmatpush1.msra.mxu0 %v2129
      %2243 = vmatprep.subr.mxu0 %v2138
      %2244 = vmatpush1.msra.mxu0 %v2137
      %2245 = vmatprep.subr.mxu0 %v2146
      %2246 = vmatpush1.msra.mxu0 %v2145
      %2247 = vmatprep.subr.mxu0 %v2154
      %2248 = vmatpush1.msra.mxu0 %v2153
      %2249 = vmatprep.subr.mxu0 %v2162
      %2250 = vmatpush1.msra.mxu0 %v2161
      %2251 = vmatprep.subr.mxu0 %v2170
      %2252 = vmatpush1.msra.mxu0 %v2169
      %2253 = vmatprep.subr.mxu0 %v2178
      %2254 = vmatpush1.msra.mxu0 %v2177
      %2255 = vmatprep.subr.mxu0 %v2186
      %2256 = vmatpush1.msra.mxu0 %v2185
      %2257 = vmatprep.subr.mxu0 %v2194
      %2258 = vmatpush1.msra.mxu0 %v2193
      %2259 = vmatprep.subr.mxu0 0.0
      %2260 = vmatpush1.msra.mxu0 0.0
      %2261 = vmatprep.subr.mxu0 0.0
      %2262 = vmatpush1.msra.mxu0 0.0
      %2263 = vmatprep.subr.mxu0 0.0
      %2264 = vmatpush1.msra.mxu0 0.0
      %2265 = vmatprep.subr.mxu0 0.0
      %2266 = vmatpush1.msra.mxu0 0.0
      %2267 = vmatprep.subr.mxu0 0.0
      %2268 = vmatpush1.msra.mxu0 0.0
      %2269 = vmatprep.mubr.f32.mxu0 %v2203
      %2270 = vmatmul.mubr.f32.gmra.mrb[0].mxu0 %v1983
      %v2271 = vpop.f32.mrb[0].mxu0
      %v2272 = vadd.f32 0.0, %v2271
      %v2273 = vpop.f32.mrb[0].mxu0
      %v2274 = vadd.f32 0.0, %v2273
      %2275 = vdwg.mxu0
      %2276 = vmatprep.subr.mxu0 %v1988
      %2277 = vmatpush1.msra.mxu0 %v1987
      %2278 = vmatprep.subr.mxu0 %v1996
      %2279 = vmatpush1.msra.mxu0 %v1995
      %2280 = vmatprep.subr.mxu0 %v2004
      %2281 = vmatpush1.msra.mxu0 %v2003
      %2282 = vmatprep.subr.mxu0 %v2012
      %2283 = vmatpush1.msra.mxu0 %v2011
      %2284 = vmatprep.subr.mxu0 %v2020
      %2285 = vmatpush1.msra.mxu0 %v2019
      %2286 = vmatprep.subr.mxu0 %v2028
      %2287 = vmatpush1.msra.mxu0 %v2027
      %2288 = vmatprep.subr.mxu0 %v2036
      %2289 = vmatpush1.msra.mxu0 %v2035
      %2290 = vmatprep.subr.mxu0 %v2044
      %2291 = vmatpush1.msra.mxu0 %v2043
      %2292 = vmatprep.subr.mxu0 %v2052
      %2293 = vmatpush1.msra.mxu0 %v2051
      %2294 = vmatprep.subr.mxu0 %v2060
      %2295 = vmatpush1.msra.mxu0 %v2059
      %2296 = vmatprep.subr.mxu0 %v2068
      %2297 = vmatpush1.msra.mxu0 %v2067
      %2298 = vmatprep.subr.mxu0 %v2076
      %2299 = vmatpush1.msra.mxu0 %v2075
      %2300 = vmatprep.subr.mxu0 %v2084
      %2301 = vmatpush1.msra.mxu0 %v2083
      %2302 = vmatprep.subr.mxu0 %v2092
      %2303 = vmatpush1.msra.mxu0 %v2091
      %2304 = vmatprep.subr.mxu0 %v2100
      %2305 = vmatpush1.msra.mxu0 %v2099
      %2306 = vmatprep.subr.mxu0 %v2108
      %2307 = vmatpush1.msra.mxu0 %v2107
      %2308 = vmatprep.subr.mxu0 %v2116
      %2309 = vmatpush1.msra.mxu0 %v2115
      %2310 = vmatprep.subr.mxu0 %v2124
      %2311 = vmatpush1.msra.mxu0 %v2123
      %2312 = vmatprep.subr.mxu0 %v2132
      %2313 = vmatpush1.msra.mxu0 %v2131
      %2314 = vmatprep.subr.mxu0 %v2140
      %2315 = vmatpush1.msra.mxu0 %v2139
      %2316 = vmatprep.subr.mxu0 %v2148
      %2317 = vmatpush1.msra.mxu0 %v2147
      %2318 = vmatprep.subr.mxu0 %v2156
      %2319 = vmatpush1.msra.mxu0 %v2155
      %2320 = vmatprep.subr.mxu0 %v2164
      %2321 = vmatpush1.msra.mxu0 %v2163
      %2322 = vmatprep.subr.mxu0 %v2172
      %2323 = vmatpush1.msra.mxu0 %v2171
      %2324 = vmatprep.subr.mxu0 %v2180
      %2325 = vmatpush1.msra.mxu0 %v2179
      %2326 = vmatprep.subr.mxu0 %v2188
      %2327 = vmatpush1.msra.mxu0 %v2187
      %2328 = vmatprep.subr.mxu0 %v2196
      %2329 = vmatpush1.msra.mxu0 %v2195
      %2330 = vmatprep.subr.mxu0 0.0
      %2331 = vmatpush1.msra.mxu0 0.0
      %2332 = vmatprep.subr.mxu0 0.0
      %2333 = vmatpush1.msra.mxu0 0.0
      %2334 = vmatprep.subr.mxu0 0.0
      %2335 = vmatpush1.msra.mxu0 0.0
      %2336 = vmatprep.subr.mxu0 0.0
      %2337 = vmatpush1.msra.mxu0 0.0
      %2338 = vmatprep.subr.mxu0 0.0
      %2339 = vmatpush1.msra.mxu0 0.0
      %2340 = vmatprep.mubr.f32.mxu0 %v2203
      %2341 = vmatmul.mubr.f32.gmra.mrb[0].mxu0 %v1983
      %v2342 = vpop.f32.mrb[0].mxu0
      %v2343 = vadd.f32 0.0, %v2342
      %v2344 = vpop.f32.mrb[0].mxu0
      %v2345 = vadd.f32 0.0, %v2344
      %2346 = vdwg.mxu0
      %2347 = vmatprep.subr.mxu0 %v1990
      %2348 = vmatpush1.msra.mxu0 %v1989
      %2349 = vmatprep.subr.mxu0 %v1998
      %2350 = vmatpush1.msra.mxu0 %v1997
      %2351 = vmatprep.subr.mxu0 %v2006
      %2352 = vmatpush1.msra.mxu0 %v2005
      %2353 = vmatprep.subr.mxu0 %v2014
      %2354 = vmatpush1.msra.mxu0 %v2013
      %2355 = vmatprep.subr.mxu0 %v2022
      %2356 = vmatpush1.msra.mxu0 %v2021
      %2357 = vmatprep.subr.mxu0 %v2030
      %2358 = vmatpush1.msra.mxu0 %v2029
      %2359 = vmatprep.subr.mxu0 %v2038
      %2360 = vmatpush1.msra.mxu0 %v2037
      %2361 = vmatprep.subr.mxu0 %v2046
      %2362 = vmatpush1.msra.mxu0 %v2045
      %2363 = vmatprep.subr.mxu0 %v2054
      %2364 = vmatpush1.msra.mxu0 %v2053
      %2365 = vmatprep.subr.mxu0 %v2062
      %2366 = vmatpush1.msra.mxu0 %v2061
      %2367 = vmatprep.subr.mxu0 %v2070
      %2368 = vmatpush1.msra.mxu0 %v2069
      %2369 = vmatprep.subr.mxu0 %v2078
      %2370 = vmatpush1.msra.mxu0 %v2077
      %2371 = vmatprep.subr.mxu0 %v2086
      %2372 = vmatpush1.msra.mxu0 %v2085
      %2373 = vmatprep.subr.mxu0 %v2094
      %2374 = vmatpush1.msra.mxu0 %v2093
      %2375 = vmatprep.subr.mxu0 %v2102
      %2376 = vmatpush1.msra.mxu0 %v2101
      %2377 = vmatprep.subr.mxu0 %v2110
      %2378 = vmatpush1.msra.mxu0 %v2109
      %2379 = vmatprep.subr.mxu0 %v2118
      %2380 = vmatpush1.msra.mxu0 %v2117
      %2381 = vmatprep.subr.mxu0 %v2126
      %2382 = vmatpush1.msra.mxu0 %v2125
      %2383 = vmatprep.subr.mxu0 %v2134
      %2384 = vmatpush1.msra.mxu0 %v2133
      %2385 = vmatprep.subr.mxu0 %v2142
      %2386 = vmatpush1.msra.mxu0 %v2141
      %2387 = vmatprep.subr.mxu0 %v2150
      %2388 = vmatpush1.msra.mxu0 %v2149
      %2389 = vmatprep.subr.mxu0 %v2158
      %2390 = vmatpush1.msra.mxu0 %v2157
      %2391 = vmatprep.subr.mxu0 %v2166
      %2392 = vmatpush1.msra.mxu0 %v2165
      %2393 = vmatprep.subr.mxu0 %v2174
      %2394 = vmatpush1.msra.mxu0 %v2173
      %2395 = vmatprep.subr.mxu0 %v2182
      %2396 = vmatpush1.msra.mxu0 %v2181
      %2397 = vmatprep.subr.mxu0 %v2190
      %2398 = vmatpush1.msra.mxu0 %v2189
      %2399 = vmatprep.subr.mxu0 %v2198
      %2400 = vmatpush1.msra.mxu0 %v2197
      %2401 = vmatprep.subr.mxu0 0.0
      %2402 = vmatpush1.msra.mxu0 0.0
      %2403 = vmatprep.subr.mxu0 0.0
      %2404 = vmatpush1.msra.mxu0 0.0
      %2405 = vmatprep.subr.mxu0 0.0
      %2406 = vmatpush1.msra.mxu0 0.0
      %2407 = vmatprep.subr.mxu0 0.0
      %2408 = vmatpush1.msra.mxu0 0.0
      %2409 = vmatprep.subr.mxu0 0.0
      %2410 = vmatpush1.msra.mxu0 0.0
      %2411 = vmatprep.mubr.f32.mxu0 %v2203
      %2412 = vmatmul.mubr.f32.gmra.mrb[0].mxu0 %v1983
      %v2413 = vpop.f32.mrb[0].mxu0
      %v2414 = vadd.f32 0.0, %v2413
      %v2415 = vpop.f32.mrb[0].mxu0
      %v2416 = vadd.f32 0.0, %v2415
      %2417 = vdwg.mxu0
      %2418 = vmatprep.subr.mxu0 %v1992
      %2419 = vmatpush1.msra.mxu0 %v1991
      %2420 = vmatprep.subr.mxu0 %v2000
      %2421 = vmatpush1.msra.mxu0 %v1999
      %2422 = vmatprep.subr.mxu0 %v2008
      %2423 = vmatpush1.msra.mxu0 %v2007
      %2424 = vmatprep.subr.mxu0 %v2016
      %2425 = vmatpush1.msra.mxu0 %v2015
      %2426 = vmatprep.subr.mxu0 %v2024
      %2427 = vmatpush1.msra.mxu0 %v2023
      %2428 = vmatprep.subr.mxu0 %v2032
      %2429 = vmatpush1.msra.mxu0 %v2031
      %2430 = vmatprep.subr.mxu0 %v2040
      %2431 = vmatpush1.msra.mxu0 %v2039
      %2432 = vmatprep.subr.mxu0 %v2048
      %2433 = vmatpush1.msra.mxu0 %v2047
      %2434 = vmatprep.subr.mxu0 %v2056
      %2435 = vmatpush1.msra.mxu0 %v2055
      %2436 = vmatprep.subr.mxu0 %v2064
      %2437 = vmatpush1.msra.mxu0 %v2063
      %2438 = vmatprep.subr.mxu0 %v2072
      %2439 = vmatpush1.msra.mxu0 %v2071
      %2440 = vmatprep.subr.mxu0 %v2080
      %2441 = vmatpush1.msra.mxu0 %v2079
      %2442 = vmatprep.subr.mxu0 %v2088
      %2443 = vmatpush1.msra.mxu0 %v2087
      %2444 = vmatprep.subr.mxu0 %v2096
      %2445 = vmatpush1.msra.mxu0 %v2095
      %2446 = vmatprep.subr.mxu0 %v2104
      %2447 = vmatpush1.msra.mxu0 %v2103
      %2448 = vmatprep.subr.mxu0 %v2112
      %2449 = vmatpush1.msra.mxu0 %v2111
      %2450 = vmatprep.subr.mxu0 %v2120
      %2451 = vmatpush1.msra.mxu0 %v2119
      %2452 = vmatprep.subr.mxu0 %v2128
      %2453 = vmatpush1.msra.mxu0 %v2127
      %2454 = vmatprep.subr.mxu0 %v2136
      %2455 = vmatpush1.msra.mxu0 %v2135
      %2456 = vmatprep.subr.mxu0 %v2144
      %2457 = vmatpush1.msra.mxu0 %v2143
      %2458 = vmatprep.subr.mxu0 %v2152
      %2459 = vmatpush1.msra.mxu0 %v2151
      %2460 = vmatprep.subr.mxu0 %v2160
      %2461 = vmatpush1.msra.mxu0 %v2159
      %2462 = vmatprep.subr.mxu0 %v2168
      %2463 = vmatpush1.msra.mxu0 %v2167
      %2464 = vmatprep.subr.mxu0 %v2176
      %2465 = vmatpush1.msra.mxu0 %v2175
      %2466 = vmatprep.subr.mxu0 %v2184
      %2467 = vmatpush1.msra.mxu0 %v2183
      %2468 = vmatprep.subr.mxu0 %v2192
      %2469 = vmatpush1.msra.mxu0 %v2191
      %2470 = vmatprep.subr.mxu0 %v2200
      %2471 = vmatpush1.msra.mxu0 %v2199
      %2472 = vmatprep.subr.mxu0 0.0
      %2473 = vmatpush1.msra.mxu0 0.0
      %2474 = vmatprep.subr.mxu0 0.0
      %2475 = vmatpush1.msra.mxu0 0.0
      %2476 = vmatprep.subr.mxu0 0.0
      %2477 = vmatpush1.msra.mxu0 0.0
      %2478 = vmatprep.subr.mxu0 0.0
      %2479 = vmatpush1.msra.mxu0 0.0
      %2480 = vmatprep.subr.mxu0 0.0
      %2481 = vmatpush1.msra.mxu0 0.0
      %2482 = vmatprep.mubr.f32.mxu0 %v2203
      %2483 = vmatmul.mubr.f32.gmra.mrb[0].mxu0 %v1983
      %v2484 = vpop.f32.mrb[0].mxu0
      %v2485 = vadd.f32 0.0, %v2484
      %v2486 = vpop.f32.mrb[0].mxu0
      %v2487 = vadd.f32 0.0, %v2486
      %2488 = vdwg.mxu0
      %2489 = vst [vmem:[%s258] sm:$0xff] %v2272
      %2490 = vst [vmem:[%s258 + $0x8] sm:$0xff] %v2274
      %2491 = vst [vmem:[%s258 + $0x10] sm:$0xff] %v2343
      %2492 = vst [vmem:[%s258 + $0x18] sm:$0xff] %v2345
      %2493 = vst [vmem:[%s258 + $0x20] sm:$0xff] %v2414
      %2494 = vst [vmem:[%s258 + $0x28] sm:$0xff] %v2416
      %2495 = vst [vmem:[%s258 + $0x30] sm:$0xff] %v2485
      %2496 = vst.msk [vmem:[%s258 + $0x38] sm:$0xff] %vm435, %v2487
      %v2497 = vmul.f32 %v2272, %v312
      %v2498 = vmul.f32 %v2274, %v316
      %v2499 = vmul.f32 %v2343, %v320
      %v2500 = vmul.f32 %v2345, %v324
      %v2501 = vmul.f32 %v2414, %v328
      %v2502 = vmul.f32 %v2416, %v332
      %v2503 = vmul.f32 %v2485, %v336
      %v2504 = vmul.f32 %v2487, %v340
      %v2505 = vadd.f32 %v2497, %v2498
      %v2506 = vadd.f32 %v2505, %v2499
      %v2507 = vadd.f32 %v2506, %v2500
      %v2508 = vadd.f32 %v2507, %v2501
      %v2509 = vadd.f32 %v2508, %v2502
      %v2510 = vadd.f32 %v2509, %v2503
      %v2511 = vsel %vm435, %v2504, 0.0
      %v2512 = vadd.f32 %v2510, %v2511
      %2513 = vadd.xlane.f32.xlu0 %v2512
      %v2514 = vpop.xlane.xlu0 %2513
      %v2515 = vmul.f32 %v2497, %v2272
      %v2516 = vmul.f32 %v2498, %v2274
      %v2517 = vmul.f32 %v2499, %v2343
      %v2518 = vmul.f32 %v2500, %v2345
      %v2519 = vmul.f32 %v2501, %v2414
      %v2520 = vmul.f32 %v2502, %v2416
      %v2521 = vmul.f32 %v2503, %v2485
      %v2522 = vmul.f32 %v2504, %v2487
      %v2523 = vadd.f32 %v2515, %v2516
      %v2524 = vadd.f32 %v2523, %v2517
      %v2525 = vadd.f32 %v2524, %v2518
      %v2526 = vadd.f32 %v2525, %v2519
      %v2527 = vadd.f32 %v2526, %v2520
      %v2528 = vadd.f32 %v2527, %v2521
      %v2529 = vsel %vm435, %v2522, 0.0
      %v2530 = vadd.f32 %v2528, %v2529
      %2531 = vadd.xlane.f32.xlu0 %v2530
      %v2532 = vpop.xlane.xlu0 %2531
      %vm2533 = vcmask 7168
      %v2534 = vsel %vm2533, %v2514, %v2532
      %vm2535 = vcmask 15360
      %2536 = vst.msk [vmem:[%s262] sm:$0xff] %vm2535, %v2534
      %p2537 = scmp.lt.s32.totalorder %s18, 1
      %s2538 = scalar_select %p2537, %s18, 1
      %s2539 = smul.addr %s2538, 8
      %s2540 = smul.addr %s2539, 8
      %s2541 = scalar_lea.vmem %s5, %s2540
      %p2542 = scmp.lt.s32.totalorder %s18, 1
      %s2543 = scalar_select %p2542, %s18, 1
      %s2544 = smul.addr %s2543, 8
      %s2545 = scalar_lea.vmem %s6, %s2544
      // Predicated region
      $region41: #{double_conv3d_forward.4} parent=39 // pred_check
        %p2546 = pneg %p146
      $region42: #{double_conv3d_forward.4} parent=39 // pred_check_branch
        %2548 = sbr.rel (%p2546) target = $region44
      $region43: #{double_conv3d_forward.4} parent=39 // pred_region
        _
      $region44: #{double_conv3d_forward.4} parent=39 // pred_fallthru
        _
      // Predicated region
      $region45: #{double_conv3d_forward.4} parent=39 // pred_check
        %p2549 = pneg %p172
      $region46: #{double_conv3d_forward.4} parent=39 // pred_check_branch
        %2551 = sbr.rel (%p2549) target = $region48
      $region47: #{double_conv3d_forward.4} parent=39 // pred_region
        _
      $region48: #{double_conv3d_forward.4} parent=39 // pred_fallthru
        _
    $region40: #{double_conv3d_forward.4} parent=5 // pred_fallthru
      _
    %p2552 = scmp.le.s32.totalorder 2, %s13
    // Predicated region
    $region49: #{double_conv3d_forward.4} parent=5 // pred_check
      %p2553 = pneg %p2552
    $region50: #{double_conv3d_forward.4} parent=5 // pred_check_branch
      %2555 = sbr.rel (%p2553) target = $region52
    $region51: #{double_conv3d_forward.4} parent=5 // pred_region
      %s2556 = ssub.s32 %s13, 2
      // Predicated region
      $region53: #{double_conv3d_forward.4} parent=51 // pred_check
        %p2557 = pneg %p152
      $region54: #{double_conv3d_forward.4} parent=51 // pred_check_branch
        %2559 = sbr.rel (%p2557) target = $region56
      $region55: #{double_conv3d_forward.4} parent=51 // pred_region
        %p2560 = scmp.lt.s32.totalorder %s19, 1
        %s2561 = scalar_select %p2560, %s19, 1
        %s2562 = smul.addr %s2561, 8
        %s2563 = smul.addr %s2562, 8
        %s2564 = scalar_lea.vmem %s5, %s2563
      $region56: #{double_conv3d_forward.4} parent=51 // pred_fallthru
        _
      // Predicated region
      $region57: #{double_conv3d_forward.4} parent=51 // pred_check
        %p2565 = pneg %p178
      $region58: #{double_conv3d_forward.4} parent=51 // pred_check_branch
        %2567 = sbr.rel (%p2565) target = $region60
      $region59: #{double_conv3d_forward.4} parent=51 // pred_region
        %p2568 = scmp.lt.s32.totalorder %s19, 1
        %s2569 = scalar_select %p2568, %s19, 1
        %s2570 = smul.addr %s2569, 8
        %s2571 = scalar_lea.vmem %s6, %s2570
      $region60: #{double_conv3d_forward.4} parent=51 // pred_fallthru
        _
    $region52: #{double_conv3d_forward.4} parent=5 // pred_fallthru
      _
  $region6: #{double_conv3d_forward.4} parent=0 // loop_footer
    %s17 = sadd.s32 1, %s13
  $region7: #{double_conv3d_forward.4} parent=0 // loop_footer_branch
    %12 = sbr.rel target = $region3
  $region8: #{double_conv3d_forward.4} parent=0 // loop_exit
    _

</llo_original>
